<compile_context>
chip_gen: v7x
topology: tpu7x:2x2x1
jax: 0.10.0
libtpu: 0.0.40
codegen_flags: <defaults>
</compile_context>

<pallas_src>
import jax
import jax.numpy as jnp
from jax.experimental import pallas as pl
from jax.experimental.pallas import tpu as pltpu

LRELU_SLOPE = 0.2
BN_EPS = 1e-5
# MXU input dtype for the weight contractions (linear + conv taps).  bf16 is
# the fast MXU path on v6e/v7x (fine on v5e too); accumulation and all
# epilogue math stay f32.  Set to jnp.float32 for bit-tight f32 behavior.
MXU_DTYPE = jnp.bfloat16

_VMEM = pl.BlockSpec(memory_space=pltpu.MemorySpace.VMEM)


# ------------------------------ fused Pallas kernel ------------------------------

def _disfront_kernel(img_ref, lin_ref, a_ref, b_ref,
                     r1_ref, t1_ref, r2_ref, t2_ref, r3_ref, t3_ref,
                     j2_ref, g2_ref, gam2_ref, bet2_ref,
                     j3_ref, g3_ref, gam3_ref, bet3_ref,
                     out_ref):
    """Linear + 3x(conv 4x4/s2/p1) [+BN] [+LeakyReLU], all VMEM-resident.

    Activations are 2-D throughout: rows=(n, h), cols=(w, c).  Each conv is
    sum_kh R_kh @ X @ T_kh with host-precomputed operator matrices, so the
    kernel body is only matmuls + elementwise ops.
    """

    def mm(a, b):                                    # exact f32 matmul
        return jnp.dot(a, b, preferred_element_type=jnp.float32)

    def mm_mxu(a, b):                                # bf16-input MXU matmul, f32 acc
        return jnp.dot(a.astype(MXU_DTYPE), b.astype(MXU_DTYPE),
                       preferred_element_type=jnp.float32)

    def lrelu(v):
        return jnp.where(v > 0, v, LRELU_SLOPE * v)

    def conv(x, r_ref, t_ref):
        z = None
        for kh in range(r_ref.shape[0]):
            term = mm(r_ref[kh], mm_mxu(x, t_ref[kh]))
            z = term if z is None else z + term
        return z

    def batchnorm(z, j_ref, g_ref, gam_ref, bet_ref):
        # J averages over rows (n*Ho); G averages the Wo column groups per
        # channel -> per-channel training-mode batch stats, replicated.
        mean = mm(mm(j_ref[...], z), g_ref[...])
        meansq = mm(mm(j_ref[...], z * z), g_ref[...])
        var = jnp.maximum(meansq - mean * mean, 0.0)
        inv = jax.lax.rsqrt(var + BN_EPS)
        return (z - mean) * inv * gam_ref[...] + bet_ref[...]

    # Linear(imgSize, imgSize, bias=False) along W, on NCHW rows (n, c, h).
    xlin = mm_mxu(img_ref[...], lin_ref[...])        # (N*C*H, W)

    # NCHW rows=(n,c,h)/cols=w  ->  rows=(n,h)/cols=(w,c) via exact 0/1 ops.
    x = None
    for c in range(a_ref.shape[0]):
        term = mm(mm(a_ref[c], xlin), b_ref[c])
        x = term if x is None else x + term          # (N*H, W*C)

    y1 = lrelu(conv(x, r1_ref, t1_ref))              # (N*H/2,  (W/2)*nf)
    y2 = lrelu(batchnorm(conv(y1, r2_ref, t2_ref),
                         j2_ref, g2_ref, gam2_ref, bet2_ref))
    y3 = lrelu(batchnorm(conv(y2, r3_ref, t3_ref),
                         j3_ref, g3_ref, gam3_ref, bet3_ref))
    out_ref[...] = y3                                # (N*H/8, (W/8)*4nf)


# -------------------------- params & one-time weight prep --------------------------

def init_params(key, c, nf, img_size):
    ks = jax.random.split(key, 8)
    return {
        "lin_w": 0.05 * jax.random.normal(ks[0], (img_size, img_size), jnp.float32),
        "conv1_w": 0.05 * jax.random.normal(ks[1], (nf, c, 4, 4), jnp.float32),
        "conv2_w": 0.05 * jax.random.normal(ks[2], (2 * nf, nf, 4, 4), jnp.float32),
        "conv3_w": 0.05 * jax.random.normal(ks[3], (4 * nf, 2 * nf, 4, 4), jnp.float32),
        "bn2_g": 1.0 + 0.02 * jax.random.normal(ks[4], (2 * nf,), jnp.float32),
        "bn2_b": 0.02 * jax.random.normal(ks[5], (2 * nf,), jnp.float32),
        "bn3_g": 1.0 + 0.02 * jax.random.normal(ks[6], (4 * nf,), jnp.float32),
        "bn3_b": 0.02 * jax.random.normal(ks[7], (4 * nf,), jnp.float32),
    }


def prepare_params(params, batch, c, img_size):
    """One-time prep: fold weights/padding/layout into the operator matrices the
    kernel wants (hoisted out of the per-forward path).  Depends on the static
    batch size because the row-selection operators are block-diagonal over n."""
    f32 = jnp.float32
    n, h, w = batch, img_size, img_size
    nf = params["conv1_w"].shape[0]
    h1, w1 = h // 2, w // 2
    h2, w2 = h1 // 2, w1 // 2
    h3, w3 = h2 // 2, w2 // 2

    def row_select(ho, hin):
        # (4, n*ho, n*hin);  R[kh][(n,oh),(n,h)] = [h == 2*oh + kh - 1]  (pad folded)
        mats = []
        for kh in range(4):
            rh = (jnp.arange(hin)[None, :] ==
                  (2 * jnp.arange(ho)[:, None] + kh - 1)).astype(f32)
            mats.append(jnp.kron(jnp.eye(n, dtype=f32), rh))
        return jnp.stack(mats)

    def col_taps(wc, win):
        # (4, win*cin, wo*cout); T[kh][(w,ci),(ow,co)] = Wc[co,ci,kh, w-2*ow+1]
        cout, cin = wc.shape[0], wc.shape[1]
        wo = win // 2
        kw = jnp.arange(win)[:, None] - 2 * jnp.arange(wo)[None, :] + 1   # (win, wo)
        valid = (kw >= 0) & (kw <= 3)
        kw_c = jnp.clip(kw, 0, 3)
        mats = []
        for kh in range(4):
            wk = jnp.transpose(wc[:, :, kh, :], (2, 1, 0))                # (kw, ci, co)
            t = jnp.where(valid[:, :, None, None], wk[kw_c], 0.0)         # (win,wo,ci,co)
            t = jnp.transpose(t, (0, 2, 1, 3)).reshape(win * cin, wo * cout)
            mats.append(t)
        return jnp.stack(mats).astype(MXU_DTYPE)

    # NCHW rows=(n,c,h)/cols=w -> rows=(n,h)/cols=(w,c):  X' = sum_c A[c] @ X @ B[c]
    A = jnp.stack([jnp.kron(jnp.eye(n, dtype=f32),
                            jnp.kron(jax.nn.one_hot(ci, c, dtype=f32)[None, :],
                                     jnp.eye(h, dtype=f32)))
                   for ci in range(c)])                                   # (c, n*h, n*c*h)
    B = jnp.stack([jnp.kron(jnp.eye(w, dtype=f32),
                            jax.nn.one_hot(ci, c, dtype=f32)[None, :])
                   for ci in range(c)])                                   # (c, w, w*c)

    def bn_ops(rows, wo, cout, gamma, beta):
        j = jnp.full((rows, rows), 1.0 / rows, f32)        # average over (n, Ho) rows
        p = jnp.tile(jnp.eye(cout, dtype=f32), (wo, 1))    # (wo*cout, cout)
        g = jnp.dot(p, p.T) / wo                           # average the Wo groups / chan
        return (j, g,
                jnp.tile(gamma.astype(f32), wo)[None, :],
                jnp.tile(beta.astype(f32), wo)[None, :])

    j2, g2, gt2, bt2 = bn_ops(n * h2, w2, 2 * nf, params["bn2_g"], params["bn2_b"])
    j3, g3, gt3, bt3 = bn_ops(n * h3, w3, 4 * nf, params["bn3_g"], params["bn3_b"])

    return {
        "linT": jnp.transpose(params["lin_w"]).astype(MXU_DTYPE),
        "A": A, "B": B,
        "R1": row_select(h1, h), "T1": col_taps(params["conv1_w"], w),
        "R2": row_select(h2, h1), "T2": col_taps(params["conv2_w"], w1),
        "R3": row_select(h3, h2), "T3": col_taps(params["conv3_w"], w2),
        "J2": j2, "G2": g2, "g2": gt2, "b2": bt2,
        "J3": j3, "G3": g3, "g3": gt3, "b3": bt3,
    }


# ----------------------------------- forward -----------------------------------

@jax.jit
def disfront_forward(img_nchw, prep):
    n, c, h, w = img_nchw.shape
    h3, w3 = h // 8, w // 8
    cout3 = prep["T3"].shape[-1] // w3
    img2d = img_nchw.reshape(n * c * h, w)                 # free reshape of NCHW
    out2d = pl.pallas_call(
        _disfront_kernel,
        out_shape=jax.ShapeDtypeStruct((n * h3, w3 * cout3), jnp.float32),
        in_specs=[_VMEM] * 18,
        out_specs=_VMEM,
    )(img2d, prep["linT"], prep["A"], prep["B"],
      prep["R1"], prep["T1"], prep["R2"], prep["T2"], prep["R3"], prep["T3"],
      prep["J2"], prep["G2"], prep["g2"], prep["b2"],
      prep["J3"], prep["G3"], prep["g3"], prep["b3"])
    # rows=(n, oh), cols=(ow, c)  ->  NCHW (final tiny output-format conversion)
    return out2d.reshape(n, h3, w3, cout3).transpose(0, 3, 1, 2)


# ------------------------------- pure-JAX reference -------------------------------

def ref_forward(img, params, mxu_dtype=jnp.float32):
    """PyTorch-semantics reference.  mxu_dtype casts the matmul/conv inputs the
    same way the kernel's MXU path does (f32 accumulation either way)."""
    def cast(x):
        return x.astype(mxu_dtype)

    def conv(x, w):
        return jax.lax.conv_general_dilated(
            cast(x), cast(w), window_strides=(2, 2), padding=((1, 1), (1, 1)),
            dimension_numbers=("NCHW", "OIHW", "NCHW"),
            preferred_element_type=jnp.float32)

    def bn(x, g, b):
        mean = jnp.mean(x, axis=(0, 2, 3), keepdims=True)
        var = jnp.mean((x - mean) ** 2, axis=(0, 2, 3), keepdims=True)
        xn = (x - mean) * jax.lax.rsqrt(var + BN_EPS)
        return xn * g.reshape(1, -1, 1, 1) + b.reshape(1, -1, 1, 1)

    def lrelu(x):
        return jnp.where(x > 0, x, LRELU_SLOPE * x)

    x = jnp.einsum("nchw,ow->ncho", cast(img), cast(params["lin_w"]),
                   preferred_element_type=jnp.float32)
    x = lrelu(conv(x, params["conv1_w"]))
    x = lrelu(bn(conv(x, params["conv2_w"]), params["bn2_g"], params["bn2_b"]))
    x = lrelu(bn(conv(x, params["conv3_w"]), params["bn3_g"], params["bn3_b"]))
    return x


# ------------------------------------- main --------------------------------------

if __name__ == "__main__":
    key = jax.random.PRNGKey(0)
    k_img, k_par = jax.random.split(key)

    N, C, IMG, NF = 2, 4, 16, 8
    img = jax.random.normal(k_img, (N, C, IMG, IMG), jnp.float32)
    params = init_params(k_par, C, NF, IMG)
    prep = prepare_params(params, N, C, IMG)        # one-time weight/operator prep

    out = jax.block_until_ready(disfront_forward(img, prep))
    assert out.shape == (N, 4 * NF, IMG // 8, IMG // 8), out.shape

    # Primary correctness check: precision-matched reference (same bf16
    # MXU-input policy, f32 accumulation) -> verifies the fused kernel math
    # and the operator folding.
    ref_matched = jax.block_until_ready(ref_forward(img, params, MXU_DTYPE))
    err_m = float(jnp.max(jnp.abs(out - ref_matched)))
    assert jnp.allclose(out, ref_matched, atol=1e-2, rtol=1e-2), err_m

    # Sanity check vs the full-f32 reference; the gap is bounded by bf16
    # MXU-input rounding (per the perf-review correctness note).
    ref_f32 = jax.block_until_ready(ref_forward(img, params, jnp.float32))
    err_f = float(jnp.max(jnp.abs(out - ref_f32)))
    assert jnp.allclose(out, ref_f32, atol=1e-1, rtol=1e-1), err_f

    print("KERNEL_OK")
</pallas_src>

<mosaic_0001>
module attributes {stable_mosaic.version = 11 : i64} {
  func.func @_disfront_kernel(%arg0: memref<128x16xf32, #tpu.memory_space<vmem>>, %arg1: memref<16x16xbf16, #tpu.memory_space<vmem>>, %arg2: memref<4x32x128xf32, #tpu.memory_space<vmem>>, %arg3: memref<4x16x64xf32, #tpu.memory_space<vmem>>, %arg4: memref<4x16x32xf32, #tpu.memory_space<vmem>>, %arg5: memref<4x64x64xbf16, #tpu.memory_space<vmem>>, %arg6: memref<4x8x16xf32, #tpu.memory_space<vmem>>, %arg7: memref<4x64x64xbf16, #tpu.memory_space<vmem>>, %arg8: memref<4x4x8xf32, #tpu.memory_space<vmem>>, %arg9: memref<4x64x64xbf16, #tpu.memory_space<vmem>>, %arg10: memref<8x8xf32, #tpu.memory_space<vmem>>, %arg11: memref<64x64xf32, #tpu.memory_space<vmem>>, %arg12: memref<1x64xf32, #tpu.memory_space<vmem>>, %arg13: memref<1x64xf32, #tpu.memory_space<vmem>>, %arg14: memref<4x4xf32, #tpu.memory_space<vmem>>, %arg15: memref<64x64xf32, #tpu.memory_space<vmem>>, %arg16: memref<1x64xf32, #tpu.memory_space<vmem>>, %arg17: memref<1x64xf32, #tpu.memory_space<vmem>>, %arg18: memref<4x64xf32, #tpu.memory_space<vmem>>) attributes {dimension_semantics = [], scalar_prefetch = 0 : i64, scratch_operands = 0 : i64, tpu.core_type = #tpu.core_type<tc>} {
    %c0 = arith.constant 0 : index
    %c0_0 = arith.constant 0 : index
    %0 = vector.load %arg0[%c0, %c0_0] : memref<128x16xf32, #tpu.memory_space<vmem>>, vector<128x16xf32>
    %c0_1 = arith.constant 0 : index
    %c0_2 = arith.constant 0 : index
    %1 = vector.load %arg1[%c0_1, %c0_2] : memref<16x16xbf16, #tpu.memory_space<vmem>>, vector<16x16xbf16>
    %2 = arith.truncf %0 : vector<128x16xf32> to vector<128x16xbf16>
    %cst = arith.constant dense<0.000000e+00> : vector<128x16xf32>
    %3 = tpu.matmul %2, %1, %cst {dimension_numbers = #tpu.dot_dimension_numbers<[1], [0], [0], [1], [0, 0, 1, 1], [], []>} : vector<128x16xbf16>, vector<16x16xbf16>, vector<128x16xf32> -> vector<128x16xf32>
    %c0_3 = arith.constant 0 : index
    %c0_4 = arith.constant 0 : index
    %c0_5 = arith.constant 0 : index
    %4 = vector.load %arg2[%c0_3, %c0_4, %c0_5] : memref<4x32x128xf32, #tpu.memory_space<vmem>>, vector<1x32x128xf32>
    %5 = vector.shape_cast %4 : vector<1x32x128xf32> to vector<32x128xf32>
    %cst_6 = arith.constant dense<0.000000e+00> : vector<32x16xf32>
    %6 = tpu.matmul %5, %3, %cst_6 {dimension_numbers = #tpu.dot_dimension_numbers<[1], [0], [0], [1], [0, 0, 1, 1], [], []>} : vector<32x128xf32>, vector<128x16xf32>, vector<32x16xf32> -> vector<32x16xf32>
    %c0_7 = arith.constant 0 : index
    %c0_8 = arith.constant 0 : index
    %c0_9 = arith.constant 0 : index
    %7 = vector.load %arg3[%c0_7, %c0_8, %c0_9] : memref<4x16x64xf32, #tpu.memory_space<vmem>>, vector<1x16x64xf32>
    %8 = vector.shape_cast %7 : vector<1x16x64xf32> to vector<16x64xf32>
    %cst_10 = arith.constant dense<0.000000e+00> : vector<32x64xf32>
    %9 = tpu.matmul %6, %8, %cst_10 {dimension_numbers = #tpu.dot_dimension_numbers<[1], [0], [0], [1], [0, 0, 1, 1], [], []>} : vector<32x16xf32>, vector<16x64xf32>, vector<32x64xf32> -> vector<32x64xf32>
    %c1 = arith.constant 1 : index
    %c0_11 = arith.constant 0 : index
    %c0_12 = arith.constant 0 : index
    %10 = vector.load %arg2[%c1, %c0_11, %c0_12] : memref<4x32x128xf32, #tpu.memory_space<vmem>>, vector<1x32x128xf32>
    %11 = vector.shape_cast %10 : vector<1x32x128xf32> to vector<32x128xf32>
    %cst_13 = arith.constant dense<0.000000e+00> : vector<32x16xf32>
    %12 = tpu.matmul %11, %3, %cst_13 {dimension_numbers = #tpu.dot_dimension_numbers<[1], [0], [0], [1], [0, 0, 1, 1], [], []>} : vector<32x128xf32>, vector<128x16xf32>, vector<32x16xf32> -> vector<32x16xf32>
    %c1_14 = arith.constant 1 : index
    %c0_15 = arith.constant 0 : index
    %c0_16 = arith.constant 0 : index
    %13 = vector.load %arg3[%c1_14, %c0_15, %c0_16] : memref<4x16x64xf32, #tpu.memory_space<vmem>>, vector<1x16x64xf32>
    %14 = vector.shape_cast %13 : vector<1x16x64xf32> to vector<16x64xf32>
    %cst_17 = arith.constant dense<0.000000e+00> : vector<32x64xf32>
    %15 = tpu.matmul %12, %14, %cst_17 {dimension_numbers = #tpu.dot_dimension_numbers<[1], [0], [0], [1], [0, 0, 1, 1], [], []>} : vector<32x16xf32>, vector<16x64xf32>, vector<32x64xf32> -> vector<32x64xf32>
    %16 = arith.addf %9, %15 : vector<32x64xf32>
    %c2 = arith.constant 2 : index
    %c0_18 = arith.constant 0 : index
    %c0_19 = arith.constant 0 : index
    %17 = vector.load %arg2[%c2, %c0_18, %c0_19] : memref<4x32x128xf32, #tpu.memory_space<vmem>>, vector<1x32x128xf32>
    %18 = vector.shape_cast %17 : vector<1x32x128xf32> to vector<32x128xf32>
    %cst_20 = arith.constant dense<0.000000e+00> : vector<32x16xf32>
    %19 = tpu.matmul %18, %3, %cst_20 {dimension_numbers = #tpu.dot_dimension_numbers<[1], [0], [0], [1], [0, 0, 1, 1], [], []>} : vector<32x128xf32>, vector<128x16xf32>, vector<32x16xf32> -> vector<32x16xf32>
    %c2_21 = arith.constant 2 : index
    %c0_22 = arith.constant 0 : index
    %c0_23 = arith.constant 0 : index
    %20 = vector.load %arg3[%c2_21, %c0_22, %c0_23] : memref<4x16x64xf32, #tpu.memory_space<vmem>>, vector<1x16x64xf32>
    %21 = vector.shape_cast %20 : vector<1x16x64xf32> to vector<16x64xf32>
    %cst_24 = arith.constant dense<0.000000e+00> : vector<32x64xf32>
    %22 = tpu.matmul %19, %21, %cst_24 {dimension_numbers = #tpu.dot_dimension_numbers<[1], [0], [0], [1], [0, 0, 1, 1], [], []>} : vector<32x16xf32>, vector<16x64xf32>, vector<32x64xf32> -> vector<32x64xf32>
    %23 = arith.addf %16, %22 : vector<32x64xf32>
    %c3 = arith.constant 3 : index
    %c0_25 = arith.constant 0 : index
    %c0_26 = arith.constant 0 : index
    %24 = vector.load %arg2[%c3, %c0_25, %c0_26] : memref<4x32x128xf32, #tpu.memory_space<vmem>>, vector<1x32x128xf32>
    %25 = vector.shape_cast %24 : vector<1x32x128xf32> to vector<32x128xf32>
    %cst_27 = arith.constant dense<0.000000e+00> : vector<32x16xf32>
    %26 = tpu.matmul %25, %3, %cst_27 {dimension_numbers = #tpu.dot_dimension_numbers<[1], [0], [0], [1], [0, 0, 1, 1], [], []>} : vector<32x128xf32>, vector<128x16xf32>, vector<32x16xf32> -> vector<32x16xf32>
    %c3_28 = arith.constant 3 : index
    %c0_29 = arith.constant 0 : index
    %c0_30 = arith.constant 0 : index
    %27 = vector.load %arg3[%c3_28, %c0_29, %c0_30] : memref<4x16x64xf32, #tpu.memory_space<vmem>>, vector<1x16x64xf32>
    %28 = vector.shape_cast %27 : vector<1x16x64xf32> to vector<16x64xf32>
    %cst_31 = arith.constant dense<0.000000e+00> : vector<32x64xf32>
    %29 = tpu.matmul %26, %28, %cst_31 {dimension_numbers = #tpu.dot_dimension_numbers<[1], [0], [0], [1], [0, 0, 1, 1], [], []>} : vector<32x16xf32>, vector<16x64xf32>, vector<32x64xf32> -> vector<32x64xf32>
    %30 = arith.addf %23, %29 : vector<32x64xf32>
    %c0_32 = arith.constant 0 : index
    %c0_33 = arith.constant 0 : index
    %c0_34 = arith.constant 0 : index
    %31 = vector.load %arg4[%c0_32, %c0_33, %c0_34] : memref<4x16x32xf32, #tpu.memory_space<vmem>>, vector<1x16x32xf32>
    %32 = vector.shape_cast %31 : vector<1x16x32xf32> to vector<16x32xf32>
    %c0_35 = arith.constant 0 : index
    %c0_36 = arith.constant 0 : index
    %c0_37 = arith.constant 0 : index
    %33 = vector.load %arg5[%c0_35, %c0_36, %c0_37] : memref<4x64x64xbf16, #tpu.memory_space<vmem>>, vector<1x64x64xbf16>
    %34 = vector.shape_cast %33 : vector<1x64x64xbf16> to vector<64x64xbf16>
    %35 = arith.truncf %30 : vector<32x64xf32> to vector<32x64xbf16>
    %cst_38 = arith.constant dense<0.000000e+00> : vector<32x64xf32>
    %36 = tpu.matmul %35, %34, %cst_38 {dimension_numbers = #tpu.dot_dimension_numbers<[1], [0], [0], [1], [0, 0, 1, 1], [], []>} : vector<32x64xbf16>, vector<64x64xbf16>, vector<32x64xf32> -> vector<32x64xf32>
    %cst_39 = arith.constant dense<0.000000e+00> : vector<16x64xf32>
    %37 = tpu.matmul %32, %36, %cst_39 {dimension_numbers = #tpu.dot_dimension_numbers<[1], [0], [0], [1], [0, 0, 1, 1], [], []>} : vector<16x32xf32>, vector<32x64xf32>, vector<16x64xf32> -> vector<16x64xf32>
    %c1_40 = arith.constant 1 : index
    %c0_41 = arith.constant 0 : index
    %c0_42 = arith.constant 0 : index
    %38 = vector.load %arg4[%c1_40, %c0_41, %c0_42] : memref<4x16x32xf32, #tpu.memory_space<vmem>>, vector<1x16x32xf32>
    %39 = vector.shape_cast %38 : vector<1x16x32xf32> to vector<16x32xf32>
    %c1_43 = arith.constant 1 : index
    %c0_44 = arith.constant 0 : index
    %c0_45 = arith.constant 0 : index
    %40 = vector.load %arg5[%c1_43, %c0_44, %c0_45] : memref<4x64x64xbf16, #tpu.memory_space<vmem>>, vector<1x64x64xbf16>
    %41 = vector.shape_cast %40 : vector<1x64x64xbf16> to vector<64x64xbf16>
    %42 = arith.truncf %30 : vector<32x64xf32> to vector<32x64xbf16>
    %cst_46 = arith.constant dense<0.000000e+00> : vector<32x64xf32>
    %43 = tpu.matmul %42, %41, %cst_46 {dimension_numbers = #tpu.dot_dimension_numbers<[1], [0], [0], [1], [0, 0, 1, 1], [], []>} : vector<32x64xbf16>, vector<64x64xbf16>, vector<32x64xf32> -> vector<32x64xf32>
    %cst_47 = arith.constant dense<0.000000e+00> : vector<16x64xf32>
    %44 = tpu.matmul %39, %43, %cst_47 {dimension_numbers = #tpu.dot_dimension_numbers<[1], [0], [0], [1], [0, 0, 1, 1], [], []>} : vector<16x32xf32>, vector<32x64xf32>, vector<16x64xf32> -> vector<16x64xf32>
    %45 = arith.addf %37, %44 : vector<16x64xf32>
    %c2_48 = arith.constant 2 : index
    %c0_49 = arith.constant 0 : index
    %c0_50 = arith.constant 0 : index
    %46 = vector.load %arg4[%c2_48, %c0_49, %c0_50] : memref<4x16x32xf32, #tpu.memory_space<vmem>>, vector<1x16x32xf32>
    %47 = vector.shape_cast %46 : vector<1x16x32xf32> to vector<16x32xf32>
    %c2_51 = arith.constant 2 : index
    %c0_52 = arith.constant 0 : index
    %c0_53 = arith.constant 0 : index
    %48 = vector.load %arg5[%c2_51, %c0_52, %c0_53] : memref<4x64x64xbf16, #tpu.memory_space<vmem>>, vector<1x64x64xbf16>
    %49 = vector.shape_cast %48 : vector<1x64x64xbf16> to vector<64x64xbf16>
    %50 = arith.truncf %30 : vector<32x64xf32> to vector<32x64xbf16>
    %cst_54 = arith.constant dense<0.000000e+00> : vector<32x64xf32>
    %51 = tpu.matmul %50, %49, %cst_54 {dimension_numbers = #tpu.dot_dimension_numbers<[1], [0], [0], [1], [0, 0, 1, 1], [], []>} : vector<32x64xbf16>, vector<64x64xbf16>, vector<32x64xf32> -> vector<32x64xf32>
    %cst_55 = arith.constant dense<0.000000e+00> : vector<16x64xf32>
    %52 = tpu.matmul %47, %51, %cst_55 {dimension_numbers = #tpu.dot_dimension_numbers<[1], [0], [0], [1], [0, 0, 1, 1], [], []>} : vector<16x32xf32>, vector<32x64xf32>, vector<16x64xf32> -> vector<16x64xf32>
    %53 = arith.addf %45, %52 : vector<16x64xf32>
    %c3_56 = arith.constant 3 : index
    %c0_57 = arith.constant 0 : index
    %c0_58 = arith.constant 0 : index
    %54 = vector.load %arg4[%c3_56, %c0_57, %c0_58] : memref<4x16x32xf32, #tpu.memory_space<vmem>>, vector<1x16x32xf32>
    %55 = vector.shape_cast %54 : vector<1x16x32xf32> to vector<16x32xf32>
    %c3_59 = arith.constant 3 : index
    %c0_60 = arith.constant 0 : index
    %c0_61 = arith.constant 0 : index
    %56 = vector.load %arg5[%c3_59, %c0_60, %c0_61] : memref<4x64x64xbf16, #tpu.memory_space<vmem>>, vector<1x64x64xbf16>
    %57 = vector.shape_cast %56 : vector<1x64x64xbf16> to vector<64x64xbf16>
    %58 = arith.truncf %30 : vector<32x64xf32> to vector<32x64xbf16>
    %cst_62 = arith.constant dense<0.000000e+00> : vector<32x64xf32>
    %59 = tpu.matmul %58, %57, %cst_62 {dimension_numbers = #tpu.dot_dimension_numbers<[1], [0], [0], [1], [0, 0, 1, 1], [], []>} : vector<32x64xbf16>, vector<64x64xbf16>, vector<32x64xf32> -> vector<32x64xf32>
    %cst_63 = arith.constant dense<0.000000e+00> : vector<16x64xf32>
    %60 = tpu.matmul %55, %59, %cst_63 {dimension_numbers = #tpu.dot_dimension_numbers<[1], [0], [0], [1], [0, 0, 1, 1], [], []>} : vector<16x32xf32>, vector<32x64xf32>, vector<16x64xf32> -> vector<16x64xf32>
    %61 = arith.addf %53, %60 : vector<16x64xf32>
    %cst_64 = arith.constant 0.000000e+00 : f32
    %62 = vector.broadcast %cst_64 : f32 to vector<16x64xf32>
    %63 = arith.cmpf ogt, %61, %62 : vector<16x64xf32>
    %cst_65 = arith.constant 2.000000e-01 : f32
    %64 = vector.broadcast %cst_65 : f32 to vector<16x64xf32>
    %65 = arith.mulf %64, %61 : vector<16x64xf32>
    %66 = arith.select %63, %61, %65 : vector<16x64xi1>, vector<16x64xf32>
    %c0_66 = arith.constant 0 : index
    %c0_67 = arith.constant 0 : index
    %c0_68 = arith.constant 0 : index
    %67 = vector.load %arg6[%c0_66, %c0_67, %c0_68] : memref<4x8x16xf32, #tpu.memory_space<vmem>>, vector<1x8x16xf32>
    %68 = vector.shape_cast %67 : vector<1x8x16xf32> to vector<8x16xf32>
    %c0_69 = arith.constant 0 : index
    %c0_70 = arith.constant 0 : index
    %c0_71 = arith.constant 0 : index
    %69 = vector.load %arg7[%c0_69, %c0_70, %c0_71] : memref<4x64x64xbf16, #tpu.memory_space<vmem>>, vector<1x64x64xbf16>
    %70 = vector.shape_cast %69 : vector<1x64x64xbf16> to vector<64x64xbf16>
    %71 = arith.truncf %66 : vector<16x64xf32> to vector<16x64xbf16>
    %cst_72 = arith.constant dense<0.000000e+00> : vector<16x64xf32>
    %72 = tpu.matmul %71, %70, %cst_72 {dimension_numbers = #tpu.dot_dimension_numbers<[1], [0], [0], [1], [0, 0, 1, 1], [], []>} : vector<16x64xbf16>, vector<64x64xbf16>, vector<16x64xf32> -> vector<16x64xf32>
    %cst_73 = arith.constant dense<0.000000e+00> : vector<8x64xf32>
    %73 = tpu.matmul %68, %72, %cst_73 {dimension_numbers = #tpu.dot_dimension_numbers<[1], [0], [0], [1], [0, 0, 1, 1], [], []>} : vector<8x16xf32>, vector<16x64xf32>, vector<8x64xf32> -> vector<8x64xf32>
    %c1_74 = arith.constant 1 : index
    %c0_75 = arith.constant 0 : index
    %c0_76 = arith.constant 0 : index
    %74 = vector.load %arg6[%c1_74, %c0_75, %c0_76] : memref<4x8x16xf32, #tpu.memory_space<vmem>>, vector<1x8x16xf32>
    %75 = vector.shape_cast %74 : vector<1x8x16xf32> to vector<8x16xf32>
    %c1_77 = arith.constant 1 : index
    %c0_78 = arith.constant 0 : index
    %c0_79 = arith.constant 0 : index
    %76 = vector.load %arg7[%c1_77, %c0_78, %c0_79] : memref<4x64x64xbf16, #tpu.memory_space<vmem>>, vector<1x64x64xbf16>
    %77 = vector.shape_cast %76 : vector<1x64x64xbf16> to vector<64x64xbf16>
    %78 = arith.truncf %66 : vector<16x64xf32> to vector<16x64xbf16>
    %cst_80 = arith.constant dense<0.000000e+00> : vector<16x64xf32>
    %79 = tpu.matmul %78, %77, %cst_80 {dimension_numbers = #tpu.dot_dimension_numbers<[1], [0], [0], [1], [0, 0, 1, 1], [], []>} : vector<16x64xbf16>, vector<64x64xbf16>, vector<16x64xf32> -> vector<16x64xf32>
    %cst_81 = arith.constant dense<0.000000e+00> : vector<8x64xf32>
    %80 = tpu.matmul %75, %79, %cst_81 {dimension_numbers = #tpu.dot_dimension_numbers<[1], [0], [0], [1], [0, 0, 1, 1], [], []>} : vector<8x16xf32>, vector<16x64xf32>, vector<8x64xf32> -> vector<8x64xf32>
    %81 = arith.addf %73, %80 : vector<8x64xf32>
    %c2_82 = arith.constant 2 : index
    %c0_83 = arith.constant 0 : index
    %c0_84 = arith.constant 0 : index
    %82 = vector.load %arg6[%c2_82, %c0_83, %c0_84] : memref<4x8x16xf32, #tpu.memory_space<vmem>>, vector<1x8x16xf32>
    %83 = vector.shape_cast %82 : vector<1x8x16xf32> to vector<8x16xf32>
    %c2_85 = arith.constant 2 : index
    %c0_86 = arith.constant 0 : index
    %c0_87 = arith.constant 0 : index
    %84 = vector.load %arg7[%c2_85, %c0_86, %c0_87] : memref<4x64x64xbf16, #tpu.memory_space<vmem>>, vector<1x64x64xbf16>
    %85 = vector.shape_cast %84 : vector<1x64x64xbf16> to vector<64x64xbf16>
    %86 = arith.truncf %66 : vector<16x64xf32> to vector<16x64xbf16>
    %cst_88 = arith.constant dense<0.000000e+00> : vector<16x64xf32>
    %87 = tpu.matmul %86, %85, %cst_88 {dimension_numbers = #tpu.dot_dimension_numbers<[1], [0], [0], [1], [0, 0, 1, 1], [], []>} : vector<16x64xbf16>, vector<64x64xbf16>, vector<16x64xf32> -> vector<16x64xf32>
    %cst_89 = arith.constant dense<0.000000e+00> : vector<8x64xf32>
    %88 = tpu.matmul %83, %87, %cst_89 {dimension_numbers = #tpu.dot_dimension_numbers<[1], [0], [0], [1], [0, 0, 1, 1], [], []>} : vector<8x16xf32>, vector<16x64xf32>, vector<8x64xf32> -> vector<8x64xf32>
    %89 = arith.addf %81, %88 : vector<8x64xf32>
    %c3_90 = arith.constant 3 : index
    %c0_91 = arith.constant 0 : index
    %c0_92 = arith.constant 0 : index
    %90 = vector.load %arg6[%c3_90, %c0_91, %c0_92] : memref<4x8x16xf32, #tpu.memory_space<vmem>>, vector<1x8x16xf32>
    %91 = vector.shape_cast %90 : vector<1x8x16xf32> to vector<8x16xf32>
    %c3_93 = arith.constant 3 : index
    %c0_94 = arith.constant 0 : index
    %c0_95 = arith.constant 0 : index
    %92 = vector.load %arg7[%c3_93, %c0_94, %c0_95] : memref<4x64x64xbf16, #tpu.memory_space<vmem>>, vector<1x64x64xbf16>
    %93 = vector.shape_cast %92 : vector<1x64x64xbf16> to vector<64x64xbf16>
    %94 = arith.truncf %66 : vector<16x64xf32> to vector<16x64xbf16>
    %cst_96 = arith.constant dense<0.000000e+00> : vector<16x64xf32>
    %95 = tpu.matmul %94, %93, %cst_96 {dimension_numbers = #tpu.dot_dimension_numbers<[1], [0], [0], [1], [0, 0, 1, 1], [], []>} : vector<16x64xbf16>, vector<64x64xbf16>, vector<16x64xf32> -> vector<16x64xf32>
    %cst_97 = arith.constant dense<0.000000e+00> : vector<8x64xf32>
    %96 = tpu.matmul %91, %95, %cst_97 {dimension_numbers = #tpu.dot_dimension_numbers<[1], [0], [0], [1], [0, 0, 1, 1], [], []>} : vector<8x16xf32>, vector<16x64xf32>, vector<8x64xf32> -> vector<8x64xf32>
    %97 = arith.addf %89, %96 : vector<8x64xf32>
    %c0_98 = arith.constant 0 : index
    %c0_99 = arith.constant 0 : index
    %98 = vector.load %arg10[%c0_98, %c0_99] : memref<8x8xf32, #tpu.memory_space<vmem>>, vector<8x8xf32>
    %cst_100 = arith.constant dense<0.000000e+00> : vector<8x64xf32>
    %99 = tpu.matmul %98, %97, %cst_100 {dimension_numbers = #tpu.dot_dimension_numbers<[1], [0], [0], [1], [0, 0, 1, 1], [], []>} : vector<8x8xf32>, vector<8x64xf32>, vector<8x64xf32> -> vector<8x64xf32>
    %c0_101 = arith.constant 0 : index
    %c0_102 = arith.constant 0 : index
    %100 = vector.load %arg11[%c0_101, %c0_102] : memref<64x64xf32, #tpu.memory_space<vmem>>, vector<64x64xf32>
    %cst_103 = arith.constant dense<0.000000e+00> : vector<8x64xf32>
    %101 = tpu.matmul %99, %100, %cst_103 {dimension_numbers = #tpu.dot_dimension_numbers<[1], [0], [0], [1], [0, 0, 1, 1], [], []>} : vector<8x64xf32>, vector<64x64xf32>, vector<8x64xf32> -> vector<8x64xf32>
    %c0_104 = arith.constant 0 : index
    %c0_105 = arith.constant 0 : index
    %102 = vector.load %arg10[%c0_104, %c0_105] : memref<8x8xf32, #tpu.memory_space<vmem>>, vector<8x8xf32>
    %103 = arith.mulf %97, %97 : vector<8x64xf32>
    %cst_106 = arith.constant dense<0.000000e+00> : vector<8x64xf32>
    %104 = tpu.matmul %102, %103, %cst_106 {dimension_numbers = #tpu.dot_dimension_numbers<[1], [0], [0], [1], [0, 0, 1, 1], [], []>} : vector<8x8xf32>, vector<8x64xf32>, vector<8x64xf32> -> vector<8x64xf32>
    %c0_107 = arith.constant 0 : index
    %c0_108 = arith.constant 0 : index
    %105 = vector.load %arg11[%c0_107, %c0_108] : memref<64x64xf32, #tpu.memory_space<vmem>>, vector<64x64xf32>
    %cst_109 = arith.constant dense<0.000000e+00> : vector<8x64xf32>
    %106 = tpu.matmul %104, %105, %cst_109 {dimension_numbers = #tpu.dot_dimension_numbers<[1], [0], [0], [1], [0, 0, 1, 1], [], []>} : vector<8x64xf32>, vector<64x64xf32>, vector<8x64xf32> -> vector<8x64xf32>
    %107 = arith.mulf %101, %101 : vector<8x64xf32>
    %108 = arith.subf %106, %107 : vector<8x64xf32>
    %cst_110 = arith.constant 0.000000e+00 : f32
    %109 = vector.broadcast %cst_110 : f32 to vector<8x64xf32>
    %110 = arith.maximumf %108, %109 : vector<8x64xf32>
    %cst_111 = arith.constant 9.99999974E-6 : f32
    %111 = vector.broadcast %cst_111 : f32 to vector<8x64xf32>
    %112 = arith.addf %110, %111 : vector<8x64xf32>
    %113 = math.rsqrt %112 : vector<8x64xf32>
    %114 = arith.subf %97, %101 : vector<8x64xf32>
    %115 = arith.mulf %114, %113 : vector<8x64xf32>
    %c0_112 = arith.constant 0 : index
    %c0_113 = arith.constant 0 : index
    %116 = vector.load %arg12[%c0_112, %c0_113] : memref<1x64xf32, #tpu.memory_space<vmem>>, vector<1x64xf32>
    %117 = vector.broadcast %116 : vector<1x64xf32> to vector<8x64xf32>
    %118 = arith.mulf %115, %117 : vector<8x64xf32>
    %c0_114 = arith.constant 0 : index
    %c0_115 = arith.constant 0 : index
    %119 = vector.load %arg13[%c0_114, %c0_115] : memref<1x64xf32, #tpu.memory_space<vmem>>, vector<1x64xf32>
    %120 = vector.broadcast %119 : vector<1x64xf32> to vector<8x64xf32>
    %121 = arith.addf %118, %120 : vector<8x64xf32>
    %cst_116 = arith.constant 0.000000e+00 : f32
    %122 = vector.broadcast %cst_116 : f32 to vector<8x64xf32>
    %123 = arith.cmpf ogt, %121, %122 : vector<8x64xf32>
    %cst_117 = arith.constant 2.000000e-01 : f32
    %124 = vector.broadcast %cst_117 : f32 to vector<8x64xf32>
    %125 = arith.mulf %124, %121 : vector<8x64xf32>
    %126 = arith.select %123, %121, %125 : vector<8x64xi1>, vector<8x64xf32>
    %c0_118 = arith.constant 0 : index
    %c0_119 = arith.constant 0 : index
    %c0_120 = arith.constant 0 : index
    %127 = vector.load %arg8[%c0_118, %c0_119, %c0_120] : memref<4x4x8xf32, #tpu.memory_space<vmem>>, vector<1x4x8xf32>
    %128 = vector.shape_cast %127 : vector<1x4x8xf32> to vector<4x8xf32>
    %c0_121 = arith.constant 0 : index
    %c0_122 = arith.constant 0 : index
    %c0_123 = arith.constant 0 : index
    %129 = vector.load %arg9[%c0_121, %c0_122, %c0_123] : memref<4x64x64xbf16, #tpu.memory_space<vmem>>, vector<1x64x64xbf16>
    %130 = vector.shape_cast %129 : vector<1x64x64xbf16> to vector<64x64xbf16>
    %131 = arith.truncf %126 : vector<8x64xf32> to vector<8x64xbf16>
    %cst_124 = arith.constant dense<0.000000e+00> : vector<8x64xf32>
    %132 = tpu.matmul %131, %130, %cst_124 {dimension_numbers = #tpu.dot_dimension_numbers<[1], [0], [0], [1], [0, 0, 1, 1], [], []>} : vector<8x64xbf16>, vector<64x64xbf16>, vector<8x64xf32> -> vector<8x64xf32>
    %cst_125 = arith.constant dense<0.000000e+00> : vector<4x64xf32>
    %133 = tpu.matmul %128, %132, %cst_125 {dimension_numbers = #tpu.dot_dimension_numbers<[1], [0], [0], [1], [0, 0, 1, 1], [], []>} : vector<4x8xf32>, vector<8x64xf32>, vector<4x64xf32> -> vector<4x64xf32>
    %c1_126 = arith.constant 1 : index
    %c0_127 = arith.constant 0 : index
    %c0_128 = arith.constant 0 : index
    %134 = vector.load %arg8[%c1_126, %c0_127, %c0_128] : memref<4x4x8xf32, #tpu.memory_space<vmem>>, vector<1x4x8xf32>
    %135 = vector.shape_cast %134 : vector<1x4x8xf32> to vector<4x8xf32>
    %c1_129 = arith.constant 1 : index
    %c0_130 = arith.constant 0 : index
    %c0_131 = arith.constant 0 : index
    %136 = vector.load %arg9[%c1_129, %c0_130, %c0_131] : memref<4x64x64xbf16, #tpu.memory_space<vmem>>, vector<1x64x64xbf16>
    %137 = vector.shape_cast %136 : vector<1x64x64xbf16> to vector<64x64xbf16>
    %138 = arith.truncf %126 : vector<8x64xf32> to vector<8x64xbf16>
    %cst_132 = arith.constant dense<0.000000e+00> : vector<8x64xf32>
    %139 = tpu.matmul %138, %137, %cst_132 {dimension_numbers = #tpu.dot_dimension_numbers<[1], [0], [0], [1], [0, 0, 1, 1], [], []>} : vector<8x64xbf16>, vector<64x64xbf16>, vector<8x64xf32> -> vector<8x64xf32>
    %cst_133 = arith.constant dense<0.000000e+00> : vector<4x64xf32>
    %140 = tpu.matmul %135, %139, %cst_133 {dimension_numbers = #tpu.dot_dimension_numbers<[1], [0], [0], [1], [0, 0, 1, 1], [], []>} : vector<4x8xf32>, vector<8x64xf32>, vector<4x64xf32> -> vector<4x64xf32>
    %141 = arith.addf %133, %140 : vector<4x64xf32>
    %c2_134 = arith.constant 2 : index
    %c0_135 = arith.constant 0 : index
    %c0_136 = arith.constant 0 : index
    %142 = vector.load %arg8[%c2_134, %c0_135, %c0_136] : memref<4x4x8xf32, #tpu.memory_space<vmem>>, vector<1x4x8xf32>
    %143 = vector.shape_cast %142 : vector<1x4x8xf32> to vector<4x8xf32>
    %c2_137 = arith.constant 2 : index
    %c0_138 = arith.constant 0 : index
    %c0_139 = arith.constant 0 : index
    %144 = vector.load %arg9[%c2_137, %c0_138, %c0_139] : memref<4x64x64xbf16, #tpu.memory_space<vmem>>, vector<1x64x64xbf16>
    %145 = vector.shape_cast %144 : vector<1x64x64xbf16> to vector<64x64xbf16>
    %146 = arith.truncf %126 : vector<8x64xf32> to vector<8x64xbf16>
    %cst_140 = arith.constant dense<0.000000e+00> : vector<8x64xf32>
    %147 = tpu.matmul %146, %145, %cst_140 {dimension_numbers = #tpu.dot_dimension_numbers<[1], [0], [0], [1], [0, 0, 1, 1], [], []>} : vector<8x64xbf16>, vector<64x64xbf16>, vector<8x64xf32> -> vector<8x64xf32>
    %cst_141 = arith.constant dense<0.000000e+00> : vector<4x64xf32>
    %148 = tpu.matmul %143, %147, %cst_141 {dimension_numbers = #tpu.dot_dimension_numbers<[1], [0], [0], [1], [0, 0, 1, 1], [], []>} : vector<4x8xf32>, vector<8x64xf32>, vector<4x64xf32> -> vector<4x64xf32>
    %149 = arith.addf %141, %148 : vector<4x64xf32>
    %c3_142 = arith.constant 3 : index
    %c0_143 = arith.constant 0 : index
    %c0_144 = arith.constant 0 : index
    %150 = vector.load %arg8[%c3_142, %c0_143, %c0_144] : memref<4x4x8xf32, #tpu.memory_space<vmem>>, vector<1x4x8xf32>
    %151 = vector.shape_cast %150 : vector<1x4x8xf32> to vector<4x8xf32>
    %c3_145 = arith.constant 3 : index
    %c0_146 = arith.constant 0 : index
    %c0_147 = arith.constant 0 : index
    %152 = vector.load %arg9[%c3_145, %c0_146, %c0_147] : memref<4x64x64xbf16, #tpu.memory_space<vmem>>, vector<1x64x64xbf16>
    %153 = vector.shape_cast %152 : vector<1x64x64xbf16> to vector<64x64xbf16>
    %154 = arith.truncf %126 : vector<8x64xf32> to vector<8x64xbf16>
    %cst_148 = arith.constant dense<0.000000e+00> : vector<8x64xf32>
    %155 = tpu.matmul %154, %153, %cst_148 {dimension_numbers = #tpu.dot_dimension_numbers<[1], [0], [0], [1], [0, 0, 1, 1], [], []>} : vector<8x64xbf16>, vector<64x64xbf16>, vector<8x64xf32> -> vector<8x64xf32>
    %cst_149 = arith.constant dense<0.000000e+00> : vector<4x64xf32>
    %156 = tpu.matmul %151, %155, %cst_149 {dimension_numbers = #tpu.dot_dimension_numbers<[1], [0], [0], [1], [0, 0, 1, 1], [], []>} : vector<4x8xf32>, vector<8x64xf32>, vector<4x64xf32> -> vector<4x64xf32>
    %157 = arith.addf %149, %156 : vector<4x64xf32>
    %c0_150 = arith.constant 0 : index
    %c0_151 = arith.constant 0 : index
    %158 = vector.load %arg14[%c0_150, %c0_151] : memref<4x4xf32, #tpu.memory_space<vmem>>, vector<4x4xf32>
    %cst_152 = arith.constant dense<0.000000e+00> : vector<4x64xf32>
    %159 = tpu.matmul %158, %157, %cst_152 {dimension_numbers = #tpu.dot_dimension_numbers<[1], [0], [0], [1], [0, 0, 1, 1], [], []>} : vector<4x4xf32>, vector<4x64xf32>, vector<4x64xf32> -> vector<4x64xf32>
    %c0_153 = arith.constant 0 : index
    %c0_154 = arith.constant 0 : index
    %160 = vector.load %arg15[%c0_153, %c0_154] : memref<64x64xf32, #tpu.memory_space<vmem>>, vector<64x64xf32>
    %cst_155 = arith.constant dense<0.000000e+00> : vector<4x64xf32>
    %161 = tpu.matmul %159, %160, %cst_155 {dimension_numbers = #tpu.dot_dimension_numbers<[1], [0], [0], [1], [0, 0, 1, 1], [], []>} : vector<4x64xf32>, vector<64x64xf32>, vector<4x64xf32> -> vector<4x64xf32>
    %c0_156 = arith.constant 0 : index
    %c0_157 = arith.constant 0 : index
    %162 = vector.load %arg14[%c0_156, %c0_157] : memref<4x4xf32, #tpu.memory_space<vmem>>, vector<4x4xf32>
    %163 = arith.mulf %157, %157 : vector<4x64xf32>
    %cst_158 = arith.constant dense<0.000000e+00> : vector<4x64xf32>
    %164 = tpu.matmul %162, %163, %cst_158 {dimension_numbers = #tpu.dot_dimension_numbers<[1], [0], [0], [1], [0, 0, 1, 1], [], []>} : vector<4x4xf32>, vector<4x64xf32>, vector<4x64xf32> -> vector<4x64xf32>
    %c0_159 = arith.constant 0 : index
    %c0_160 = arith.constant 0 : index
    %165 = vector.load %arg15[%c0_159, %c0_160] : memref<64x64xf32, #tpu.memory_space<vmem>>, vector<64x64xf32>
    %cst_161 = arith.constant dense<0.000000e+00> : vector<4x64xf32>
    %166 = tpu.matmul %164, %165, %cst_161 {dimension_numbers = #tpu.dot_dimension_numbers<[1], [0], [0], [1], [0, 0, 1, 1], [], []>} : vector<4x64xf32>, vector<64x64xf32>, vector<4x64xf32> -> vector<4x64xf32>
    %167 = arith.mulf %161, %161 : vector<4x64xf32>
    %168 = arith.subf %166, %167 : vector<4x64xf32>
    %cst_162 = arith.constant 0.000000e+00 : f32
    %169 = vector.broadcast %cst_162 : f32 to vector<4x64xf32>
    %170 = arith.maximumf %168, %169 : vector<4x64xf32>
    %cst_163 = arith.constant 9.99999974E-6 : f32
    %171 = vector.broadcast %cst_163 : f32 to vector<4x64xf32>
    %172 = arith.addf %170, %171 : vector<4x64xf32>
    %173 = math.rsqrt %172 : vector<4x64xf32>
    %174 = arith.subf %157, %161 : vector<4x64xf32>
    %175 = arith.mulf %174, %173 : vector<4x64xf32>
    %c0_164 = arith.constant 0 : index
    %c0_165 = arith.constant 0 : index
    %176 = vector.load %arg16[%c0_164, %c0_165] : memref<1x64xf32, #tpu.memory_space<vmem>>, vector<1x64xf32>
    %177 = vector.broadcast %176 : vector<1x64xf32> to vector<4x64xf32>
    %178 = arith.mulf %175, %177 : vector<4x64xf32>
    %c0_166 = arith.constant 0 : index
    %c0_167 = arith.constant 0 : index
    %179 = vector.load %arg17[%c0_166, %c0_167] : memref<1x64xf32, #tpu.memory_space<vmem>>, vector<1x64xf32>
    %180 = vector.broadcast %179 : vector<1x64xf32> to vector<4x64xf32>
    %181 = arith.addf %178, %180 : vector<4x64xf32>
    %cst_168 = arith.constant 0.000000e+00 : f32
    %182 = vector.broadcast %cst_168 : f32 to vector<4x64xf32>
    %183 = arith.cmpf ogt, %181, %182 : vector<4x64xf32>
    %cst_169 = arith.constant 2.000000e-01 : f32
    %184 = vector.broadcast %cst_169 : f32 to vector<4x64xf32>
    %185 = arith.mulf %184, %181 : vector<4x64xf32>
    %186 = arith.select %183, %181, %185 : vector<4x64xi1>, vector<4x64xf32>
    %c0_170 = arith.constant 0 : index
    %c0_171 = arith.constant 0 : index
    %187 = vector.load %arg18[%c0_170, %c0_171] : memref<4x64xf32, #tpu.memory_space<vmem>>, vector<4x64xf32>
    tpu.vector_store %arg18[%c0_170, %c0_171], %186 {strides = array<i32>} : memref<4x64xf32, #tpu.memory_space<vmem>>, vector<4x64xf32>,
    return
  }
}

</mosaic_0001>

<llo_original>
// kernel: disfront_forward.1
$region0: #{disfront_forward.1}
  #allocation0 [shape = 'u32[]', space=smem, size = 0x4, offset = 0x4, fixed_abs, tag = 'smem constant byte address 0x4 - core index']
  #allocation1 [shape = 'u32[144,128]{1,0:T(1,128)}', space=vmem, size = 0x12000, scoped, tag = 'internal scratch']
  %s0 = inlined_call_operand.hbm [shape: f32[128,16], index: 0, kind: input, shape index: {}]
  %s1 = inlined_call_operand.vmem [shape: bf16[16,16], index: 1, kind: input, shape index: {}]
  %s2 = inlined_call_operand.hbm [shape: f32[4,32,128], index: 2, kind: input, shape index: {}]
  %s3 = inlined_call_operand.hbm [shape: f32[4,16,64], index: 3, kind: input, shape index: {}]
  %s4 = inlined_call_operand.hbm [shape: f32[4,16,32], index: 4, kind: input, shape index: {}]
  %s5 = inlined_call_operand.hbm [shape: bf16[4,64,64], index: 5, kind: input, shape index: {}]
  %s6 = inlined_call_operand.vmem [shape: f32[4,8,16], index: 6, kind: input, shape index: {}]
  %s7 = inlined_call_operand.hbm [shape: bf16[4,64,64], index: 7, kind: input, shape index: {}]
  %s8 = inlined_call_operand.hbm [shape: f32[4,4,8], index: 8, kind: input, shape index: {}]
  %s9 = inlined_call_operand.hbm [shape: bf16[4,64,64], index: 9, kind: input, shape index: {}]
  %s10 = inlined_call_operand.hbm [shape: f32[8,8], index: 10, kind: input, shape index: {}]
  %s11 = inlined_call_operand.hbm [shape: f32[64,64], index: 11, kind: input, shape index: {}]
  %s12 = inlined_call_operand.vmem [shape: f32[1,64], index: 12, kind: input, shape index: {}]
  %s13 = inlined_call_operand.vmem [shape: f32[1,64], index: 13, kind: input, shape index: {}]
  %s14 = inlined_call_operand.hbm [shape: f32[4,4], index: 14, kind: input, shape index: {}]
  %s15 = inlined_call_operand.hbm [shape: f32[64,64], index: 15, kind: input, shape index: {}]
  %s16 = inlined_call_operand.vmem [shape: f32[1,64], index: 16, kind: input, shape index: {}]
  %s17 = inlined_call_operand.vmem [shape: f32[1,64], index: 17, kind: input, shape index: {}]
  %s18 = inlined_call_operand.vmem [shape: f32[4,64], index: 18, kind: output, shape index: {}]
  %s19 = sld [smem:[#allocation0]]
  $region130: #{disfront_forward.1} parent=0
    _
  %s21 = ssub.s32 1, %s19
  %s22 = scalar_select 0, %s21, %s19
  $region1: #{disfront_forward.1} parent=0
    #allocation2 [shape = 'u8[65536]{0}', space=vmem, size = 0x10000, scoped, tag = 'input window, operand 0, single buffered']
    #allocation3 [shape = 's32[1]{0}', space=sflag, size = 0x4, scoped, tag = 'scoped memory for disfront_forward.1']
    #allocation4 [shape = 'u8[65536]{0}', space=vmem, size = 0x10000, scoped, tag = 'input window, operand 2, single buffered']
    #allocation5 [shape = 's32[1]{0}', space=sflag, size = 0x4, scoped, tag = 'scoped memory for disfront_forward.1']
    #allocation6 [shape = 'u8[32768]{0}', space=vmem, size = 0x8000, scoped, tag = 'input window, operand 3, single buffered']
    #allocation7 [shape = 'u8[32768]{0}', space=vmem, size = 0x8000, scoped, tag = 'input window, operand 4, single buffered']
    #allocation8 [shape = 's32[1]{0}', space=sflag, size = 0x4, scoped, tag = 'scoped memory for disfront_forward.1']
    #allocation9 [shape = 'u8[65536]{0}', space=vmem, size = 0x10000, scoped, tag = 'input window, operand 5, single buffered']
    #allocation10 [shape = 'u8[65536]{0}', space=vmem, size = 0x10000, scoped, tag = 'input window, operand 7, single buffered']
    #allocation11 [shape = 's32[1]{0}', space=sflag, size = 0x4, scoped, tag = 'scoped memory for disfront_forward.1']
    #allocation12 [shape = 'u8[8192]{0}', space=vmem, size = 0x2000, scoped, tag = 'input window, operand 8, single buffered']
    #allocation13 [shape = 'u8[65536]{0}', space=vmem, size = 0x10000, scoped, tag = 'input window, operand 9, single buffered']
    #allocation14 [shape = 's32[1]{0}', space=sflag, size = 0x4, scoped, tag = 'scoped memory for disfront_forward.1']
    #allocation15 [shape = 'u8[4096]{0}', space=vmem, size = 0x1000, scoped, tag = 'input window, operand 10, single buffered']
    #allocation16 [shape = 'u8[32768]{0}', space=vmem, size = 0x8000, scoped, tag = 'input window, operand 11, single buffered']
    #allocation17 [shape = 's32[1]{0}', space=sflag, size = 0x4, scoped, tag = 'scoped memory for disfront_forward.1']
    #allocation18 [shape = 'u8[2048]{0}', space=vmem, size = 0x800, scoped, tag = 'input window, operand 14, single buffered']
    #allocation19 [shape = 'u8[32768]{0}', space=vmem, size = 0x8000, scoped, tag = 'input window, operand 15, single buffered']
    #allocation20 [shape = 's32[1]{0}', space=sflag, size = 0x4, scoped, tag = 'scoped memory for disfront_forward.1']
    %23 = vsyncpa [#allocation3], 0
    %24 = vsyncpa [#allocation5], 0
    %25 = vsyncpa [#allocation8], 0
    %26 = vsyncpa [#allocation11], 0
    %27 = vsyncpa [#allocation14], 0
    %28 = vsyncpa [#allocation17], 0
    %29 = vsyncpa [#allocation20], 0
    // Predicated region
    $region2: #{disfront_forward.1} parent=1 // pred_check
      _
    $region3: #{disfront_forward.1} parent=1 // pred_check_branch
      %31 = sbr.rel (0) target = $region5
    $region4: #{disfront_forward.1} parent=1 // pred_region
      %s33 = ssub.s32 2048, 2048
      %34 = vsyncadd [#allocation3], %s33
      %s35 = sshll.u32 [#allocation2], 4
      %s36 = int_to_ptr.vmem [resolvable:$true] %s35
      %41 = dma.hbm_to_vmem [thread:$0]  %s0, 2048, %s36, [#allocation3], 128, 128, 8
    $region5: #{disfront_forward.1} parent=1 // pred_fallthru
      _
    // Predicated region
    $region6: #{disfront_forward.1} parent=1 // pred_check
      _
    $region7: #{disfront_forward.1} parent=1 // pred_check_branch
      %43 = sbr.rel (0) target = $region9
    $region8: #{disfront_forward.1} parent=1 // pred_region
      _
    $region9: #{disfront_forward.1} parent=1 // pred_fallthru
      _
    // Predicated region
    $region10: #{disfront_forward.1} parent=1 // pred_check
      _
    $region11: #{disfront_forward.1} parent=1 // pred_check_branch
      %45 = sbr.rel (0) target = $region13
    $region12: #{disfront_forward.1} parent=1 // pred_region
      %s47 = ssub.s32 2048, 2048
      %48 = vsyncadd [#allocation5], %s47
      %s49 = sshll.u32 [#allocation4], 4
      %s50 = int_to_ptr.vmem [resolvable:$true] %s49
      %55 = dma.hbm_to_vmem [thread:$0]  %s2, 2048, %s50, [#allocation5], 128, 128, 8
    $region13: #{disfront_forward.1} parent=1 // pred_fallthru
      _
    // Predicated region
    $region14: #{disfront_forward.1} parent=1 // pred_check
      _
    $region15: #{disfront_forward.1} parent=1 // pred_check_branch
      %57 = sbr.rel (0) target = $region17
    $region16: #{disfront_forward.1} parent=1 // pred_region
      %s59 = ssub.s32 1024, 1024
      %60 = vsyncadd [#allocation5], %s59
      %s61 = sshll.u32 [#allocation6], 4
      %s62 = int_to_ptr.vmem [resolvable:$true] %s61
      %67 = dma.hbm_to_vmem [thread:$0]  %s3, 1024, %s62, [#allocation5], 128, 128, 8
    $region17: #{disfront_forward.1} parent=1 // pred_fallthru
      _
    // Predicated region
    $region18: #{disfront_forward.1} parent=1 // pred_check
      _
    $region19: #{disfront_forward.1} parent=1 // pred_check_branch
      %69 = sbr.rel (0) target = $region21
    $region20: #{disfront_forward.1} parent=1 // pred_region
      %s71 = ssub.s32 1024, 1024
      %72 = vsyncadd [#allocation8], %s71
      %s73 = sshll.u32 [#allocation7], 4
      %s74 = int_to_ptr.vmem [resolvable:$true] %s73
      %79 = dma.hbm_to_vmem [thread:$0]  %s4, 1024, %s74, [#allocation8], 128, 128, 8
    $region21: #{disfront_forward.1} parent=1 // pred_fallthru
      _
    // Predicated region
    $region22: #{disfront_forward.1} parent=1 // pred_check
      _
    $region23: #{disfront_forward.1} parent=1 // pred_check_branch
      %81 = sbr.rel (0) target = $region25
    $region24: #{disfront_forward.1} parent=1 // pred_region
      %s83 = ssub.s32 2048, 2048
      %84 = vsyncadd [#allocation8], %s83
      %s85 = sshll.u32 [#allocation9], 4
      %s86 = int_to_ptr.vmem [resolvable:$true] %s85
      %91 = dma.hbm_to_vmem [thread:$0]  %s5, 2048, %s86, [#allocation8], 64, 64, 4
    $region25: #{disfront_forward.1} parent=1 // pred_fallthru
      _
    // Predicated region
    $region26: #{disfront_forward.1} parent=1 // pred_check
      _
    $region27: #{disfront_forward.1} parent=1 // pred_check_branch
      %93 = sbr.rel (0) target = $region29
    $region28: #{disfront_forward.1} parent=1 // pred_region
      _
    $region29: #{disfront_forward.1} parent=1 // pred_fallthru
      _
    // Predicated region
    $region30: #{disfront_forward.1} parent=1 // pred_check
      _
    $region31: #{disfront_forward.1} parent=1 // pred_check_branch
      %95 = sbr.rel (0) target = $region33
    $region32: #{disfront_forward.1} parent=1 // pred_region
      %s97 = ssub.s32 2048, 2048
      %98 = vsyncadd [#allocation11], %s97
      %s99 = sshll.u32 [#allocation10], 4
      %s100 = int_to_ptr.vmem [resolvable:$true] %s99
      %105 = dma.hbm_to_vmem [thread:$0]  %s7, 2048, %s100, [#allocation11], 64, 64, 4
    $region33: #{disfront_forward.1} parent=1 // pred_fallthru
      _
    // Predicated region
    $region34: #{disfront_forward.1} parent=1 // pred_check
      _
    $region35: #{disfront_forward.1} parent=1 // pred_check_branch
      %107 = sbr.rel (0) target = $region37
    $region36: #{disfront_forward.1} parent=1 // pred_region
      %s109 = ssub.s32 256, 256
      %110 = vsyncadd [#allocation11], %s109
      %s111 = sshll.u32 [#allocation12], 4
      %s112 = int_to_ptr.vmem [resolvable:$true] %s111
      %117 = dma.hbm_to_vmem [thread:$0]  %s8, 256, %s112, [#allocation11], 64, 64, 4
    $region37: #{disfront_forward.1} parent=1 // pred_fallthru
      _
    // Predicated region
    $region38: #{disfront_forward.1} parent=1 // pred_check
      _
    $region39: #{disfront_forward.1} parent=1 // pred_check_branch
      %119 = sbr.rel (0) target = $region41
    $region40: #{disfront_forward.1} parent=1 // pred_region
      %s121 = ssub.s32 2048, 2048
      %122 = vsyncadd [#allocation14], %s121
      %s123 = sshll.u32 [#allocation13], 4
      %s124 = int_to_ptr.vmem [resolvable:$true] %s123
      %129 = dma.hbm_to_vmem [thread:$0]  %s9, 2048, %s124, [#allocation14], 64, 64, 4
    $region41: #{disfront_forward.1} parent=1 // pred_fallthru
      _
    // Predicated region
    $region42: #{disfront_forward.1} parent=1 // pred_check
      _
    $region43: #{disfront_forward.1} parent=1 // pred_check_branch
      %131 = sbr.rel (0) target = $region45
    $region44: #{disfront_forward.1} parent=1 // pred_region
      %s133 = ssub.s32 128, 128
      %134 = vsyncadd [#allocation14], %s133
      %s136 = sshll.u32 [#allocation15], 4
      %s137 = int_to_ptr.vmem [resolvable:$true] %s136
      %139 = dma.hbm_to_vmem [thread:$0]  %s10, 128, %s137, [#allocation14]
    $region45: #{disfront_forward.1} parent=1 // pred_fallthru
      _
    // Predicated region
    $region46: #{disfront_forward.1} parent=1 // pred_check
      _
    $region47: #{disfront_forward.1} parent=1 // pred_check_branch
      %141 = sbr.rel (0) target = $region49
    $region48: #{disfront_forward.1} parent=1 // pred_region
      %s143 = ssub.s32 1024, 1024
      %144 = vsyncadd [#allocation17], %s143
      %s145 = sshll.u32 [#allocation16], 4
      %s146 = int_to_ptr.vmem [resolvable:$true] %s145
      %151 = dma.hbm_to_vmem [thread:$0]  %s11, 1024, %s146, [#allocation17], 128, 128, 8
    $region49: #{disfront_forward.1} parent=1 // pred_fallthru
      _
    // Predicated region
    $region50: #{disfront_forward.1} parent=1 // pred_check
      _
    $region51: #{disfront_forward.1} parent=1 // pred_check_branch
      %153 = sbr.rel (0) target = $region53
    $region52: #{disfront_forward.1} parent=1 // pred_region
      _
    $region53: #{disfront_forward.1} parent=1 // pred_fallthru
      _
    // Predicated region
    $region54: #{disfront_forward.1} parent=1 // pred_check
      _
    $region55: #{disfront_forward.1} parent=1 // pred_check_branch
      %155 = sbr.rel (0) target = $region57
    $region56: #{disfront_forward.1} parent=1 // pred_region
      _
    $region57: #{disfront_forward.1} parent=1 // pred_fallthru
      _
    // Predicated region
    $region58: #{disfront_forward.1} parent=1 // pred_check
      _
    $region59: #{disfront_forward.1} parent=1 // pred_check_branch
      %157 = sbr.rel (0) target = $region61
    $region60: #{disfront_forward.1} parent=1 // pred_region
      %s159 = ssub.s32 64, 64
      %160 = vsyncadd [#allocation17], %s159
      %s162 = sshll.u32 [#allocation18], 4
      %s163 = int_to_ptr.vmem [resolvable:$true] %s162
      %165 = dma.hbm_to_vmem [thread:$0]  %s14, 64, %s163, [#allocation17]
    $region61: #{disfront_forward.1} parent=1 // pred_fallthru
      _
    // Predicated region
    $region62: #{disfront_forward.1} parent=1 // pred_check
      _
    $region63: #{disfront_forward.1} parent=1 // pred_check_branch
      %167 = sbr.rel (0) target = $region65
    $region64: #{disfront_forward.1} parent=1 // pred_region
      %s169 = ssub.s32 1024, 1024
      %170 = vsyncadd [#allocation20], %s169
      %s171 = sshll.u32 [#allocation19], 4
      %s172 = int_to_ptr.vmem [resolvable:$true] %s171
      %177 = dma.hbm_to_vmem [thread:$0]  %s15, 1024, %s172, [#allocation20], 128, 128, 8
    $region65: #{disfront_forward.1} parent=1 // pred_fallthru
      _
    // Predicated region
    $region66: #{disfront_forward.1} parent=1 // pred_check
      _
    $region67: #{disfront_forward.1} parent=1 // pred_check_branch
      %179 = sbr.rel (0) target = $region69
    $region68: #{disfront_forward.1} parent=1 // pred_region
      _
    $region69: #{disfront_forward.1} parent=1 // pred_fallthru
      _
    // Predicated region
    $region70: #{disfront_forward.1} parent=1 // pred_check
      _
    $region71: #{disfront_forward.1} parent=1 // pred_check_branch
      %181 = sbr.rel (0) target = $region73
    $region72: #{disfront_forward.1} parent=1 // pred_region
      _
    $region73: #{disfront_forward.1} parent=1 // pred_fallthru
      _
    // Predicated region
    $region74: #{disfront_forward.1} parent=1 // pred_check
      _
    $region75: #{disfront_forward.1} parent=1 // pred_check_branch
      %183 = sbr.rel (0) target = $region77
    $region76: #{disfront_forward.1} parent=1 // pred_region
      %184 = dma.done [#allocation3], 2048
    $region77: #{disfront_forward.1} parent=1 // pred_fallthru
      _
    // Predicated region
    $region78: #{disfront_forward.1} parent=1 // pred_check
      _
    $region79: #{disfront_forward.1} parent=1 // pred_check_branch
      %186 = sbr.rel (0) target = $region81
    $region80: #{disfront_forward.1} parent=1 // pred_region
      %187 = dma.done [#allocation5], 2048
    $region81: #{disfront_forward.1} parent=1 // pred_fallthru
      _
    // Predicated region
    $region82: #{disfront_forward.1} parent=1 // pred_check
      _
    $region83: #{disfront_forward.1} parent=1 // pred_check_branch
      %189 = sbr.rel (0) target = $region85
    $region84: #{disfront_forward.1} parent=1 // pred_region
      %190 = dma.done [#allocation5], 1024
    $region85: #{disfront_forward.1} parent=1 // pred_fallthru
      _
    // Predicated region
    $region86: #{disfront_forward.1} parent=1 // pred_check
      _
    $region87: #{disfront_forward.1} parent=1 // pred_check_branch
      %192 = sbr.rel (0) target = $region89
    $region88: #{disfront_forward.1} parent=1 // pred_region
      %193 = dma.done [#allocation8], 1024
    $region89: #{disfront_forward.1} parent=1 // pred_fallthru
      _
    // Predicated region
    $region90: #{disfront_forward.1} parent=1 // pred_check
      _
    $region91: #{disfront_forward.1} parent=1 // pred_check_branch
      %195 = sbr.rel (0) target = $region93
    $region92: #{disfront_forward.1} parent=1 // pred_region
      %196 = dma.done [#allocation8], 2048
    $region93: #{disfront_forward.1} parent=1 // pred_fallthru
      _
    // Predicated region
    $region94: #{disfront_forward.1} parent=1 // pred_check
      _
    $region95: #{disfront_forward.1} parent=1 // pred_check_branch
      %198 = sbr.rel (0) target = $region97
    $region96: #{disfront_forward.1} parent=1 // pred_region
      %199 = dma.done [#allocation11], 2048
    $region97: #{disfront_forward.1} parent=1 // pred_fallthru
      _
    // Predicated region
    $region98: #{disfront_forward.1} parent=1 // pred_check
      _
    $region99: #{disfront_forward.1} parent=1 // pred_check_branch
      %201 = sbr.rel (0) target = $region101
    $region100: #{disfront_forward.1} parent=1 // pred_region
      %202 = dma.done [#allocation11], 256
    $region101: #{disfront_forward.1} parent=1 // pred_fallthru
      _
    // Predicated region
    $region102: #{disfront_forward.1} parent=1 // pred_check
      _
    $region103: #{disfront_forward.1} parent=1 // pred_check_branch
      %204 = sbr.rel (0) target = $region105
    $region104: #{disfront_forward.1} parent=1 // pred_region
      %205 = dma.done [#allocation14], 2048
    $region105: #{disfront_forward.1} parent=1 // pred_fallthru
      _
    // Predicated region
    $region106: #{disfront_forward.1} parent=1 // pred_check
      _
    $region107: #{disfront_forward.1} parent=1 // pred_check_branch
      %207 = sbr.rel (0) target = $region109
    $region108: #{disfront_forward.1} parent=1 // pred_region
      %208 = dma.done [#allocation14], 128
    $region109: #{disfront_forward.1} parent=1 // pred_fallthru
      _
    // Predicated region
    $region110: #{disfront_forward.1} parent=1 // pred_check
      _
    $region111: #{disfront_forward.1} parent=1 // pred_check_branch
      %210 = sbr.rel (0) target = $region113
    $region112: #{disfront_forward.1} parent=1 // pred_region
      %211 = dma.done [#allocation17], 1024
    $region113: #{disfront_forward.1} parent=1 // pred_fallthru
      _
    // Predicated region
    $region114: #{disfront_forward.1} parent=1 // pred_check
      _
    $region115: #{disfront_forward.1} parent=1 // pred_check_branch
      %213 = sbr.rel (0) target = $region117
    $region116: #{disfront_forward.1} parent=1 // pred_region
      %214 = dma.done [#allocation17], 64
    $region117: #{disfront_forward.1} parent=1 // pred_fallthru
      _
    // Predicated region
    $region118: #{disfront_forward.1} parent=1 // pred_check
      _
    $region119: #{disfront_forward.1} parent=1 // pred_check_branch
      %216 = sbr.rel (0) target = $region121
    $region120: #{disfront_forward.1} parent=1 // pred_region
      %217 = dma.done [#allocation20], 1024
    $region121: #{disfront_forward.1} parent=1 // pred_fallthru
      _
    %v219 = vld [vmem:[#allocation2] sm:$0xff]
    %v220 = vld [vmem:[#allocation2 + $0x8] sm:$0xff]
    %v221 = vld [vmem:[#allocation2 + $0x10] sm:$0xff]
    %v222 = vld [vmem:[#allocation2 + $0x18] sm:$0xff]
    %v223 = vld [vmem:[#allocation2 + $0x20] sm:$0xff]
    %v224 = vld [vmem:[#allocation2 + $0x28] sm:$0xff]
    %v225 = vld [vmem:[#allocation2 + $0x30] sm:$0xff]
    %v226 = vld [vmem:[#allocation2 + $0x38] sm:$0xff]
    %v227 = vld [vmem:[#allocation2 + $0x40] sm:$0xff]
    %v228 = vld [vmem:[#allocation2 + $0x48] sm:$0xff]
    %v229 = vld [vmem:[#allocation2 + $0x50] sm:$0xff]
    %v230 = vld [vmem:[#allocation2 + $0x58] sm:$0xff]
    %v231 = vld [vmem:[#allocation2 + $0x60] sm:$0xff]
    %v232 = vld [vmem:[#allocation2 + $0x68] sm:$0xff]
    %v233 = vld [vmem:[#allocation2 + $0x70] sm:$0xff]
    %v234 = vld [vmem:[#allocation2 + $0x78] sm:$0xff]
    %v235 = vld [vmem:[%s1] sm:$0xf]
    %v236 = vld [vmem:[%s1 + $0x4] sm:$0xf]
    %v237 = vpack.c.bf16 %v220, %v219
    %v238 = vpack.c.bf16 %v222, %v221
    %v239 = vpack.c.bf16 %v224, %v223
    %v240 = vpack.c.bf16 %v226, %v225
    %v241 = vpack.c.bf16 %v228, %v227
    %v242 = vpack.c.bf16 %v230, %v229
    %v243 = vpack.c.bf16 %v232, %v231
    %v244 = vpack.c.bf16 %v234, %v233
    %v247 = vunpack.c.l.b16 %v235
    %v248 = vunpack.c.l.b16 %v236
    %v249 = vpack.c.b16 %v248, %v247
    %vm251 = vcmask 130048
    %v253 = vsel %vm251, %v237, 0
    %v256 = vsel %vm251, %v238, 0
    %v259 = vsel %vm251, %v239, 0
    %v262 = vsel %vm251, %v240, 0
    %v265 = vsel %vm251, %v241, 0
    %v268 = vsel %vm251, %v242, 0
    %v271 = vsel %vm251, %v243, 0
    %v274 = vsel %vm251, %v244, 0
    %276 = vmatprep.subr.bf16.mxu0 0
    %277 = vmatpush1.bf16.msra.mxu0 %v249
    %278 = vmatprep.subr.bf16.mxu0 0
    %279 = vmatpush1.bf16.msra.mxu0 0
    %280 = vmatprep.subr.bf16.mxu0 0
    %281 = vmatpush1.bf16.msra.mxu0 0
    %282 = vmatprep.subr.bf16.mxu0 0
    %283 = vmatpush1.bf16.msra.mxu0 0
    %284 = vmatprep.subr.bf16.mxu0 0
    %285 = vmatpush1.bf16.msra.mxu0 0
    %286 = vmatprep.subr.bf16.mxu0 0
    %287 = vmatpush1.bf16.msra.mxu0 0
    %288 = vmatprep.subr.bf16.mxu0 0
    %289 = vmatpush1.bf16.msra.mxu0 0
    %290 = vmatprep.subr.bf16.mxu0 0
    %291 = vmatpush1.bf16.msra.mxu0 0
    %292 = vmatprep.subr.bf16.mxu0 0
    %293 = vmatpush1.bf16.msra.mxu0 0
    %294 = vmatprep.subr.bf16.mxu0 0
    %295 = vmatpush1.bf16.msra.mxu0 0
    %296 = vmatprep.subr.bf16.mxu0 0
    %297 = vmatpush1.bf16.msra.mxu0 0
    %298 = vmatprep.subr.bf16.mxu0 0
    %299 = vmatpush1.bf16.msra.mxu0 0
    %300 = vmatprep.subr.bf16.mxu0 0
    %301 = vmatpush1.bf16.msra.mxu0 0
    %302 = vmatprep.subr.bf16.mxu0 0
    %303 = vmatpush1.bf16.msra.mxu0 0
    %304 = vmatprep.subr.bf16.mxu0 0
    %305 = vmatpush1.bf16.msra.mxu0 0
    %306 = vmatprep.subr.bf16.mxu0 0
    %307 = vmatpush1.bf16.msra.mxu0 0
    %308 = vmatprep.mubr.bf16.mxu0 0
    %309 = vmatmul.mubr.bf16.gmra.mrb[0].mxu0 %v253
    %v310 = vpop.f32.mrb[0].mxu0
    %v311 = vadd.f32 0.0, %v310
    %v312 = vpop.f32.mrb[0].mxu0
    %v313 = vpop.f32.mrb[0].mxu0
    %v314 = vadd.f32 0.0, %v313
    %v315 = vpop.f32.mrb[0].mxu0
    %316 = vmatprep.mubr.bf16.mxu0 0
    %317 = vmatmul.mubr.bf16.gmra.mrb[0].mxu0 %v256
    %v318 = vpop.f32.mrb[0].mxu0
    %v319 = vadd.f32 0.0, %v318
    %v320 = vpop.f32.mrb[0].mxu0
    %v321 = vpop.f32.mrb[0].mxu0
    %v322 = vadd.f32 0.0, %v321
    %v323 = vpop.f32.mrb[0].mxu0
    %324 = vmatprep.mubr.bf16.mxu0 0
    %325 = vmatmul.mubr.bf16.gmra.mrb[0].mxu0 %v259
    %v326 = vpop.f32.mrb[0].mxu0
    %v327 = vadd.f32 0.0, %v326
    %v328 = vpop.f32.mrb[0].mxu0
    %v329 = vpop.f32.mrb[0].mxu0
    %v330 = vadd.f32 0.0, %v329
    %v331 = vpop.f32.mrb[0].mxu0
    %332 = vmatprep.mubr.bf16.mxu0 0
    %333 = vmatmul.mubr.bf16.gmra.mrb[0].mxu0 %v262
    %v334 = vpop.f32.mrb[0].mxu0
    %v335 = vadd.f32 0.0, %v334
    %v336 = vpop.f32.mrb[0].mxu0
    %v337 = vpop.f32.mrb[0].mxu0
    %v338 = vadd.f32 0.0, %v337
    %v339 = vpop.f32.mrb[0].mxu0
    %340 = vmatprep.mubr.bf16.mxu0 0
    %341 = vmatmul.mubr.bf16.gmra.mrb[0].mxu0 %v265
    %v342 = vpop.f32.mrb[0].mxu0
    %v343 = vadd.f32 0.0, %v342
    %v344 = vpop.f32.mrb[0].mxu0
    %v345 = vpop.f32.mrb[0].mxu0
    %v346 = vadd.f32 0.0, %v345
    %v347 = vpop.f32.mrb[0].mxu0
    %348 = vmatprep.mubr.bf16.mxu0 0
    %349 = vmatmul.mubr.bf16.gmra.mrb[0].mxu0 %v268
    %v350 = vpop.f32.mrb[0].mxu0
    %v351 = vadd.f32 0.0, %v350
    %v352 = vpop.f32.mrb[0].mxu0
    %v353 = vpop.f32.mrb[0].mxu0
    %v354 = vadd.f32 0.0, %v353
    %v355 = vpop.f32.mrb[0].mxu0
    %356 = vmatprep.mubr.bf16.mxu0 0
    %357 = vmatmul.mubr.bf16.gmra.mrb[0].mxu0 %v271
    %v358 = vpop.f32.mrb[0].mxu0
    %v359 = vadd.f32 0.0, %v358
    %v360 = vpop.f32.mrb[0].mxu0
    %v361 = vpop.f32.mrb[0].mxu0
    %v362 = vadd.f32 0.0, %v361
    %v363 = vpop.f32.mrb[0].mxu0
    %364 = vmatprep.mubr.bf16.mxu0 0
    %365 = vmatmul.mubr.bf16.gmra.mrb[0].mxu0 %v274
    %v366 = vpop.f32.mrb[0].mxu0
    %v367 = vadd.f32 0.0, %v366
    %v368 = vpop.f32.mrb[0].mxu0
    %v369 = vpop.f32.mrb[0].mxu0
    %v370 = vadd.f32 0.0, %v369
    %v371 = vpop.f32.mrb[0].mxu0
    %372 = vdwg.mxu0
    %v373 = vld [vmem:[#allocation4] sm:$0xff]
    %v374 = vld [vmem:[#allocation4 + $0x8] sm:$0xff]
    %v375 = vld [vmem:[#allocation4 + $0x10] sm:$0xff]
    %v376 = vld [vmem:[#allocation4 + $0x18] sm:$0xff]
    %377 = vmatprep.subr.mxu0 0.0
    %378 = vmatpush1.msra.mxu0 %v311
    %379 = vmatprep.subr.mxu0 0.0
    %380 = vmatpush1.msra.mxu0 %v314
    %381 = vmatprep.subr.mxu0 0.0
    %382 = vmatpush1.msra.mxu0 %v319
    %383 = vmatprep.subr.mxu0 0.0
    %384 = vmatpush1.msra.mxu0 %v322
    %385 = vmatprep.subr.mxu0 0.0
    %386 = vmatpush1.msra.mxu0 %v327
    %387 = vmatprep.subr.mxu0 0.0
    %388 = vmatpush1.msra.mxu0 %v330
    %389 = vmatprep.subr.mxu0 0.0
    %390 = vmatpush1.msra.mxu0 %v335
    %391 = vmatprep.subr.mxu0 0.0
    %392 = vmatpush1.msra.mxu0 %v338
    %393 = vmatprep.subr.mxu0 0.0
    %394 = vmatpush1.msra.mxu0 %v343
    %395 = vmatprep.subr.mxu0 0.0
    %396 = vmatpush1.msra.mxu0 %v346
    %397 = vmatprep.subr.mxu0 0.0
    %398 = vmatpush1.msra.mxu0 %v351
    %399 = vmatprep.subr.mxu0 0.0
    %400 = vmatpush1.msra.mxu0 %v354
    %401 = vmatprep.subr.mxu0 0.0
    %402 = vmatpush1.msra.mxu0 %v359
    %403 = vmatprep.subr.mxu0 0.0
    %404 = vmatpush1.msra.mxu0 %v362
    %405 = vmatprep.subr.mxu0 0.0
    %406 = vmatpush1.msra.mxu0 %v367
    %407 = vmatprep.subr.mxu0 0.0
    %408 = vmatpush1.msra.mxu0 %v370
    %409 = vmatprep.subr.mxu0 0.0
    %410 = vmatpush1.msra.mxu0 0.0
    %411 = vmatprep.subr.mxu0 0.0
    %412 = vmatpush1.msra.mxu0 0.0
    %413 = vmatprep.subr.mxu0 0.0
    %414 = vmatpush1.msra.mxu0 0.0
    %415 = vmatprep.subr.mxu0 0.0
    %416 = vmatpush1.msra.mxu0 0.0
    %417 = vmatprep.subr.mxu0 0.0
    %418 = vmatpush1.msra.mxu0 0.0
    %419 = vmatprep.subr.mxu0 0.0
    %420 = vmatpush1.msra.mxu0 0.0
    %421 = vmatprep.subr.mxu0 0.0
    %422 = vmatpush1.msra.mxu0 0.0
    %423 = vmatprep.subr.mxu0 0.0
    %424 = vmatpush1.msra.mxu0 0.0
    %425 = vmatprep.subr.mxu0 0.0
    %426 = vmatpush1.msra.mxu0 0.0
    %427 = vmatprep.subr.mxu0 0.0
    %428 = vmatpush1.msra.mxu0 0.0
    %429 = vmatprep.subr.mxu0 0.0
    %430 = vmatpush1.msra.mxu0 0.0
    %431 = vmatprep.subr.mxu0 0.0
    %432 = vmatpush1.msra.mxu0 0.0
    %433 = vmatprep.subr.mxu0 0.0
    %434 = vmatpush1.msra.mxu0 0.0
    %435 = vmatprep.subr.mxu0 0.0
    %436 = vmatpush1.msra.mxu0 0.0
    %437 = vmatprep.subr.mxu0 0.0
    %438 = vmatpush1.msra.mxu0 0.0
    %439 = vmatprep.subr.mxu0 0.0
    %440 = vmatpush1.msra.mxu0 0.0
    %441 = vmatprep.mubr.f32.mxu0 0.0
    %442 = vmatmul.mubr.f32.gmra.mrb[0].mxu0 %v373
    %v443 = vpop.f32.mrb[0].mxu0
    %v444 = vadd.f32 0.0, %v443
    %v445 = vpop.f32.mrb[0].mxu0
    %446 = vmatprep.mubr.f32.mxu0 0.0
    %447 = vmatmul.mubr.f32.gmra.mrb[0].mxu0 %v374
    %v448 = vpop.f32.mrb[0].mxu0
    %v449 = vadd.f32 0.0, %v448
    %v450 = vpop.f32.mrb[0].mxu0
    %451 = vmatprep.mubr.f32.mxu0 0.0
    %452 = vmatmul.mubr.f32.gmra.mrb[0].mxu0 %v375
    %v453 = vpop.f32.mrb[0].mxu0
    %v454 = vadd.f32 0.0, %v453
    %v455 = vpop.f32.mrb[0].mxu0
    %456 = vmatprep.mubr.f32.mxu0 0.0
    %457 = vmatmul.mubr.f32.gmra.mrb[0].mxu0 %v376
    %v458 = vpop.f32.mrb[0].mxu0
    %v459 = vadd.f32 0.0, %v458
    %v460 = vpop.f32.mrb[0].mxu0
    %461 = vdwg.mxu0
    %v462 = vld [vmem:[#allocation6] sm:$0xff]
    %v463 = vld [vmem:[#allocation6 + $0x8] sm:$0xff]
    %s464 = scalar_lea.vmem [#allocation4], 32
    %v465 = vld [vmem:[%s464] sm:$0xff]
    %v466 = vld [vmem:[%s464 + $0x8] sm:$0xff]
    %v467 = vld [vmem:[%s464 + $0x10] sm:$0xff]
    %v468 = vld [vmem:[%s464 + $0x18] sm:$0xff]
    %469 = vmatprep.subr.mxu0 0.0
    %470 = vmatpush1.msra.mxu0 %v311
    %471 = vmatprep.subr.mxu0 0.0
    %472 = vmatpush1.msra.mxu0 %v314
    %473 = vmatprep.subr.mxu0 0.0
    %474 = vmatpush1.msra.mxu0 %v319
    %475 = vmatprep.subr.mxu0 0.0
    %476 = vmatpush1.msra.mxu0 %v322
    %477 = vmatprep.subr.mxu0 0.0
    %478 = vmatpush1.msra.mxu0 %v327
    %479 = vmatprep.subr.mxu0 0.0
    %480 = vmatpush1.msra.mxu0 %v330
    %481 = vmatprep.subr.mxu0 0.0
    %482 = vmatpush1.msra.mxu0 %v335
    %483 = vmatprep.subr.mxu0 0.0
    %484 = vmatpush1.msra.mxu0 %v338
    %485 = vmatprep.subr.mxu0 0.0
    %486 = vmatpush1.msra.mxu0 %v343
    %487 = vmatprep.subr.mxu0 0.0
    %488 = vmatpush1.msra.mxu0 %v346
    %489 = vmatprep.subr.mxu0 0.0
    %490 = vmatpush1.msra.mxu0 %v351
    %491 = vmatprep.subr.mxu0 0.0
    %492 = vmatpush1.msra.mxu0 %v354
    %493 = vmatprep.subr.mxu0 0.0
    %494 = vmatpush1.msra.mxu0 %v359
    %495 = vmatprep.subr.mxu0 0.0
    %496 = vmatpush1.msra.mxu0 %v362
    %497 = vmatprep.subr.mxu0 0.0
    %498 = vmatpush1.msra.mxu0 %v367
    %499 = vmatprep.subr.mxu0 0.0
    %500 = vmatpush1.msra.mxu0 %v370
    %501 = vmatprep.subr.mxu0 0.0
    %502 = vmatpush1.msra.mxu0 0.0
    %503 = vmatprep.subr.mxu0 0.0
    %504 = vmatpush1.msra.mxu0 0.0
    %505 = vmatprep.subr.mxu0 0.0
    %506 = vmatpush1.msra.mxu0 0.0
    %507 = vmatprep.subr.mxu0 0.0
    %508 = vmatpush1.msra.mxu0 0.0
    %509 = vmatprep.subr.mxu0 0.0
    %510 = vmatpush1.msra.mxu0 0.0
    %511 = vmatprep.subr.mxu0 0.0
    %512 = vmatpush1.msra.mxu0 0.0
    %513 = vmatprep.subr.mxu0 0.0
    %514 = vmatpush1.msra.mxu0 0.0
    %515 = vmatprep.subr.mxu0 0.0
    %516 = vmatpush1.msra.mxu0 0.0
    %517 = vmatprep.subr.mxu0 0.0
    %518 = vmatpush1.msra.mxu0 0.0
    %519 = vmatprep.subr.mxu0 0.0
    %520 = vmatpush1.msra.mxu0 0.0
    %521 = vmatprep.subr.mxu0 0.0
    %522 = vmatpush1.msra.mxu0 0.0
    %523 = vmatprep.subr.mxu0 0.0
    %524 = vmatpush1.msra.mxu0 0.0
    %525 = vmatprep.subr.mxu0 0.0
    %526 = vmatpush1.msra.mxu0 0.0
    %527 = vmatprep.subr.mxu0 0.0
    %528 = vmatpush1.msra.mxu0 0.0
    %529 = vmatprep.subr.mxu0 0.0
    %530 = vmatpush1.msra.mxu0 0.0
    %531 = vmatprep.subr.mxu0 0.0
    %532 = vmatpush1.msra.mxu0 0.0
    %533 = vmatprep.mubr.f32.mxu0 0.0
    %534 = vmatmul.mubr.f32.gmra.mrb[0].mxu0 %v465
    %v535 = vpop.f32.mrb[0].mxu0
    %v536 = vadd.f32 0.0, %v535
    %v537 = vpop.f32.mrb[0].mxu0
    %538 = vmatprep.mubr.f32.mxu0 0.0
    %539 = vmatmul.mubr.f32.gmra.mrb[0].mxu0 %v466
    %v540 = vpop.f32.mrb[0].mxu0
    %v541 = vadd.f32 0.0, %v540
    %v542 = vpop.f32.mrb[0].mxu0
    %543 = vmatprep.mubr.f32.mxu0 0.0
    %544 = vmatmul.mubr.f32.gmra.mrb[0].mxu0 %v467
    %v545 = vpop.f32.mrb[0].mxu0
    %v546 = vadd.f32 0.0, %v545
    %v547 = vpop.f32.mrb[0].mxu0
    %548 = vmatprep.mubr.f32.mxu0 0.0
    %549 = vmatmul.mubr.f32.gmra.mrb[0].mxu0 %v468
    %v550 = vpop.f32.mrb[0].mxu0
    %v551 = vadd.f32 0.0, %v550
    %v552 = vpop.f32.mrb[0].mxu0
    %553 = vdwg.mxu0
    %s554 = scalar_lea.vmem [#allocation6], 16
    %v555 = vld [vmem:[%s554] sm:$0xff]
    %v556 = vld [vmem:[%s554 + $0x8] sm:$0xff]
    %v558 = vsel %vm251, %v536, 0
    %v561 = vsel %vm251, %v541, 0
    %v564 = vsel %vm251, %v546, 0
    %v567 = vsel %vm251, %v551, 0
    %569 = vmatprep.subr.mxu0 0.0
    %570 = vmatpush1.msra.mxu0 %v555
    %571 = vmatprep.subr.mxu0 0.0
    %572 = vmatpush1.msra.mxu0 %v556
    %573 = vmatprep.subr.mxu0 0.0
    %574 = vmatpush1.msra.mxu0 0.0
    %575 = vmatprep.subr.mxu0 0.0
    %576 = vmatpush1.msra.mxu0 0.0
    %577 = vmatprep.subr.mxu0 0.0
    %578 = vmatpush1.msra.mxu0 0.0
    %579 = vmatprep.subr.mxu0 0.0
    %580 = vmatpush1.msra.mxu0 0.0
    %581 = vmatprep.subr.mxu0 0.0
    %582 = vmatpush1.msra.mxu0 0.0
    %583 = vmatprep.subr.mxu0 0.0
    %584 = vmatpush1.msra.mxu0 0.0
    %585 = vmatprep.subr.mxu0 0.0
    %586 = vmatpush1.msra.mxu0 0.0
    %587 = vmatprep.subr.mxu0 0.0
    %588 = vmatpush1.msra.mxu0 0.0
    %589 = vmatprep.subr.mxu0 0.0
    %590 = vmatpush1.msra.mxu0 0.0
    %591 = vmatprep.subr.mxu0 0.0
    %592 = vmatpush1.msra.mxu0 0.0
    %593 = vmatprep.subr.mxu0 0.0
    %594 = vmatpush1.msra.mxu0 0.0
    %595 = vmatprep.subr.mxu0 0.0
    %596 = vmatpush1.msra.mxu0 0.0
    %597 = vmatprep.subr.mxu0 0.0
    %598 = vmatpush1.msra.mxu0 0.0
    %599 = vmatprep.subr.mxu0 0.0
    %600 = vmatpush1.msra.mxu0 0.0
    %601 = vmatprep.subr.mxu0 0.0
    %602 = vmatpush1.msra.mxu0 0.0
    %603 = vmatprep.subr.mxu0 0.0
    %604 = vmatpush1.msra.mxu0 0.0
    %605 = vmatprep.subr.mxu0 0.0
    %606 = vmatpush1.msra.mxu0 0.0
    %607 = vmatprep.subr.mxu0 0.0
    %608 = vmatpush1.msra.mxu0 0.0
    %609 = vmatprep.subr.mxu0 0.0
    %610 = vmatpush1.msra.mxu0 0.0
    %611 = vmatprep.subr.mxu0 0.0
    %612 = vmatpush1.msra.mxu0 0.0
    %613 = vmatprep.subr.mxu0 0.0
    %614 = vmatpush1.msra.mxu0 0.0
    %615 = vmatprep.subr.mxu0 0.0
    %616 = vmatpush1.msra.mxu0 0.0
    %617 = vmatprep.subr.mxu0 0.0
    %618 = vmatpush1.msra.mxu0 0.0
    %619 = vmatprep.subr.mxu0 0.0
    %620 = vmatpush1.msra.mxu0 0.0
    %621 = vmatprep.subr.mxu0 0.0
    %622 = vmatpush1.msra.mxu0 0.0
    %623 = vmatprep.subr.mxu0 0.0
    %624 = vmatpush1.msra.mxu0 0.0
    %625 = vmatprep.subr.mxu0 0.0
    %626 = vmatpush1.msra.mxu0 0.0
    %627 = vmatprep.subr.mxu0 0.0
    %628 = vmatpush1.msra.mxu0 0.0
    %629 = vmatprep.subr.mxu0 0.0
    %630 = vmatpush1.msra.mxu0 0.0
    %631 = vmatprep.subr.mxu0 0.0
    %632 = vmatpush1.msra.mxu0 0.0
    %633 = vmatprep.mubr.f32.mxu0 0.0
    %634 = vmatmul.mubr.f32.gmra.mrb[0].mxu0 %v558
    %v635 = vpop.f32.mrb[0].mxu0
    %v636 = vadd.f32 0.0, %v635
    %v637 = vpop.f32.mrb[0].mxu0
    %638 = vmatprep.mubr.f32.mxu0 0.0
    %639 = vmatmul.mubr.f32.gmra.mrb[0].mxu0 %v561
    %v640 = vpop.f32.mrb[0].mxu0
    %v641 = vadd.f32 0.0, %v640
    %v642 = vpop.f32.mrb[0].mxu0
    %643 = vmatprep.mubr.f32.mxu0 0.0
    %644 = vmatmul.mubr.f32.gmra.mrb[0].mxu0 %v564
    %v645 = vpop.f32.mrb[0].mxu0
    %v646 = vadd.f32 0.0, %v645
    %v647 = vpop.f32.mrb[0].mxu0
    %648 = vmatprep.mubr.f32.mxu0 0.0
    %649 = vmatmul.mubr.f32.gmra.mrb[0].mxu0 %v567
    %v650 = vpop.f32.mrb[0].mxu0
    %v651 = vadd.f32 0.0, %v650
    %v652 = vpop.f32.mrb[0].mxu0
    %653 = vdwg.mxu0
    %v655 = vsel %vm251, %v444, 0
    %v658 = vsel %vm251, %v449, 0
    %v661 = vsel %vm251, %v454, 0
    %v664 = vsel %vm251, %v459, 0
    %666 = vmatprep.subr.mxu0 0.0
    %667 = vmatpush1.msra.mxu0 %v462
    %668 = vmatprep.subr.mxu0 0.0
    %669 = vmatpush1.msra.mxu0 %v463
    %670 = vmatprep.subr.mxu0 0.0
    %671 = vmatpush1.msra.mxu0 0.0
    %672 = vmatprep.subr.mxu0 0.0
    %673 = vmatpush1.msra.mxu0 0.0
    %674 = vmatprep.subr.mxu0 0.0
    %675 = vmatpush1.msra.mxu0 0.0
    %676 = vmatprep.subr.mxu0 0.0
    %677 = vmatpush1.msra.mxu0 0.0
    %678 = vmatprep.subr.mxu0 0.0
    %679 = vmatpush1.msra.mxu0 0.0
    %680 = vmatprep.subr.mxu0 0.0
    %681 = vmatpush1.msra.mxu0 0.0
    %682 = vmatprep.subr.mxu0 0.0
    %683 = vmatpush1.msra.mxu0 0.0
    %684 = vmatprep.subr.mxu0 0.0
    %685 = vmatpush1.msra.mxu0 0.0
    %686 = vmatprep.subr.mxu0 0.0
    %687 = vmatpush1.msra.mxu0 0.0
    %688 = vmatprep.subr.mxu0 0.0
    %689 = vmatpush1.msra.mxu0 0.0
    %690 = vmatprep.subr.mxu0 0.0
    %691 = vmatpush1.msra.mxu0 0.0
    %692 = vmatprep.subr.mxu0 0.0
    %693 = vmatpush1.msra.mxu0 0.0
    %694 = vmatprep.subr.mxu0 0.0
    %695 = vmatpush1.msra.mxu0 0.0
    %696 = vmatprep.subr.mxu0 0.0
    %697 = vmatpush1.msra.mxu0 0.0
    %698 = vmatprep.subr.mxu0 0.0
    %699 = vmatpush1.msra.mxu0 0.0
    %700 = vmatprep.subr.mxu0 0.0
    %701 = vmatpush1.msra.mxu0 0.0
    %702 = vmatprep.subr.mxu0 0.0
    %703 = vmatpush1.msra.mxu0 0.0
    %704 = vmatprep.subr.mxu0 0.0
    %705 = vmatpush1.msra.mxu0 0.0
    %706 = vmatprep.subr.mxu0 0.0
    %707 = vmatpush1.msra.mxu0 0.0
    %708 = vmatprep.subr.mxu0 0.0
    %709 = vmatpush1.msra.mxu0 0.0
    %710 = vmatprep.subr.mxu0 0.0
    %711 = vmatpush1.msra.mxu0 0.0
    %712 = vmatprep.subr.mxu0 0.0
    %713 = vmatpush1.msra.mxu0 0.0
    %714 = vmatprep.subr.mxu0 0.0
    %715 = vmatpush1.msra.mxu0 0.0
    %716 = vmatprep.subr.mxu0 0.0
    %717 = vmatpush1.msra.mxu0 0.0
    %718 = vmatprep.subr.mxu0 0.0
    %719 = vmatpush1.msra.mxu0 0.0
    %720 = vmatprep.subr.mxu0 0.0
    %721 = vmatpush1.msra.mxu0 0.0
    %722 = vmatprep.subr.mxu0 0.0
    %723 = vmatpush1.msra.mxu0 0.0
    %724 = vmatprep.subr.mxu0 0.0
    %725 = vmatpush1.msra.mxu0 0.0
    %726 = vmatprep.subr.mxu0 0.0
    %727 = vmatpush1.msra.mxu0 0.0
    %728 = vmatprep.subr.mxu0 0.0
    %729 = vmatpush1.msra.mxu0 0.0
    %730 = vmatprep.mubr.f32.mxu0 0.0
    %731 = vmatmul.mubr.f32.gmra.mrb[0].mxu0 %v655
    %v732 = vpop.f32.mrb[0].mxu0
    %v733 = vadd.f32 %v636, %v732
    %v734 = vpop.f32.mrb[0].mxu0
    %735 = vmatprep.mubr.f32.mxu0 0.0
    %736 = vmatmul.mubr.f32.gmra.mrb[0].mxu0 %v658
    %v737 = vpop.f32.mrb[0].mxu0
    %v738 = vadd.f32 %v641, %v737
    %v739 = vpop.f32.mrb[0].mxu0
    %740 = vmatprep.mubr.f32.mxu0 0.0
    %741 = vmatmul.mubr.f32.gmra.mrb[0].mxu0 %v661
    %v742 = vpop.f32.mrb[0].mxu0
    %v743 = vadd.f32 %v646, %v742
    %v744 = vpop.f32.mrb[0].mxu0
    %745 = vmatprep.mubr.f32.mxu0 0.0
    %746 = vmatmul.mubr.f32.gmra.mrb[0].mxu0 %v664
    %v747 = vpop.f32.mrb[0].mxu0
    %v748 = vadd.f32 %v651, %v747
    %v749 = vpop.f32.mrb[0].mxu0
    %750 = vdwg.mxu0
    %s751 = scalar_lea.vmem [#allocation4], 64
    %v752 = vld [vmem:[%s751] sm:$0xff]
    %v753 = vld [vmem:[%s751 + $0x8] sm:$0xff]
    %v754 = vld [vmem:[%s751 + $0x10] sm:$0xff]
    %v755 = vld [vmem:[%s751 + $0x18] sm:$0xff]
    %756 = vmatprep.subr.mxu0 0.0
    %757 = vmatpush1.msra.mxu0 %v311
    %758 = vmatprep.subr.mxu0 0.0
    %759 = vmatpush1.msra.mxu0 %v314
    %760 = vmatprep.subr.mxu0 0.0
    %761 = vmatpush1.msra.mxu0 %v319
    %762 = vmatprep.subr.mxu0 0.0
    %763 = vmatpush1.msra.mxu0 %v322
    %764 = vmatprep.subr.mxu0 0.0
    %765 = vmatpush1.msra.mxu0 %v327
    %766 = vmatprep.subr.mxu0 0.0
    %767 = vmatpush1.msra.mxu0 %v330
    %768 = vmatprep.subr.mxu0 0.0
    %769 = vmatpush1.msra.mxu0 %v335
    %770 = vmatprep.subr.mxu0 0.0
    %771 = vmatpush1.msra.mxu0 %v338
    %772 = vmatprep.subr.mxu0 0.0
    %773 = vmatpush1.msra.mxu0 %v343
    %774 = vmatprep.subr.mxu0 0.0
    %775 = vmatpush1.msra.mxu0 %v346
    %776 = vmatprep.subr.mxu0 0.0
    %777 = vmatpush1.msra.mxu0 %v351
    %778 = vmatprep.subr.mxu0 0.0
    %779 = vmatpush1.msra.mxu0 %v354
    %780 = vmatprep.subr.mxu0 0.0
    %781 = vmatpush1.msra.mxu0 %v359
    %782 = vmatprep.subr.mxu0 0.0
    %783 = vmatpush1.msra.mxu0 %v362
    %784 = vmatprep.subr.mxu0 0.0
    %785 = vmatpush1.msra.mxu0 %v367
    %786 = vmatprep.subr.mxu0 0.0
    %787 = vmatpush1.msra.mxu0 %v370
    %788 = vmatprep.subr.mxu0 0.0
    %789 = vmatpush1.msra.mxu0 0.0
    %790 = vmatprep.subr.mxu0 0.0
    %791 = vmatpush1.msra.mxu0 0.0
    %792 = vmatprep.subr.mxu0 0.0
    %793 = vmatpush1.msra.mxu0 0.0
    %794 = vmatprep.subr.mxu0 0.0
    %795 = vmatpush1.msra.mxu0 0.0
    %796 = vmatprep.subr.mxu0 0.0
    %797 = vmatpush1.msra.mxu0 0.0
    %798 = vmatprep.subr.mxu0 0.0
    %799 = vmatpush1.msra.mxu0 0.0
    %800 = vmatprep.subr.mxu0 0.0
    %801 = vmatpush1.msra.mxu0 0.0
    %802 = vmatprep.subr.mxu0 0.0
    %803 = vmatpush1.msra.mxu0 0.0
    %804 = vmatprep.subr.mxu0 0.0
    %805 = vmatpush1.msra.mxu0 0.0
    %806 = vmatprep.subr.mxu0 0.0
    %807 = vmatpush1.msra.mxu0 0.0
    %808 = vmatprep.subr.mxu0 0.0
    %809 = vmatpush1.msra.mxu0 0.0
    %810 = vmatprep.subr.mxu0 0.0
    %811 = vmatpush1.msra.mxu0 0.0
    %812 = vmatprep.subr.mxu0 0.0
    %813 = vmatpush1.msra.mxu0 0.0
    %814 = vmatprep.subr.mxu0 0.0
    %815 = vmatpush1.msra.mxu0 0.0
    %816 = vmatprep.subr.mxu0 0.0
    %817 = vmatpush1.msra.mxu0 0.0
    %818 = vmatprep.subr.mxu0 0.0
    %819 = vmatpush1.msra.mxu0 0.0
    %820 = vmatprep.mubr.f32.mxu0 0.0
    %821 = vmatmul.mubr.f32.gmra.mrb[0].mxu0 %v752
    %v822 = vpop.f32.mrb[0].mxu0
    %v823 = vadd.f32 0.0, %v822
    %v824 = vpop.f32.mrb[0].mxu0
    %825 = vmatprep.mubr.f32.mxu0 0.0
    %826 = vmatmul.mubr.f32.gmra.mrb[0].mxu0 %v753
    %v827 = vpop.f32.mrb[0].mxu0
    %v828 = vadd.f32 0.0, %v827
    %v829 = vpop.f32.mrb[0].mxu0
    %830 = vmatprep.mubr.f32.mxu0 0.0
    %831 = vmatmul.mubr.f32.gmra.mrb[0].mxu0 %v754
    %v832 = vpop.f32.mrb[0].mxu0
    %v833 = vadd.f32 0.0, %v832
    %v834 = vpop.f32.mrb[0].mxu0
    %835 = vmatprep.mubr.f32.mxu0 0.0
    %836 = vmatmul.mubr.f32.gmra.mrb[0].mxu0 %v755
    %v837 = vpop.f32.mrb[0].mxu0
    %v838 = vadd.f32 0.0, %v837
    %v839 = vpop.f32.mrb[0].mxu0
    %840 = vdwg.mxu0
    %s841 = scalar_lea.vmem [#allocation6], 32
    %v842 = vld [vmem:[%s841] sm:$0xff]
    %v843 = vld [vmem:[%s841 + $0x8] sm:$0xff]
    %v845 = vsel %vm251, %v823, 0
    %v848 = vsel %vm251, %v828, 0
    %v851 = vsel %vm251, %v833, 0
    %v854 = vsel %vm251, %v838, 0
    %856 = vmatprep.subr.mxu0 0.0
    %857 = vmatpush1.msra.mxu0 %v842
    %858 = vmatprep.subr.mxu0 0.0
    %859 = vmatpush1.msra.mxu0 %v843
    %860 = vmatprep.subr.mxu0 0.0
    %861 = vmatpush1.msra.mxu0 0.0
    %862 = vmatprep.subr.mxu0 0.0
    %863 = vmatpush1.msra.mxu0 0.0
    %864 = vmatprep.subr.mxu0 0.0
    %865 = vmatpush1.msra.mxu0 0.0
    %866 = vmatprep.subr.mxu0 0.0
    %867 = vmatpush1.msra.mxu0 0.0
    %868 = vmatprep.subr.mxu0 0.0
    %869 = vmatpush1.msra.mxu0 0.0
    %870 = vmatprep.subr.mxu0 0.0
    %871 = vmatpush1.msra.mxu0 0.0
    %872 = vmatprep.subr.mxu0 0.0
    %873 = vmatpush1.msra.mxu0 0.0
    %874 = vmatprep.subr.mxu0 0.0
    %875 = vmatpush1.msra.mxu0 0.0
    %876 = vmatprep.subr.mxu0 0.0
    %877 = vmatpush1.msra.mxu0 0.0
    %878 = vmatprep.subr.mxu0 0.0
    %879 = vmatpush1.msra.mxu0 0.0
    %880 = vmatprep.subr.mxu0 0.0
    %881 = vmatpush1.msra.mxu0 0.0
    %882 = vmatprep.subr.mxu0 0.0
    %883 = vmatpush1.msra.mxu0 0.0
    %884 = vmatprep.subr.mxu0 0.0
    %885 = vmatpush1.msra.mxu0 0.0
    %886 = vmatprep.subr.mxu0 0.0
    %887 = vmatpush1.msra.mxu0 0.0
    %888 = vmatprep.subr.mxu0 0.0
    %889 = vmatpush1.msra.mxu0 0.0
    %890 = vmatprep.subr.mxu0 0.0
    %891 = vmatpush1.msra.mxu0 0.0
    %892 = vmatprep.subr.mxu0 0.0
    %893 = vmatpush1.msra.mxu0 0.0
    %894 = vmatprep.subr.mxu0 0.0
    %895 = vmatpush1.msra.mxu0 0.0
    %896 = vmatprep.subr.mxu0 0.0
    %897 = vmatpush1.msra.mxu0 0.0
    %898 = vmatprep.subr.mxu0 0.0
    %899 = vmatpush1.msra.mxu0 0.0
    %900 = vmatprep.subr.mxu0 0.0
    %901 = vmatpush1.msra.mxu0 0.0
    %902 = vmatprep.subr.mxu0 0.0
    %903 = vmatpush1.msra.mxu0 0.0
    %904 = vmatprep.subr.mxu0 0.0
    %905 = vmatpush1.msra.mxu0 0.0
    %906 = vmatprep.subr.mxu0 0.0
    %907 = vmatpush1.msra.mxu0 0.0
    %908 = vmatprep.subr.mxu0 0.0
    %909 = vmatpush1.msra.mxu0 0.0
    %910 = vmatprep.subr.mxu0 0.0
    %911 = vmatpush1.msra.mxu0 0.0
    %912 = vmatprep.subr.mxu0 0.0
    %913 = vmatpush1.msra.mxu0 0.0
    %914 = vmatprep.subr.mxu0 0.0
    %915 = vmatpush1.msra.mxu0 0.0
    %916 = vmatprep.subr.mxu0 0.0
    %917 = vmatpush1.msra.mxu0 0.0
    %918 = vmatprep.subr.mxu0 0.0
    %919 = vmatpush1.msra.mxu0 0.0
    %920 = vmatprep.mubr.f32.mxu0 0.0
    %921 = vmatmul.mubr.f32.gmra.mrb[0].mxu0 %v845
    %v922 = vpop.f32.mrb[0].mxu0
    %v923 = vadd.f32 0.0, %v922
    %v924 = vpop.f32.mrb[0].mxu0
    %925 = vmatprep.mubr.f32.mxu0 0.0
    %926 = vmatmul.mubr.f32.gmra.mrb[0].mxu0 %v848
    %v927 = vpop.f32.mrb[0].mxu0
    %v928 = vadd.f32 0.0, %v927
    %v929 = vpop.f32.mrb[0].mxu0
    %930 = vmatprep.mubr.f32.mxu0 0.0
    %931 = vmatmul.mubr.f32.gmra.mrb[0].mxu0 %v851
    %v932 = vpop.f32.mrb[0].mxu0
    %v933 = vadd.f32 0.0, %v932
    %v934 = vpop.f32.mrb[0].mxu0
    %935 = vmatprep.mubr.f32.mxu0 0.0
    %936 = vmatmul.mubr.f32.gmra.mrb[0].mxu0 %v854
    %v937 = vpop.f32.mrb[0].mxu0
    %v938 = vadd.f32 0.0, %v937
    %v939 = vpop.f32.mrb[0].mxu0
    %940 = vdwg.mxu0
    %v941 = vadd.f32 %v733, %v923
    %v942 = vadd.f32 %v738, %v928
    %v943 = vadd.f32 %v743, %v933
    %v944 = vadd.f32 %v748, %v938
    %s945 = scalar_lea.vmem [#allocation4], 96
    %v946 = vld [vmem:[%s945] sm:$0xff]
    %v947 = vld [vmem:[%s945 + $0x8] sm:$0xff]
    %v948 = vld [vmem:[%s945 + $0x10] sm:$0xff]
    %v949 = vld [vmem:[%s945 + $0x18] sm:$0xff]
    %950 = vmatprep.subr.mxu0 0.0
    %951 = vmatpush1.msra.mxu0 %v311
    %952 = vmatprep.subr.mxu0 0.0
    %953 = vmatpush1.msra.mxu0 %v314
    %954 = vmatprep.subr.mxu0 0.0
    %955 = vmatpush1.msra.mxu0 %v319
    %956 = vmatprep.subr.mxu0 0.0
    %957 = vmatpush1.msra.mxu0 %v322
    %958 = vmatprep.subr.mxu0 0.0
    %959 = vmatpush1.msra.mxu0 %v327
    %960 = vmatprep.subr.mxu0 0.0
    %961 = vmatpush1.msra.mxu0 %v330
    %962 = vmatprep.subr.mxu0 0.0
    %963 = vmatpush1.msra.mxu0 %v335
    %964 = vmatprep.subr.mxu0 0.0
    %965 = vmatpush1.msra.mxu0 %v338
    %966 = vmatprep.subr.mxu0 0.0
    %967 = vmatpush1.msra.mxu0 %v343
    %968 = vmatprep.subr.mxu0 0.0
    %969 = vmatpush1.msra.mxu0 %v346
    %970 = vmatprep.subr.mxu0 0.0
    %971 = vmatpush1.msra.mxu0 %v351
    %972 = vmatprep.subr.mxu0 0.0
    %973 = vmatpush1.msra.mxu0 %v354
    %974 = vmatprep.subr.mxu0 0.0
    %975 = vmatpush1.msra.mxu0 %v359
    %976 = vmatprep.subr.mxu0 0.0
    %977 = vmatpush1.msra.mxu0 %v362
    %978 = vmatprep.subr.mxu0 0.0
    %979 = vmatpush1.msra.mxu0 %v367
    %980 = vmatprep.subr.mxu0 0.0
    %981 = vmatpush1.msra.mxu0 %v370
    %982 = vmatprep.subr.mxu0 0.0
    %983 = vmatpush1.msra.mxu0 0.0
    %984 = vmatprep.subr.mxu0 0.0
    %985 = vmatpush1.msra.mxu0 0.0
    %986 = vmatprep.subr.mxu0 0.0
    %987 = vmatpush1.msra.mxu0 0.0
    %988 = vmatprep.subr.mxu0 0.0
    %989 = vmatpush1.msra.mxu0 0.0
    %990 = vmatprep.subr.mxu0 0.0
    %991 = vmatpush1.msra.mxu0 0.0
    %992 = vmatprep.subr.mxu0 0.0
    %993 = vmatpush1.msra.mxu0 0.0
    %994 = vmatprep.subr.mxu0 0.0
    %995 = vmatpush1.msra.mxu0 0.0
    %996 = vmatprep.subr.mxu0 0.0
    %997 = vmatpush1.msra.mxu0 0.0
    %998 = vmatprep.subr.mxu0 0.0
    %999 = vmatpush1.msra.mxu0 0.0
    %1000 = vmatprep.subr.mxu0 0.0
    %1001 = vmatpush1.msra.mxu0 0.0
    %1002 = vmatprep.subr.mxu0 0.0
    %1003 = vmatpush1.msra.mxu0 0.0
    %1004 = vmatprep.subr.mxu0 0.0
    %1005 = vmatpush1.msra.mxu0 0.0
    %1006 = vmatprep.subr.mxu0 0.0
    %1007 = vmatpush1.msra.mxu0 0.0
    %1008 = vmatprep.subr.mxu0 0.0
    %1009 = vmatpush1.msra.mxu0 0.0
    %1010 = vmatprep.subr.mxu0 0.0
    %1011 = vmatpush1.msra.mxu0 0.0
    %1012 = vmatprep.subr.mxu0 0.0
    %1013 = vmatpush1.msra.mxu0 0.0
    %1014 = vmatprep.mubr.f32.mxu0 0.0
    %1015 = vmatmul.mubr.f32.gmra.mrb[0].mxu0 %v946
    %v1016 = vpop.f32.mrb[0].mxu0
    %v1017 = vadd.f32 0.0, %v1016
    %v1018 = vpop.f32.mrb[0].mxu0
    %1019 = vmatprep.mubr.f32.mxu0 0.0
    %1020 = vmatmul.mubr.f32.gmra.mrb[0].mxu0 %v947
    %v1021 = vpop.f32.mrb[0].mxu0
    %v1022 = vadd.f32 0.0, %v1021
    %v1023 = vpop.f32.mrb[0].mxu0
    %1024 = vmatprep.mubr.f32.mxu0 0.0
    %1025 = vmatmul.mubr.f32.gmra.mrb[0].mxu0 %v948
    %v1026 = vpop.f32.mrb[0].mxu0
    %v1027 = vadd.f32 0.0, %v1026
    %v1028 = vpop.f32.mrb[0].mxu0
    %1029 = vmatprep.mubr.f32.mxu0 0.0
    %1030 = vmatmul.mubr.f32.gmra.mrb[0].mxu0 %v949
    %v1031 = vpop.f32.mrb[0].mxu0
    %v1032 = vadd.f32 0.0, %v1031
    %v1033 = vpop.f32.mrb[0].mxu0
    %1034 = vdwg.mxu0
    %s1035 = scalar_lea.vmem [#allocation6], 48
    %v1036 = vld [vmem:[%s1035] sm:$0xff]
    %v1037 = vld [vmem:[%s1035 + $0x8] sm:$0xff]
    %v1039 = vsel %vm251, %v1017, 0
    %v1042 = vsel %vm251, %v1022, 0
    %v1045 = vsel %vm251, %v1027, 0
    %v1048 = vsel %vm251, %v1032, 0
    %1050 = vmatprep.subr.mxu0 0.0
    %1051 = vmatpush1.msra.mxu0 %v1036
    %1052 = vmatprep.subr.mxu0 0.0
    %1053 = vmatpush1.msra.mxu0 %v1037
    %1054 = vmatprep.subr.mxu0 0.0
    %1055 = vmatpush1.msra.mxu0 0.0
    %1056 = vmatprep.subr.mxu0 0.0
    %1057 = vmatpush1.msra.mxu0 0.0
    %1058 = vmatprep.subr.mxu0 0.0
    %1059 = vmatpush1.msra.mxu0 0.0
    %1060 = vmatprep.subr.mxu0 0.0
    %1061 = vmatpush1.msra.mxu0 0.0
    %1062 = vmatprep.subr.mxu0 0.0
    %1063 = vmatpush1.msra.mxu0 0.0
    %1064 = vmatprep.subr.mxu0 0.0
    %1065 = vmatpush1.msra.mxu0 0.0
    %1066 = vmatprep.subr.mxu0 0.0
    %1067 = vmatpush1.msra.mxu0 0.0
    %1068 = vmatprep.subr.mxu0 0.0
    %1069 = vmatpush1.msra.mxu0 0.0
    %1070 = vmatprep.subr.mxu0 0.0
    %1071 = vmatpush1.msra.mxu0 0.0
    %1072 = vmatprep.subr.mxu0 0.0
    %1073 = vmatpush1.msra.mxu0 0.0
    %1074 = vmatprep.subr.mxu0 0.0
    %1075 = vmatpush1.msra.mxu0 0.0
    %1076 = vmatprep.subr.mxu0 0.0
    %1077 = vmatpush1.msra.mxu0 0.0
    %1078 = vmatprep.subr.mxu0 0.0
    %1079 = vmatpush1.msra.mxu0 0.0
    %1080 = vmatprep.subr.mxu0 0.0
    %1081 = vmatpush1.msra.mxu0 0.0
    %1082 = vmatprep.subr.mxu0 0.0
    %1083 = vmatpush1.msra.mxu0 0.0
    %1084 = vmatprep.subr.mxu0 0.0
    %1085 = vmatpush1.msra.mxu0 0.0
    %1086 = vmatprep.subr.mxu0 0.0
    %1087 = vmatpush1.msra.mxu0 0.0
    %1088 = vmatprep.subr.mxu0 0.0
    %1089 = vmatpush1.msra.mxu0 0.0
    %1090 = vmatprep.subr.mxu0 0.0
    %1091 = vmatpush1.msra.mxu0 0.0
    %1092 = vmatprep.subr.mxu0 0.0
    %1093 = vmatpush1.msra.mxu0 0.0
    %1094 = vmatprep.subr.mxu0 0.0
    %1095 = vmatpush1.msra.mxu0 0.0
    %1096 = vmatprep.subr.mxu0 0.0
    %1097 = vmatpush1.msra.mxu0 0.0
    %1098 = vmatprep.subr.mxu0 0.0
    %1099 = vmatpush1.msra.mxu0 0.0
    %1100 = vmatprep.subr.mxu0 0.0
    %1101 = vmatpush1.msra.mxu0 0.0
    %1102 = vmatprep.subr.mxu0 0.0
    %1103 = vmatpush1.msra.mxu0 0.0
    %1104 = vmatprep.subr.mxu0 0.0
    %1105 = vmatpush1.msra.mxu0 0.0
    %1106 = vmatprep.subr.mxu0 0.0
    %1107 = vmatpush1.msra.mxu0 0.0
    %1108 = vmatprep.subr.mxu0 0.0
    %1109 = vmatpush1.msra.mxu0 0.0
    %1110 = vmatprep.subr.mxu0 0.0
    %1111 = vmatpush1.msra.mxu0 0.0
    %1112 = vmatprep.subr.mxu0 0.0
    %1113 = vmatpush1.msra.mxu0 0.0
    %1114 = vmatprep.mubr.f32.mxu0 0.0
    %1115 = vmatmul.mubr.f32.gmra.mrb[0].mxu0 %v1039
    %v1116 = vpop.f32.mrb[0].mxu0
    %v1117 = vadd.f32 0.0, %v1116
    %v1118 = vpop.f32.mrb[0].mxu0
    %1119 = vmatprep.mubr.f32.mxu0 0.0
    %1120 = vmatmul.mubr.f32.gmra.mrb[0].mxu0 %v1042
    %v1121 = vpop.f32.mrb[0].mxu0
    %v1122 = vadd.f32 0.0, %v1121
    %v1123 = vpop.f32.mrb[0].mxu0
    %1124 = vmatprep.mubr.f32.mxu0 0.0
    %1125 = vmatmul.mubr.f32.gmra.mrb[0].mxu0 %v1045
    %v1126 = vpop.f32.mrb[0].mxu0
    %v1127 = vadd.f32 0.0, %v1126
    %v1128 = vpop.f32.mrb[0].mxu0
    %1129 = vmatprep.mubr.f32.mxu0 0.0
    %1130 = vmatmul.mubr.f32.gmra.mrb[0].mxu0 %v1048
    %v1131 = vpop.f32.mrb[0].mxu0
    %v1132 = vadd.f32 0.0, %v1131
    %v1133 = vpop.f32.mrb[0].mxu0
    %1134 = vdwg.mxu0
    %v1135 = vadd.f32 %v941, %v1117
    %v1136 = vadd.f32 %v942, %v1122
    %v1137 = vadd.f32 %v943, %v1127
    %v1138 = vadd.f32 %v944, %v1132
    %v1139 = vld [vmem:[#allocation7] sm:$0xff]
    %v1140 = vld [vmem:[#allocation7 + $0x8] sm:$0xff]
    %v1141 = vld [vmem:[#allocation9] sm:$0xf]
    %v1142 = vld [vmem:[#allocation9 + $0x4] sm:$0xf]
    %v1143 = vld [vmem:[#allocation9 + $0x8] sm:$0xf]
    %v1144 = vld [vmem:[#allocation9 + $0xc] sm:$0xf]
    %v1145 = vld [vmem:[#allocation9 + $0x10] sm:$0xf]
    %v1146 = vld [vmem:[#allocation9 + $0x14] sm:$0xf]
    %v1147 = vld [vmem:[#allocation9 + $0x18] sm:$0xf]
    %v1148 = vld [vmem:[#allocation9 + $0x1c] sm:$0xf]
    %v1149 = vpack.c.bf16 %v1136, %v1135
    %v1150 = vpack.c.bf16 %v1138, %v1137
    %v1159 = vunpack.c.l.b16 %v1141
    %v1160 = vunpack.c.l.b16 %v1142
    %v1161 = vunpack.c.l.b16 %v1143
    %v1162 = vunpack.c.l.b16 %v1144
    %v1163 = vunpack.c.l.b16 %v1145
    %v1164 = vunpack.c.l.b16 %v1146
    %v1165 = vunpack.c.l.b16 %v1147
    %v1166 = vunpack.c.l.b16 %v1148
    %v1167 = vpack.c.b16 %v1160, %v1159
    %v1168 = vpack.c.b16 %v1162, %v1161
    %v1169 = vpack.c.b16 %v1164, %v1163
    %v1170 = vpack.c.b16 %v1166, %v1165
    %vm1175 = vcmask 523264
    %v1177 = vsel %vm1175, %v1149, 0
    %v1180 = vsel %vm1175, %v1150, 0
    %1182 = vmatprep.subr.bf16.mxu0 0
    %1183 = vmatpush1.bf16.msra.mxu0 %v1167
    %1184 = vmatprep.subr.bf16.mxu0 0
    %1185 = vmatpush1.bf16.msra.mxu0 %v1168
    %1186 = vmatprep.subr.bf16.mxu0 0
    %1187 = vmatpush1.bf16.msra.mxu0 %v1169
    %1188 = vmatprep.subr.bf16.mxu0 0
    %1189 = vmatpush1.bf16.msra.mxu0 %v1170
    %1190 = vmatprep.subr.bf16.mxu0 0
    %1191 = vmatpush1.bf16.msra.mxu0 0
    %1192 = vmatprep.subr.bf16.mxu0 0
    %1193 = vmatpush1.bf16.msra.mxu0 0
    %1194 = vmatprep.subr.bf16.mxu0 0
    %1195 = vmatpush1.bf16.msra.mxu0 0
    %1196 = vmatprep.subr.bf16.mxu0 0
    %1197 = vmatpush1.bf16.msra.mxu0 0
    %1198 = vmatprep.subr.bf16.mxu0 0
    %1199 = vmatpush1.bf16.msra.mxu0 0
    %1200 = vmatprep.subr.bf16.mxu0 0
    %1201 = vmatpush1.bf16.msra.mxu0 0
    %1202 = vmatprep.subr.bf16.mxu0 0
    %1203 = vmatpush1.bf16.msra.mxu0 0
    %1204 = vmatprep.subr.bf16.mxu0 0
    %1205 = vmatpush1.bf16.msra.mxu0 0
    %1206 = vmatprep.subr.bf16.mxu0 0
    %1207 = vmatpush1.bf16.msra.mxu0 0
    %1208 = vmatprep.subr.bf16.mxu0 0
    %1209 = vmatpush1.bf16.msra.mxu0 0
    %1210 = vmatprep.subr.bf16.mxu0 0
    %1211 = vmatpush1.bf16.msra.mxu0 0
    %1212 = vmatprep.subr.bf16.mxu0 0
    %1213 = vmatpush1.bf16.msra.mxu0 0
    %1214 = vmatprep.mubr.bf16.mxu0 0
    %1215 = vmatmul.mubr.bf16.gmra.mrb[0].mxu0 %v1177
    %v1216 = vpop.f32.mrb[0].mxu0
    %v1217 = vadd.f32 0.0, %v1216
    %v1218 = vpop.f32.mrb[0].mxu0
    %v1219 = vpop.f32.mrb[0].mxu0
    %v1220 = vadd.f32 0.0, %v1219
    %v1221 = vpop.f32.mrb[0].mxu0
    %1222 = vmatprep.mubr.bf16.mxu0 0
    %1223 = vmatmul.mubr.bf16.gmra.mrb[0].mxu0 %v1180
    %v1224 = vpop.f32.mrb[0].mxu0
    %v1225 = vadd.f32 0.0, %v1224
    %v1226 = vpop.f32.mrb[0].mxu0
    %v1227 = vpop.f32.mrb[0].mxu0
    %v1228 = vadd.f32 0.0, %v1227
    %v1229 = vpop.f32.mrb[0].mxu0
    %1230 = vdwg.mxu0
    %s1231 = scalar_lea.vmem [#allocation7], 16
    %v1232 = vld [vmem:[%s1231] sm:$0xff]
    %v1233 = vld [vmem:[%s1231 + $0x8] sm:$0xff]
    %s1234 = scalar_lea.vmem [#allocation9], 32
    %v1235 = vld [vmem:[%s1234] sm:$0xf]
    %v1236 = vld [vmem:[%s1234 + $0x4] sm:$0xf]
    %v1237 = vld [vmem:[%s1234 + $0x8] sm:$0xf]
    %v1238 = vld [vmem:[%s1234 + $0xc] sm:$0xf]
    %v1239 = vld [vmem:[%s1234 + $0x10] sm:$0xf]
    %v1240 = vld [vmem:[%s1234 + $0x14] sm:$0xf]
    %v1241 = vld [vmem:[%s1234 + $0x18] sm:$0xf]
    %v1242 = vld [vmem:[%s1234 + $0x1c] sm:$0xf]
    %v1251 = vunpack.c.l.b16 %v1235
    %v1252 = vunpack.c.l.b16 %v1236
    %v1253 = vunpack.c.l.b16 %v1237
    %v1254 = vunpack.c.l.b16 %v1238
    %v1255 = vunpack.c.l.b16 %v1239
    %v1256 = vunpack.c.l.b16 %v1240
    %v1257 = vunpack.c.l.b16 %v1241
    %v1258 = vunpack.c.l.b16 %v1242
    %v1259 = vpack.c.b16 %v1252, %v1251
    %v1260 = vpack.c.b16 %v1254, %v1253
    %v1261 = vpack.c.b16 %v1256, %v1255
    %v1262 = vpack.c.b16 %v1258, %v1257
    %1267 = vmatprep.subr.bf16.mxu0 0
    %1268 = vmatpush1.bf16.msra.mxu0 %v1259
    %1269 = vmatprep.subr.bf16.mxu0 0
    %1270 = vmatpush1.bf16.msra.mxu0 %v1260
    %1271 = vmatprep.subr.bf16.mxu0 0
    %1272 = vmatpush1.bf16.msra.mxu0 %v1261
    %1273 = vmatprep.subr.bf16.mxu0 0
    %1274 = vmatpush1.bf16.msra.mxu0 %v1262
    %1275 = vmatprep.subr.bf16.mxu0 0
    %1276 = vmatpush1.bf16.msra.mxu0 0
    %1277 = vmatprep.subr.bf16.mxu0 0
    %1278 = vmatpush1.bf16.msra.mxu0 0
    %1279 = vmatprep.subr.bf16.mxu0 0
    %1280 = vmatpush1.bf16.msra.mxu0 0
    %1281 = vmatprep.subr.bf16.mxu0 0
    %1282 = vmatpush1.bf16.msra.mxu0 0
    %1283 = vmatprep.subr.bf16.mxu0 0
    %1284 = vmatpush1.bf16.msra.mxu0 0
    %1285 = vmatprep.subr.bf16.mxu0 0
    %1286 = vmatpush1.bf16.msra.mxu0 0
    %1287 = vmatprep.subr.bf16.mxu0 0
    %1288 = vmatpush1.bf16.msra.mxu0 0
    %1289 = vmatprep.subr.bf16.mxu0 0
    %1290 = vmatpush1.bf16.msra.mxu0 0
    %1291 = vmatprep.subr.bf16.mxu0 0
    %1292 = vmatpush1.bf16.msra.mxu0 0
    %1293 = vmatprep.subr.bf16.mxu0 0
    %1294 = vmatpush1.bf16.msra.mxu0 0
    %1295 = vmatprep.subr.bf16.mxu0 0
    %1296 = vmatpush1.bf16.msra.mxu0 0
    %1297 = vmatprep.subr.bf16.mxu0 0
    %1298 = vmatpush1.bf16.msra.mxu0 0
    %1299 = vmatprep.mubr.bf16.mxu0 0
    %1300 = vmatmul.mubr.bf16.gmra.mrb[0].mxu0 %v1177
    %v1301 = vpop.f32.mrb[0].mxu0
    %v1302 = vadd.f32 0.0, %v1301
    %v1303 = vpop.f32.mrb[0].mxu0
    %v1304 = vpop.f32.mrb[0].mxu0
    %v1305 = vadd.f32 0.0, %v1304
    %v1306 = vpop.f32.mrb[0].mxu0
    %1307 = vmatprep.mubr.bf16.mxu0 0
    %1308 = vmatmul.mubr.bf16.gmra.mrb[0].mxu0 %v1180
    %v1309 = vpop.f32.mrb[0].mxu0
    %v1310 = vadd.f32 0.0, %v1309
    %v1311 = vpop.f32.mrb[0].mxu0
    %v1312 = vpop.f32.mrb[0].mxu0
    %v1313 = vadd.f32 0.0, %v1312
    %v1314 = vpop.f32.mrb[0].mxu0
    %1315 = vdwg.mxu0
    %vm1316 = vcmask 261120
    %v1318 = vsel %vm1316, %v1232, 0
    %v1321 = vsel %vm1316, %v1233, 0
    %1323 = vmatprep.subr.mxu0 0.0
    %1324 = vmatpush1.msra.mxu0 %v1302
    %1325 = vmatprep.subr.mxu0 0.0
    %1326 = vmatpush1.msra.mxu0 %v1305
    %1327 = vmatprep.subr.mxu0 0.0
    %1328 = vmatpush1.msra.mxu0 %v1310
    %1329 = vmatprep.subr.mxu0 0.0
    %1330 = vmatpush1.msra.mxu0 %v1313
    %1331 = vmatprep.subr.mxu0 0.0
    %1332 = vmatpush1.msra.mxu0 0.0
    %1333 = vmatprep.subr.mxu0 0.0
    %1334 = vmatpush1.msra.mxu0 0.0
    %1335 = vmatprep.subr.mxu0 0.0
    %1336 = vmatpush1.msra.mxu0 0.0
    %1337 = vmatprep.subr.mxu0 0.0
    %1338 = vmatpush1.msra.mxu0 0.0
    %1339 = vmatprep.subr.mxu0 0.0
    %1340 = vmatpush1.msra.mxu0 0.0
    %1341 = vmatprep.subr.mxu0 0.0
    %1342 = vmatpush1.msra.mxu0 0.0
    %1343 = vmatprep.subr.mxu0 0.0
    %1344 = vmatpush1.msra.mxu0 0.0
    %1345 = vmatprep.subr.mxu0 0.0
    %1346 = vmatpush1.msra.mxu0 0.0
    %1347 = vmatprep.subr.mxu0 0.0
    %1348 = vmatpush1.msra.mxu0 0.0
    %1349 = vmatprep.subr.mxu0 0.0
    %1350 = vmatpush1.msra.mxu0 0.0
    %1351 = vmatprep.subr.mxu0 0.0
    %1352 = vmatpush1.msra.mxu0 0.0
    %1353 = vmatprep.subr.mxu0 0.0
    %1354 = vmatpush1.msra.mxu0 0.0
    %1355 = vmatprep.subr.mxu0 0.0
    %1356 = vmatpush1.msra.mxu0 0.0
    %1357 = vmatprep.subr.mxu0 0.0
    %1358 = vmatpush1.msra.mxu0 0.0
    %1359 = vmatprep.subr.mxu0 0.0
    %1360 = vmatpush1.msra.mxu0 0.0
    %1361 = vmatprep.subr.mxu0 0.0
    %1362 = vmatpush1.msra.mxu0 0.0
    %1363 = vmatprep.subr.mxu0 0.0
    %1364 = vmatpush1.msra.mxu0 0.0
    %1365 = vmatprep.subr.mxu0 0.0
    %1366 = vmatpush1.msra.mxu0 0.0
    %1367 = vmatprep.subr.mxu0 0.0
    %1368 = vmatpush1.msra.mxu0 0.0
    %1369 = vmatprep.subr.mxu0 0.0
    %1370 = vmatpush1.msra.mxu0 0.0
    %1371 = vmatprep.subr.mxu0 0.0
    %1372 = vmatpush1.msra.mxu0 0.0
    %1373 = vmatprep.subr.mxu0 0.0
    %1374 = vmatpush1.msra.mxu0 0.0
    %1375 = vmatprep.subr.mxu0 0.0
    %1376 = vmatpush1.msra.mxu0 0.0
    %1377 = vmatprep.subr.mxu0 0.0
    %1378 = vmatpush1.msra.mxu0 0.0
    %1379 = vmatprep.subr.mxu0 0.0
    %1380 = vmatpush1.msra.mxu0 0.0
    %1381 = vmatprep.subr.mxu0 0.0
    %1382 = vmatpush1.msra.mxu0 0.0
    %1383 = vmatprep.subr.mxu0 0.0
    %1384 = vmatpush1.msra.mxu0 0.0
    %1385 = vmatprep.subr.mxu0 0.0
    %1386 = vmatpush1.msra.mxu0 0.0
    %1387 = vmatprep.mubr.f32.mxu0 0.0
    %1388 = vmatmul.mubr.f32.gmra.mrb[0].mxu0 %v1318
    %v1389 = vpop.f32.mrb[0].mxu0
    %v1390 = vadd.f32 0.0, %v1389
    %v1391 = vpop.f32.mrb[0].mxu0
    %1392 = vmatprep.mubr.f32.mxu0 0.0
    %1393 = vmatmul.mubr.f32.gmra.mrb[0].mxu0 %v1321
    %v1394 = vpop.f32.mrb[0].mxu0
    %v1395 = vadd.f32 0.0, %v1394
    %v1396 = vpop.f32.mrb[0].mxu0
    %1397 = vdwg.mxu0
    %v1399 = vsel %vm1316, %v1139, 0
    %v1402 = vsel %vm1316, %v1140, 0
    %1404 = vmatprep.subr.mxu0 0.0
    %1405 = vmatpush1.msra.mxu0 %v1217
    %1406 = vmatprep.subr.mxu0 0.0
    %1407 = vmatpush1.msra.mxu0 %v1220
    %1408 = vmatprep.subr.mxu0 0.0
    %1409 = vmatpush1.msra.mxu0 %v1225
    %1410 = vmatprep.subr.mxu0 0.0
    %1411 = vmatpush1.msra.mxu0 %v1228
    %1412 = vmatprep.subr.mxu0 0.0
    %1413 = vmatpush1.msra.mxu0 0.0
    %1414 = vmatprep.subr.mxu0 0.0
    %1415 = vmatpush1.msra.mxu0 0.0
    %1416 = vmatprep.subr.mxu0 0.0
    %1417 = vmatpush1.msra.mxu0 0.0
    %1418 = vmatprep.subr.mxu0 0.0
    %1419 = vmatpush1.msra.mxu0 0.0
    %1420 = vmatprep.subr.mxu0 0.0
    %1421 = vmatpush1.msra.mxu0 0.0
    %1422 = vmatprep.subr.mxu0 0.0
    %1423 = vmatpush1.msra.mxu0 0.0
    %1424 = vmatprep.subr.mxu0 0.0
    %1425 = vmatpush1.msra.mxu0 0.0
    %1426 = vmatprep.subr.mxu0 0.0
    %1427 = vmatpush1.msra.mxu0 0.0
    %1428 = vmatprep.subr.mxu0 0.0
    %1429 = vmatpush1.msra.mxu0 0.0
    %1430 = vmatprep.subr.mxu0 0.0
    %1431 = vmatpush1.msra.mxu0 0.0
    %1432 = vmatprep.subr.mxu0 0.0
    %1433 = vmatpush1.msra.mxu0 0.0
    %1434 = vmatprep.subr.mxu0 0.0
    %1435 = vmatpush1.msra.mxu0 0.0
    %1436 = vmatprep.subr.mxu0 0.0
    %1437 = vmatpush1.msra.mxu0 0.0
    %1438 = vmatprep.subr.mxu0 0.0
    %1439 = vmatpush1.msra.mxu0 0.0
    %1440 = vmatprep.subr.mxu0 0.0
    %1441 = vmatpush1.msra.mxu0 0.0
    %1442 = vmatprep.subr.mxu0 0.0
    %1443 = vmatpush1.msra.mxu0 0.0
    %1444 = vmatprep.subr.mxu0 0.0
    %1445 = vmatpush1.msra.mxu0 0.0
    %1446 = vmatprep.subr.mxu0 0.0
    %1447 = vmatpush1.msra.mxu0 0.0
    %1448 = vmatprep.subr.mxu0 0.0
    %1449 = vmatpush1.msra.mxu0 0.0
    %1450 = vmatprep.subr.mxu0 0.0
    %1451 = vmatpush1.msra.mxu0 0.0
    %1452 = vmatprep.subr.mxu0 0.0
    %1453 = vmatpush1.msra.mxu0 0.0
    %1454 = vmatprep.subr.mxu0 0.0
    %1455 = vmatpush1.msra.mxu0 0.0
    %1456 = vmatprep.subr.mxu0 0.0
    %1457 = vmatpush1.msra.mxu0 0.0
    %1458 = vmatprep.subr.mxu0 0.0
    %1459 = vmatpush1.msra.mxu0 0.0
    %1460 = vmatprep.subr.mxu0 0.0
    %1461 = vmatpush1.msra.mxu0 0.0
    %1462 = vmatprep.subr.mxu0 0.0
    %1463 = vmatpush1.msra.mxu0 0.0
    %1464 = vmatprep.subr.mxu0 0.0
    %1465 = vmatpush1.msra.mxu0 0.0
    %1466 = vmatprep.subr.mxu0 0.0
    %1467 = vmatpush1.msra.mxu0 0.0
    %1468 = vmatprep.mubr.f32.mxu0 0.0
    %1469 = vmatmul.mubr.f32.gmra.mrb[0].mxu0 %v1399
    %v1470 = vpop.f32.mrb[0].mxu0
    %v1471 = vadd.f32 %v1390, %v1470
    %v1472 = vpop.f32.mrb[0].mxu0
    %1473 = vmatprep.mubr.f32.mxu0 0.0
    %1474 = vmatmul.mubr.f32.gmra.mrb[0].mxu0 %v1402
    %v1475 = vpop.f32.mrb[0].mxu0
    %v1476 = vadd.f32 %v1395, %v1475
    %v1477 = vpop.f32.mrb[0].mxu0
    %1478 = vdwg.mxu0
    %s1479 = scalar_lea.vmem [#allocation7], 32
    %v1480 = vld [vmem:[%s1479] sm:$0xff]
    %v1481 = vld [vmem:[%s1479 + $0x8] sm:$0xff]
    %s1482 = scalar_lea.vmem [#allocation9], 64
    %v1483 = vld [vmem:[%s1482] sm:$0xf]
    %v1484 = vld [vmem:[%s1482 + $0x4] sm:$0xf]
    %v1485 = vld [vmem:[%s1482 + $0x8] sm:$0xf]
    %v1486 = vld [vmem:[%s1482 + $0xc] sm:$0xf]
    %v1487 = vld [vmem:[%s1482 + $0x10] sm:$0xf]
    %v1488 = vld [vmem:[%s1482 + $0x14] sm:$0xf]
    %v1489 = vld [vmem:[%s1482 + $0x18] sm:$0xf]
    %v1490 = vld [vmem:[%s1482 + $0x1c] sm:$0xf]
    %v1499 = vunpack.c.l.b16 %v1483
    %v1500 = vunpack.c.l.b16 %v1484
    %v1501 = vunpack.c.l.b16 %v1485
    %v1502 = vunpack.c.l.b16 %v1486
    %v1503 = vunpack.c.l.b16 %v1487
    %v1504 = vunpack.c.l.b16 %v1488
    %v1505 = vunpack.c.l.b16 %v1489
    %v1506 = vunpack.c.l.b16 %v1490
    %v1507 = vpack.c.b16 %v1500, %v1499
    %v1508 = vpack.c.b16 %v1502, %v1501
    %v1509 = vpack.c.b16 %v1504, %v1503
    %v1510 = vpack.c.b16 %v1506, %v1505
    %1515 = vmatprep.subr.bf16.mxu0 0
    %1516 = vmatpush1.bf16.msra.mxu0 %v1507
    %1517 = vmatprep.subr.bf16.mxu0 0
    %1518 = vmatpush1.bf16.msra.mxu0 %v1508
    %1519 = vmatprep.subr.bf16.mxu0 0
    %1520 = vmatpush1.bf16.msra.mxu0 %v1509
    %1521 = vmatprep.subr.bf16.mxu0 0
    %1522 = vmatpush1.bf16.msra.mxu0 %v1510
    %1523 = vmatprep.subr.bf16.mxu0 0
    %1524 = vmatpush1.bf16.msra.mxu0 0
    %1525 = vmatprep.subr.bf16.mxu0 0
    %1526 = vmatpush1.bf16.msra.mxu0 0
    %1527 = vmatprep.subr.bf16.mxu0 0
    %1528 = vmatpush1.bf16.msra.mxu0 0
    %1529 = vmatprep.subr.bf16.mxu0 0
    %1530 = vmatpush1.bf16.msra.mxu0 0
    %1531 = vmatprep.subr.bf16.mxu0 0
    %1532 = vmatpush1.bf16.msra.mxu0 0
    %1533 = vmatprep.subr.bf16.mxu0 0
    %1534 = vmatpush1.bf16.msra.mxu0 0
    %1535 = vmatprep.subr.bf16.mxu0 0
    %1536 = vmatpush1.bf16.msra.mxu0 0
    %1537 = vmatprep.subr.bf16.mxu0 0
    %1538 = vmatpush1.bf16.msra.mxu0 0
    %1539 = vmatprep.subr.bf16.mxu0 0
    %1540 = vmatpush1.bf16.msra.mxu0 0
    %1541 = vmatprep.subr.bf16.mxu0 0
    %1542 = vmatpush1.bf16.msra.mxu0 0
    %1543 = vmatprep.subr.bf16.mxu0 0
    %1544 = vmatpush1.bf16.msra.mxu0 0
    %1545 = vmatprep.subr.bf16.mxu0 0
    %1546 = vmatpush1.bf16.msra.mxu0 0
    %1547 = vmatprep.mubr.bf16.mxu0 0
    %1548 = vmatmul.mubr.bf16.gmra.mrb[0].mxu0 %v1177
    %v1549 = vpop.f32.mrb[0].mxu0
    %v1550 = vadd.f32 0.0, %v1549
    %v1551 = vpop.f32.mrb[0].mxu0
    %v1552 = vpop.f32.mrb[0].mxu0
    %v1553 = vadd.f32 0.0, %v1552
    %v1554 = vpop.f32.mrb[0].mxu0
    %1555 = vmatprep.mubr.bf16.mxu0 0
    %1556 = vmatmul.mubr.bf16.gmra.mrb[0].mxu0 %v1180
    %v1557 = vpop.f32.mrb[0].mxu0
    %v1558 = vadd.f32 0.0, %v1557
    %v1559 = vpop.f32.mrb[0].mxu0
    %v1560 = vpop.f32.mrb[0].mxu0
    %v1561 = vadd.f32 0.0, %v1560
    %v1562 = vpop.f32.mrb[0].mxu0
    %1563 = vdwg.mxu0
    %v1565 = vsel %vm1316, %v1480, 0
    %v1568 = vsel %vm1316, %v1481, 0
    %1570 = vmatprep.subr.mxu0 0.0
    %1571 = vmatpush1.msra.mxu0 %v1550
    %1572 = vmatprep.subr.mxu0 0.0
    %1573 = vmatpush1.msra.mxu0 %v1553
    %1574 = vmatprep.subr.mxu0 0.0
    %1575 = vmatpush1.msra.mxu0 %v1558
    %1576 = vmatprep.subr.mxu0 0.0
    %1577 = vmatpush1.msra.mxu0 %v1561
    %1578 = vmatprep.subr.mxu0 0.0
    %1579 = vmatpush1.msra.mxu0 0.0
    %1580 = vmatprep.subr.mxu0 0.0
    %1581 = vmatpush1.msra.mxu0 0.0
    %1582 = vmatprep.subr.mxu0 0.0
    %1583 = vmatpush1.msra.mxu0 0.0
    %1584 = vmatprep.subr.mxu0 0.0
    %1585 = vmatpush1.msra.mxu0 0.0
    %1586 = vmatprep.subr.mxu0 0.0
    %1587 = vmatpush1.msra.mxu0 0.0
    %1588 = vmatprep.subr.mxu0 0.0
    %1589 = vmatpush1.msra.mxu0 0.0
    %1590 = vmatprep.subr.mxu0 0.0
    %1591 = vmatpush1.msra.mxu0 0.0
    %1592 = vmatprep.subr.mxu0 0.0
    %1593 = vmatpush1.msra.mxu0 0.0
    %1594 = vmatprep.subr.mxu0 0.0
    %1595 = vmatpush1.msra.mxu0 0.0
    %1596 = vmatprep.subr.mxu0 0.0
    %1597 = vmatpush1.msra.mxu0 0.0
    %1598 = vmatprep.subr.mxu0 0.0
    %1599 = vmatpush1.msra.mxu0 0.0
    %1600 = vmatprep.subr.mxu0 0.0
    %1601 = vmatpush1.msra.mxu0 0.0
    %1602 = vmatprep.subr.mxu0 0.0
    %1603 = vmatpush1.msra.mxu0 0.0
    %1604 = vmatprep.subr.mxu0 0.0
    %1605 = vmatpush1.msra.mxu0 0.0
    %1606 = vmatprep.subr.mxu0 0.0
    %1607 = vmatpush1.msra.mxu0 0.0
    %1608 = vmatprep.subr.mxu0 0.0
    %1609 = vmatpush1.msra.mxu0 0.0
    %1610 = vmatprep.subr.mxu0 0.0
    %1611 = vmatpush1.msra.mxu0 0.0
    %1612 = vmatprep.subr.mxu0 0.0
    %1613 = vmatpush1.msra.mxu0 0.0
    %1614 = vmatprep.subr.mxu0 0.0
    %1615 = vmatpush1.msra.mxu0 0.0
    %1616 = vmatprep.subr.mxu0 0.0
    %1617 = vmatpush1.msra.mxu0 0.0
    %1618 = vmatprep.subr.mxu0 0.0
    %1619 = vmatpush1.msra.mxu0 0.0
    %1620 = vmatprep.subr.mxu0 0.0
    %1621 = vmatpush1.msra.mxu0 0.0
    %1622 = vmatprep.subr.mxu0 0.0
    %1623 = vmatpush1.msra.mxu0 0.0
    %1624 = vmatprep.subr.mxu0 0.0
    %1625 = vmatpush1.msra.mxu0 0.0
    %1626 = vmatprep.subr.mxu0 0.0
    %1627 = vmatpush1.msra.mxu0 0.0
    %1628 = vmatprep.subr.mxu0 0.0
    %1629 = vmatpush1.msra.mxu0 0.0
    %1630 = vmatprep.subr.mxu0 0.0
    %1631 = vmatpush1.msra.mxu0 0.0
    %1632 = vmatprep.subr.mxu0 0.0
    %1633 = vmatpush1.msra.mxu0 0.0
    %1634 = vmatprep.mubr.f32.mxu0 0.0
    %1635 = vmatmul.mubr.f32.gmra.mrb[0].mxu0 %v1565
    %v1636 = vpop.f32.mrb[0].mxu0
    %v1637 = vadd.f32 0.0, %v1636
    %v1638 = vpop.f32.mrb[0].mxu0
    %1639 = vmatprep.mubr.f32.mxu0 0.0
    %1640 = vmatmul.mubr.f32.gmra.mrb[0].mxu0 %v1568
    %v1641 = vpop.f32.mrb[0].mxu0
    %v1642 = vadd.f32 0.0, %v1641
    %v1643 = vpop.f32.mrb[0].mxu0
    %1644 = vdwg.mxu0
    %v1645 = vadd.f32 %v1471, %v1637
    %v1646 = vadd.f32 %v1476, %v1642
    %s1647 = scalar_lea.vmem [#allocation7], 48
    %v1648 = vld [vmem:[%s1647] sm:$0xff]
    %v1649 = vld [vmem:[%s1647 + $0x8] sm:$0xff]
    %s1650 = scalar_lea.vmem [#allocation9], 96
    %v1651 = vld [vmem:[%s1650] sm:$0xf]
    %v1652 = vld [vmem:[%s1650 + $0x4] sm:$0xf]
    %v1653 = vld [vmem:[%s1650 + $0x8] sm:$0xf]
    %v1654 = vld [vmem:[%s1650 + $0xc] sm:$0xf]
    %v1655 = vld [vmem:[%s1650 + $0x10] sm:$0xf]
    %v1656 = vld [vmem:[%s1650 + $0x14] sm:$0xf]
    %v1657 = vld [vmem:[%s1650 + $0x18] sm:$0xf]
    %v1658 = vld [vmem:[%s1650 + $0x1c] sm:$0xf]
    %v1667 = vunpack.c.l.b16 %v1651
    %v1668 = vunpack.c.l.b16 %v1652
    %v1669 = vunpack.c.l.b16 %v1653
    %v1670 = vunpack.c.l.b16 %v1654
    %v1671 = vunpack.c.l.b16 %v1655
    %v1672 = vunpack.c.l.b16 %v1656
    %v1673 = vunpack.c.l.b16 %v1657
    %v1674 = vunpack.c.l.b16 %v1658
    %v1675 = vpack.c.b16 %v1668, %v1667
    %v1676 = vpack.c.b16 %v1670, %v1669
    %v1677 = vpack.c.b16 %v1672, %v1671
    %v1678 = vpack.c.b16 %v1674, %v1673
    %1683 = vmatprep.subr.bf16.mxu0 0
    %1684 = vmatpush1.bf16.msra.mxu0 %v1675
    %1685 = vmatprep.subr.bf16.mxu0 0
    %1686 = vmatpush1.bf16.msra.mxu0 %v1676
    %1687 = vmatprep.subr.bf16.mxu0 0
    %1688 = vmatpush1.bf16.msra.mxu0 %v1677
    %1689 = vmatprep.subr.bf16.mxu0 0
    %1690 = vmatpush1.bf16.msra.mxu0 %v1678
    %1691 = vmatprep.subr.bf16.mxu0 0
    %1692 = vmatpush1.bf16.msra.mxu0 0
    %1693 = vmatprep.subr.bf16.mxu0 0
    %1694 = vmatpush1.bf16.msra.mxu0 0
    %1695 = vmatprep.subr.bf16.mxu0 0
    %1696 = vmatpush1.bf16.msra.mxu0 0
    %1697 = vmatprep.subr.bf16.mxu0 0
    %1698 = vmatpush1.bf16.msra.mxu0 0
    %1699 = vmatprep.subr.bf16.mxu0 0
    %1700 = vmatpush1.bf16.msra.mxu0 0
    %1701 = vmatprep.subr.bf16.mxu0 0
    %1702 = vmatpush1.bf16.msra.mxu0 0
    %1703 = vmatprep.subr.bf16.mxu0 0
    %1704 = vmatpush1.bf16.msra.mxu0 0
    %1705 = vmatprep.subr.bf16.mxu0 0
    %1706 = vmatpush1.bf16.msra.mxu0 0
    %1707 = vmatprep.subr.bf16.mxu0 0
    %1708 = vmatpush1.bf16.msra.mxu0 0
    %1709 = vmatprep.subr.bf16.mxu0 0
    %1710 = vmatpush1.bf16.msra.mxu0 0
    %1711 = vmatprep.subr.bf16.mxu0 0
    %1712 = vmatpush1.bf16.msra.mxu0 0
    %1713 = vmatprep.subr.bf16.mxu0 0
    %1714 = vmatpush1.bf16.msra.mxu0 0
    %1715 = vmatprep.mubr.bf16.mxu0 0
    %1716 = vmatmul.mubr.bf16.gmra.mrb[0].mxu0 %v1177
    %v1717 = vpop.f32.mrb[0].mxu0
    %v1718 = vadd.f32 0.0, %v1717
    %v1719 = vpop.f32.mrb[0].mxu0
    %v1720 = vpop.f32.mrb[0].mxu0
    %v1721 = vadd.f32 0.0, %v1720
    %v1722 = vpop.f32.mrb[0].mxu0
    %1723 = vmatprep.mubr.bf16.mxu0 0
    %1724 = vmatmul.mubr.bf16.gmra.mrb[0].mxu0 %v1180
    %v1725 = vpop.f32.mrb[0].mxu0
    %v1726 = vadd.f32 0.0, %v1725
    %v1727 = vpop.f32.mrb[0].mxu0
    %v1728 = vpop.f32.mrb[0].mxu0
    %v1729 = vadd.f32 0.0, %v1728
    %v1730 = vpop.f32.mrb[0].mxu0
    %1731 = vdwg.mxu0
    %v1733 = vsel %vm1316, %v1648, 0
    %v1736 = vsel %vm1316, %v1649, 0
    %1738 = vmatprep.subr.mxu0 0.0
    %1739 = vmatpush1.msra.mxu0 %v1718
    %1740 = vmatprep.subr.mxu0 0.0
    %1741 = vmatpush1.msra.mxu0 %v1721
    %1742 = vmatprep.subr.mxu0 0.0
    %1743 = vmatpush1.msra.mxu0 %v1726
    %1744 = vmatprep.subr.mxu0 0.0
    %1745 = vmatpush1.msra.mxu0 %v1729
    %1746 = vmatprep.subr.mxu0 0.0
    %1747 = vmatpush1.msra.mxu0 0.0
    %1748 = vmatprep.subr.mxu0 0.0
    %1749 = vmatpush1.msra.mxu0 0.0
    %1750 = vmatprep.subr.mxu0 0.0
    %1751 = vmatpush1.msra.mxu0 0.0
    %1752 = vmatprep.subr.mxu0 0.0
    %1753 = vmatpush1.msra.mxu0 0.0
    %1754 = vmatprep.subr.mxu0 0.0
    %1755 = vmatpush1.msra.mxu0 0.0
    %1756 = vmatprep.subr.mxu0 0.0
    %1757 = vmatpush1.msra.mxu0 0.0
    %1758 = vmatprep.subr.mxu0 0.0
    %1759 = vmatpush1.msra.mxu0 0.0
    %1760 = vmatprep.subr.mxu0 0.0
    %1761 = vmatpush1.msra.mxu0 0.0
    %1762 = vmatprep.subr.mxu0 0.0
    %1763 = vmatpush1.msra.mxu0 0.0
    %1764 = vmatprep.subr.mxu0 0.0
    %1765 = vmatpush1.msra.mxu0 0.0
    %1766 = vmatprep.subr.mxu0 0.0
    %1767 = vmatpush1.msra.mxu0 0.0
    %1768 = vmatprep.subr.mxu0 0.0
    %1769 = vmatpush1.msra.mxu0 0.0
    %1770 = vmatprep.subr.mxu0 0.0
    %1771 = vmatpush1.msra.mxu0 0.0
    %1772 = vmatprep.subr.mxu0 0.0
    %1773 = vmatpush1.msra.mxu0 0.0
    %1774 = vmatprep.subr.mxu0 0.0
    %1775 = vmatpush1.msra.mxu0 0.0
    %1776 = vmatprep.subr.mxu0 0.0
    %1777 = vmatpush1.msra.mxu0 0.0
    %1778 = vmatprep.subr.mxu0 0.0
    %1779 = vmatpush1.msra.mxu0 0.0
    %1780 = vmatprep.subr.mxu0 0.0
    %1781 = vmatpush1.msra.mxu0 0.0
    %1782 = vmatprep.subr.mxu0 0.0
    %1783 = vmatpush1.msra.mxu0 0.0
    %1784 = vmatprep.subr.mxu0 0.0
    %1785 = vmatpush1.msra.mxu0 0.0
    %1786 = vmatprep.subr.mxu0 0.0
    %1787 = vmatpush1.msra.mxu0 0.0
    %1788 = vmatprep.subr.mxu0 0.0
    %1789 = vmatpush1.msra.mxu0 0.0
    %1790 = vmatprep.subr.mxu0 0.0
    %1791 = vmatpush1.msra.mxu0 0.0
    %1792 = vmatprep.subr.mxu0 0.0
    %1793 = vmatpush1.msra.mxu0 0.0
    %1794 = vmatprep.subr.mxu0 0.0
    %1795 = vmatpush1.msra.mxu0 0.0
    %1796 = vmatprep.subr.mxu0 0.0
    %1797 = vmatpush1.msra.mxu0 0.0
    %1798 = vmatprep.subr.mxu0 0.0
    %1799 = vmatpush1.msra.mxu0 0.0
    %1800 = vmatprep.subr.mxu0 0.0
    %1801 = vmatpush1.msra.mxu0 0.0
    %1802 = vmatprep.mubr.f32.mxu0 0.0
    %1803 = vmatmul.mubr.f32.gmra.mrb[0].mxu0 %v1733
    %v1804 = vpop.f32.mrb[0].mxu0
    %v1805 = vadd.f32 0.0, %v1804
    %v1806 = vpop.f32.mrb[0].mxu0
    %1807 = vmatprep.mubr.f32.mxu0 0.0
    %1808 = vmatmul.mubr.f32.gmra.mrb[0].mxu0 %v1736
    %v1809 = vpop.f32.mrb[0].mxu0
    %v1810 = vadd.f32 0.0, %v1809
    %v1811 = vpop.f32.mrb[0].mxu0
    %1812 = vdwg.mxu0
    %v1813 = vadd.f32 %v1645, %v1805
    %v1814 = vadd.f32 %v1646, %v1810
    %vm1815 = vcmp.gt.f32.partialorder %v1813, 0.0
    %vm1816 = vcmp.gt.f32.partialorder %v1814, 0.0
    %v1817 = vmul.f32 %v1813, 0.2
    %v1818 = vmul.f32 %v1814, 0.2
    %v1819 = vsel %vm1815, %v1813, %v1817
    %v1820 = vsel %vm1816, %v1814, %v1818
    %v1821 = vld [vmem:[%s6] sm:$0xff]
    %v1822 = vld [vmem:[#allocation10] sm:$0xf]
    %v1823 = vld [vmem:[#allocation10 + $0x4] sm:$0xf]
    %v1824 = vld [vmem:[#allocation10 + $0x8] sm:$0xf]
    %v1825 = vld [vmem:[#allocation10 + $0xc] sm:$0xf]
    %v1826 = vld [vmem:[#allocation10 + $0x10] sm:$0xf]
    %v1827 = vld [vmem:[#allocation10 + $0x14] sm:$0xf]
    %v1828 = vld [vmem:[#allocation10 + $0x18] sm:$0xf]
    %v1829 = vld [vmem:[#allocation10 + $0x1c] sm:$0xf]
    %v1830 = vpack.c.bf16 %v1820, %v1819
    %v1839 = vunpack.c.l.b16 %v1822
    %v1840 = vunpack.c.l.b16 %v1823
    %v1841 = vunpack.c.l.b16 %v1824
    %v1842 = vunpack.c.l.b16 %v1825
    %v1843 = vunpack.c.l.b16 %v1826
    %v1844 = vunpack.c.l.b16 %v1827
    %v1845 = vunpack.c.l.b16 %v1828
    %v1846 = vunpack.c.l.b16 %v1829
    %v1847 = vpack.c.b16 %v1840, %v1839
    %v1848 = vpack.c.b16 %v1842, %v1841
    %v1849 = vpack.c.b16 %v1844, %v1843
    %v1850 = vpack.c.b16 %v1846, %v1845
    %v1856 = vsel %vm1175, %v1830, 0
    %1858 = vmatprep.subr.bf16.mxu0 0
    %1859 = vmatpush1.bf16.msra.mxu0 %v1847
    %1860 = vmatprep.subr.bf16.mxu0 0
    %1861 = vmatpush1.bf16.msra.mxu0 %v1848
    %1862 = vmatprep.subr.bf16.mxu0 0
    %1863 = vmatpush1.bf16.msra.mxu0 %v1849
    %1864 = vmatprep.subr.bf16.mxu0 0
    %1865 = vmatpush1.bf16.msra.mxu0 %v1850
    %1866 = vmatprep.subr.bf16.mxu0 0
    %1867 = vmatpush1.bf16.msra.mxu0 0
    %1868 = vmatprep.subr.bf16.mxu0 0
    %1869 = vmatpush1.bf16.msra.mxu0 0
    %1870 = vmatprep.subr.bf16.mxu0 0
    %1871 = vmatpush1.bf16.msra.mxu0 0
    %1872 = vmatprep.subr.bf16.mxu0 0
    %1873 = vmatpush1.bf16.msra.mxu0 0
    %1874 = vmatprep.subr.bf16.mxu0 0
    %1875 = vmatpush1.bf16.msra.mxu0 0
    %1876 = vmatprep.subr.bf16.mxu0 0
    %1877 = vmatpush1.bf16.msra.mxu0 0
    %1878 = vmatprep.subr.bf16.mxu0 0
    %1879 = vmatpush1.bf16.msra.mxu0 0
    %1880 = vmatprep.subr.bf16.mxu0 0
    %1881 = vmatpush1.bf16.msra.mxu0 0
    %1882 = vmatprep.subr.bf16.mxu0 0
    %1883 = vmatpush1.bf16.msra.mxu0 0
    %1884 = vmatprep.subr.bf16.mxu0 0
    %1885 = vmatpush1.bf16.msra.mxu0 0
    %1886 = vmatprep.subr.bf16.mxu0 0
    %1887 = vmatpush1.bf16.msra.mxu0 0
    %1888 = vmatprep.subr.bf16.mxu0 0
    %1889 = vmatpush1.bf16.msra.mxu0 0
    %1890 = vmatprep.mubr.bf16.mxu0 0
    %1891 = vmatmul.mubr.bf16.gmra.mrb[0].mxu0 %v1856
    %v1892 = vpop.f32.mrb[0].mxu0
    %v1893 = vadd.f32 0.0, %v1892
    %v1894 = vpop.f32.mrb[0].mxu0
    %v1895 = vpop.f32.mrb[0].mxu0
    %v1896 = vadd.f32 0.0, %v1895
    %v1897 = vpop.f32.mrb[0].mxu0
    %1898 = vdwg.mxu0
    %s1899 = scalar_lea.vmem %s6, 8
    %v1900 = vld [vmem:[%s1899] sm:$0xff]
    %s1901 = scalar_lea.vmem [#allocation10], 32
    %v1902 = vld [vmem:[%s1901] sm:$0xf]
    %v1903 = vld [vmem:[%s1901 + $0x4] sm:$0xf]
    %v1904 = vld [vmem:[%s1901 + $0x8] sm:$0xf]
    %v1905 = vld [vmem:[%s1901 + $0xc] sm:$0xf]
    %v1906 = vld [vmem:[%s1901 + $0x10] sm:$0xf]
    %v1907 = vld [vmem:[%s1901 + $0x14] sm:$0xf]
    %v1908 = vld [vmem:[%s1901 + $0x18] sm:$0xf]
    %v1909 = vld [vmem:[%s1901 + $0x1c] sm:$0xf]
    %v1918 = vunpack.c.l.b16 %v1902
    %v1919 = vunpack.c.l.b16 %v1903
    %v1920 = vunpack.c.l.b16 %v1904
    %v1921 = vunpack.c.l.b16 %v1905
    %v1922 = vunpack.c.l.b16 %v1906
    %v1923 = vunpack.c.l.b16 %v1907
    %v1924 = vunpack.c.l.b16 %v1908
    %v1925 = vunpack.c.l.b16 %v1909
    %v1926 = vpack.c.b16 %v1919, %v1918
    %v1927 = vpack.c.b16 %v1921, %v1920
    %v1928 = vpack.c.b16 %v1923, %v1922
    %v1929 = vpack.c.b16 %v1925, %v1924
    %1934 = vmatprep.subr.bf16.mxu0 0
    %1935 = vmatpush1.bf16.msra.mxu0 %v1926
    %1936 = vmatprep.subr.bf16.mxu0 0
    %1937 = vmatpush1.bf16.msra.mxu0 %v1927
    %1938 = vmatprep.subr.bf16.mxu0 0
    %1939 = vmatpush1.bf16.msra.mxu0 %v1928
    %1940 = vmatprep.subr.bf16.mxu0 0
    %1941 = vmatpush1.bf16.msra.mxu0 %v1929
    %1942 = vmatprep.subr.bf16.mxu0 0
    %1943 = vmatpush1.bf16.msra.mxu0 0
    %1944 = vmatprep.subr.bf16.mxu0 0
    %1945 = vmatpush1.bf16.msra.mxu0 0
    %1946 = vmatprep.subr.bf16.mxu0 0
    %1947 = vmatpush1.bf16.msra.mxu0 0
    %1948 = vmatprep.subr.bf16.mxu0 0
    %1949 = vmatpush1.bf16.msra.mxu0 0
    %1950 = vmatprep.subr.bf16.mxu0 0
    %1951 = vmatpush1.bf16.msra.mxu0 0
    %1952 = vmatprep.subr.bf16.mxu0 0
    %1953 = vmatpush1.bf16.msra.mxu0 0
    %1954 = vmatprep.subr.bf16.mxu0 0
    %1955 = vmatpush1.bf16.msra.mxu0 0
    %1956 = vmatprep.subr.bf16.mxu0 0
    %1957 = vmatpush1.bf16.msra.mxu0 0
    %1958 = vmatprep.subr.bf16.mxu0 0
    %1959 = vmatpush1.bf16.msra.mxu0 0
    %1960 = vmatprep.subr.bf16.mxu0 0
    %1961 = vmatpush1.bf16.msra.mxu0 0
    %1962 = vmatprep.subr.bf16.mxu0 0
    %1963 = vmatpush1.bf16.msra.mxu0 0
    %1964 = vmatprep.subr.bf16.mxu0 0
    %1965 = vmatpush1.bf16.msra.mxu0 0
    %1966 = vmatprep.mubr.bf16.mxu0 0
    %1967 = vmatmul.mubr.bf16.gmra.mrb[0].mxu0 %v1856
    %v1968 = vpop.f32.mrb[0].mxu0
    %v1969 = vadd.f32 0.0, %v1968
    %v1970 = vpop.f32.mrb[0].mxu0
    %v1971 = vpop.f32.mrb[0].mxu0
    %v1972 = vadd.f32 0.0, %v1971
    %v1973 = vpop.f32.mrb[0].mxu0
    %1974 = vdwg.mxu0
    %v1976 = vsel %vm251, %v1900, 0
    %1978 = vmatprep.subr.mxu0 0.0
    %1979 = vmatpush1.msra.mxu0 %v1969
    %1980 = vmatprep.subr.mxu0 0.0
    %1981 = vmatpush1.msra.mxu0 %v1972
    %1982 = vmatprep.subr.mxu0 0.0
    %1983 = vmatpush1.msra.mxu0 0.0
    %1984 = vmatprep.subr.mxu0 0.0
    %1985 = vmatpush1.msra.mxu0 0.0
    %1986 = vmatprep.subr.mxu0 0.0
    %1987 = vmatpush1.msra.mxu0 0.0
    %1988 = vmatprep.subr.mxu0 0.0
    %1989 = vmatpush1.msra.mxu0 0.0
    %1990 = vmatprep.subr.mxu0 0.0
    %1991 = vmatpush1.msra.mxu0 0.0
    %1992 = vmatprep.subr.mxu0 0.0
    %1993 = vmatpush1.msra.mxu0 0.0
    %1994 = vmatprep.subr.mxu0 0.0
    %1995 = vmatpush1.msra.mxu0 0.0
    %1996 = vmatprep.subr.mxu0 0.0
    %1997 = vmatpush1.msra.mxu0 0.0
    %1998 = vmatprep.subr.mxu0 0.0
    %1999 = vmatpush1.msra.mxu0 0.0
    %2000 = vmatprep.subr.mxu0 0.0
    %2001 = vmatpush1.msra.mxu0 0.0
    %2002 = vmatprep.subr.mxu0 0.0
    %2003 = vmatpush1.msra.mxu0 0.0
    %2004 = vmatprep.subr.mxu0 0.0
    %2005 = vmatpush1.msra.mxu0 0.0
    %2006 = vmatprep.subr.mxu0 0.0
    %2007 = vmatpush1.msra.mxu0 0.0
    %2008 = vmatprep.subr.mxu0 0.0
    %2009 = vmatpush1.msra.mxu0 0.0
    %2010 = vmatprep.subr.mxu0 0.0
    %2011 = vmatpush1.msra.mxu0 0.0
    %2012 = vmatprep.subr.mxu0 0.0
    %2013 = vmatpush1.msra.mxu0 0.0
    %2014 = vmatprep.subr.mxu0 0.0
    %2015 = vmatpush1.msra.mxu0 0.0
    %2016 = vmatprep.subr.mxu0 0.0
    %2017 = vmatpush1.msra.mxu0 0.0
    %2018 = vmatprep.subr.mxu0 0.0
    %2019 = vmatpush1.msra.mxu0 0.0
    %2020 = vmatprep.subr.mxu0 0.0
    %2021 = vmatpush1.msra.mxu0 0.0
    %2022 = vmatprep.subr.mxu0 0.0
    %2023 = vmatpush1.msra.mxu0 0.0
    %2024 = vmatprep.subr.mxu0 0.0
    %2025 = vmatpush1.msra.mxu0 0.0
    %2026 = vmatprep.subr.mxu0 0.0
    %2027 = vmatpush1.msra.mxu0 0.0
    %2028 = vmatprep.subr.mxu0 0.0
    %2029 = vmatpush1.msra.mxu0 0.0
    %2030 = vmatprep.subr.mxu0 0.0
    %2031 = vmatpush1.msra.mxu0 0.0
    %2032 = vmatprep.subr.mxu0 0.0
    %2033 = vmatpush1.msra.mxu0 0.0
    %2034 = vmatprep.subr.mxu0 0.0
    %2035 = vmatpush1.msra.mxu0 0.0
    %2036 = vmatprep.subr.mxu0 0.0
    %2037 = vmatpush1.msra.mxu0 0.0
    %2038 = vmatprep.subr.mxu0 0.0
    %2039 = vmatpush1.msra.mxu0 0.0
    %2040 = vmatprep.subr.mxu0 0.0
    %2041 = vmatpush1.msra.mxu0 0.0
    %2042 = vmatprep.mubr.f32.mxu0 0.0
    %2043 = vmatmul.mubr.f32.gmra.mrb[0].mxu0 %v1976
    %v2044 = vpop.f32.mrb[0].mxu0
    %v2045 = vadd.f32 0.0, %v2044
    %v2046 = vpop.f32.mrb[0].mxu0
    %2047 = vdwg.mxu0
    %v2049 = vsel %vm251, %v1821, 0
    %2051 = vmatprep.subr.mxu0 0.0
    %2052 = vmatpush1.msra.mxu0 %v1893
    %2053 = vmatprep.subr.mxu0 0.0
    %2054 = vmatpush1.msra.mxu0 %v1896
    %2055 = vmatprep.subr.mxu0 0.0
    %2056 = vmatpush1.msra.mxu0 0.0
    %2057 = vmatprep.subr.mxu0 0.0
    %2058 = vmatpush1.msra.mxu0 0.0
    %2059 = vmatprep.subr.mxu0 0.0
    %2060 = vmatpush1.msra.mxu0 0.0
    %2061 = vmatprep.subr.mxu0 0.0
    %2062 = vmatpush1.msra.mxu0 0.0
    %2063 = vmatprep.subr.mxu0 0.0
    %2064 = vmatpush1.msra.mxu0 0.0
    %2065 = vmatprep.subr.mxu0 0.0
    %2066 = vmatpush1.msra.mxu0 0.0
    %2067 = vmatprep.subr.mxu0 0.0
    %2068 = vmatpush1.msra.mxu0 0.0
    %2069 = vmatprep.subr.mxu0 0.0
    %2070 = vmatpush1.msra.mxu0 0.0
    %2071 = vmatprep.subr.mxu0 0.0
    %2072 = vmatpush1.msra.mxu0 0.0
    %2073 = vmatprep.subr.mxu0 0.0
    %2074 = vmatpush1.msra.mxu0 0.0
    %2075 = vmatprep.subr.mxu0 0.0
    %2076 = vmatpush1.msra.mxu0 0.0
    %2077 = vmatprep.subr.mxu0 0.0
    %2078 = vmatpush1.msra.mxu0 0.0
    %2079 = vmatprep.subr.mxu0 0.0
    %2080 = vmatpush1.msra.mxu0 0.0
    %2081 = vmatprep.subr.mxu0 0.0
    %2082 = vmatpush1.msra.mxu0 0.0
    %2083 = vmatprep.subr.mxu0 0.0
    %2084 = vmatpush1.msra.mxu0 0.0
    %2085 = vmatprep.subr.mxu0 0.0
    %2086 = vmatpush1.msra.mxu0 0.0
    %2087 = vmatprep.subr.mxu0 0.0
    %2088 = vmatpush1.msra.mxu0 0.0
    %2089 = vmatprep.subr.mxu0 0.0
    %2090 = vmatpush1.msra.mxu0 0.0
    %2091 = vmatprep.subr.mxu0 0.0
    %2092 = vmatpush1.msra.mxu0 0.0
    %2093 = vmatprep.subr.mxu0 0.0
    %2094 = vmatpush1.msra.mxu0 0.0
    %2095 = vmatprep.subr.mxu0 0.0
    %2096 = vmatpush1.msra.mxu0 0.0
    %2097 = vmatprep.subr.mxu0 0.0
    %2098 = vmatpush1.msra.mxu0 0.0
    %2099 = vmatprep.subr.mxu0 0.0
    %2100 = vmatpush1.msra.mxu0 0.0
    %2101 = vmatprep.subr.mxu0 0.0
    %2102 = vmatpush1.msra.mxu0 0.0
    %2103 = vmatprep.subr.mxu0 0.0
    %2104 = vmatpush1.msra.mxu0 0.0
    %2105 = vmatprep.subr.mxu0 0.0
    %2106 = vmatpush1.msra.mxu0 0.0
    %2107 = vmatprep.subr.mxu0 0.0
    %2108 = vmatpush1.msra.mxu0 0.0
    %2109 = vmatprep.subr.mxu0 0.0
    %2110 = vmatpush1.msra.mxu0 0.0
    %2111 = vmatprep.subr.mxu0 0.0
    %2112 = vmatpush1.msra.mxu0 0.0
    %2113 = vmatprep.subr.mxu0 0.0
    %2114 = vmatpush1.msra.mxu0 0.0
    %2115 = vmatprep.mubr.f32.mxu0 0.0
    %2116 = vmatmul.mubr.f32.gmra.mrb[0].mxu0 %v2049
    %v2117 = vpop.f32.mrb[0].mxu0
    %v2118 = vadd.f32 %v2045, %v2117
    %v2119 = vpop.f32.mrb[0].mxu0
    %2120 = vdwg.mxu0
    %s2121 = scalar_lea.vmem %s6, 16
    %v2122 = vld [vmem:[%s2121] sm:$0xff]
    %s2123 = scalar_lea.vmem [#allocation10], 64
    %v2124 = vld [vmem:[%s2123] sm:$0xf]
    %v2125 = vld [vmem:[%s2123 + $0x4] sm:$0xf]
    %v2126 = vld [vmem:[%s2123 + $0x8] sm:$0xf]
    %v2127 = vld [vmem:[%s2123 + $0xc] sm:$0xf]
    %v2128 = vld [vmem:[%s2123 + $0x10] sm:$0xf]
    %v2129 = vld [vmem:[%s2123 + $0x14] sm:$0xf]
    %v2130 = vld [vmem:[%s2123 + $0x18] sm:$0xf]
    %v2131 = vld [vmem:[%s2123 + $0x1c] sm:$0xf]
    %v2140 = vunpack.c.l.b16 %v2124
    %v2141 = vunpack.c.l.b16 %v2125
    %v2142 = vunpack.c.l.b16 %v2126
    %v2143 = vunpack.c.l.b16 %v2127
    %v2144 = vunpack.c.l.b16 %v2128
    %v2145 = vunpack.c.l.b16 %v2129
    %v2146 = vunpack.c.l.b16 %v2130
    %v2147 = vunpack.c.l.b16 %v2131
    %v2148 = vpack.c.b16 %v2141, %v2140
    %v2149 = vpack.c.b16 %v2143, %v2142
    %v2150 = vpack.c.b16 %v2145, %v2144
    %v2151 = vpack.c.b16 %v2147, %v2146
    %2156 = vmatprep.subr.bf16.mxu0 0
    %2157 = vmatpush1.bf16.msra.mxu0 %v2148
    %2158 = vmatprep.subr.bf16.mxu0 0
    %2159 = vmatpush1.bf16.msra.mxu0 %v2149
    %2160 = vmatprep.subr.bf16.mxu0 0
    %2161 = vmatpush1.bf16.msra.mxu0 %v2150
    %2162 = vmatprep.subr.bf16.mxu0 0
    %2163 = vmatpush1.bf16.msra.mxu0 %v2151
    %2164 = vmatprep.subr.bf16.mxu0 0
    %2165 = vmatpush1.bf16.msra.mxu0 0
    %2166 = vmatprep.subr.bf16.mxu0 0
    %2167 = vmatpush1.bf16.msra.mxu0 0
    %2168 = vmatprep.subr.bf16.mxu0 0
    %2169 = vmatpush1.bf16.msra.mxu0 0
    %2170 = vmatprep.subr.bf16.mxu0 0
    %2171 = vmatpush1.bf16.msra.mxu0 0
    %2172 = vmatprep.subr.bf16.mxu0 0
    %2173 = vmatpush1.bf16.msra.mxu0 0
    %2174 = vmatprep.subr.bf16.mxu0 0
    %2175 = vmatpush1.bf16.msra.mxu0 0
    %2176 = vmatprep.subr.bf16.mxu0 0
    %2177 = vmatpush1.bf16.msra.mxu0 0
    %2178 = vmatprep.subr.bf16.mxu0 0
    %2179 = vmatpush1.bf16.msra.mxu0 0
    %2180 = vmatprep.subr.bf16.mxu0 0
    %2181 = vmatpush1.bf16.msra.mxu0 0
    %2182 = vmatprep.subr.bf16.mxu0 0
    %2183 = vmatpush1.bf16.msra.mxu0 0
    %2184 = vmatprep.subr.bf16.mxu0 0
    %2185 = vmatpush1.bf16.msra.mxu0 0
    %2186 = vmatprep.subr.bf16.mxu0 0
    %2187 = vmatpush1.bf16.msra.mxu0 0
    %2188 = vmatprep.mubr.bf16.mxu0 0
    %2189 = vmatmul.mubr.bf16.gmra.mrb[0].mxu0 %v1856
    %v2190 = vpop.f32.mrb[0].mxu0
    %v2191 = vadd.f32 0.0, %v2190
    %v2192 = vpop.f32.mrb[0].mxu0
    %v2193 = vpop.f32.mrb[0].mxu0
    %v2194 = vadd.f32 0.0, %v2193
    %v2195 = vpop.f32.mrb[0].mxu0
    %2196 = vdwg.mxu0
    %v2198 = vsel %vm251, %v2122, 0
    %2200 = vmatprep.subr.mxu0 0.0
    %2201 = vmatpush1.msra.mxu0 %v2191
    %2202 = vmatprep.subr.mxu0 0.0
    %2203 = vmatpush1.msra.mxu0 %v2194
    %2204 = vmatprep.subr.mxu0 0.0
    %2205 = vmatpush1.msra.mxu0 0.0
    %2206 = vmatprep.subr.mxu0 0.0
    %2207 = vmatpush1.msra.mxu0 0.0
    %2208 = vmatprep.subr.mxu0 0.0
    %2209 = vmatpush1.msra.mxu0 0.0
    %2210 = vmatprep.subr.mxu0 0.0
    %2211 = vmatpush1.msra.mxu0 0.0
    %2212 = vmatprep.subr.mxu0 0.0
    %2213 = vmatpush1.msra.mxu0 0.0
    %2214 = vmatprep.subr.mxu0 0.0
    %2215 = vmatpush1.msra.mxu0 0.0
    %2216 = vmatprep.subr.mxu0 0.0
    %2217 = vmatpush1.msra.mxu0 0.0
    %2218 = vmatprep.subr.mxu0 0.0
    %2219 = vmatpush1.msra.mxu0 0.0
    %2220 = vmatprep.subr.mxu0 0.0
    %2221 = vmatpush1.msra.mxu0 0.0
    %2222 = vmatprep.subr.mxu0 0.0
    %2223 = vmatpush1.msra.mxu0 0.0
    %2224 = vmatprep.subr.mxu0 0.0
    %2225 = vmatpush1.msra.mxu0 0.0
    %2226 = vmatprep.subr.mxu0 0.0
    %2227 = vmatpush1.msra.mxu0 0.0
    %2228 = vmatprep.subr.mxu0 0.0
    %2229 = vmatpush1.msra.mxu0 0.0
    %2230 = vmatprep.subr.mxu0 0.0
    %2231 = vmatpush1.msra.mxu0 0.0
    %2232 = vmatprep.subr.mxu0 0.0
    %2233 = vmatpush1.msra.mxu0 0.0
    %2234 = vmatprep.subr.mxu0 0.0
    %2235 = vmatpush1.msra.mxu0 0.0
    %2236 = vmatprep.subr.mxu0 0.0
    %2237 = vmatpush1.msra.mxu0 0.0
    %2238 = vmatprep.subr.mxu0 0.0
    %2239 = vmatpush1.msra.mxu0 0.0
    %2240 = vmatprep.subr.mxu0 0.0
    %2241 = vmatpush1.msra.mxu0 0.0
    %2242 = vmatprep.subr.mxu0 0.0
    %2243 = vmatpush1.msra.mxu0 0.0
    %2244 = vmatprep.subr.mxu0 0.0
    %2245 = vmatpush1.msra.mxu0 0.0
    %2246 = vmatprep.subr.mxu0 0.0
    %2247 = vmatpush1.msra.mxu0 0.0
    %2248 = vmatprep.subr.mxu0 0.0
    %2249 = vmatpush1.msra.mxu0 0.0
    %2250 = vmatprep.subr.mxu0 0.0
    %2251 = vmatpush1.msra.mxu0 0.0
    %2252 = vmatprep.subr.mxu0 0.0
    %2253 = vmatpush1.msra.mxu0 0.0
    %2254 = vmatprep.subr.mxu0 0.0
    %2255 = vmatpush1.msra.mxu0 0.0
    %2256 = vmatprep.subr.mxu0 0.0
    %2257 = vmatpush1.msra.mxu0 0.0
    %2258 = vmatprep.subr.mxu0 0.0
    %2259 = vmatpush1.msra.mxu0 0.0
    %2260 = vmatprep.subr.mxu0 0.0
    %2261 = vmatpush1.msra.mxu0 0.0
    %2262 = vmatprep.subr.mxu0 0.0
    %2263 = vmatpush1.msra.mxu0 0.0
    %2264 = vmatprep.mubr.f32.mxu0 0.0
    %2265 = vmatmul.mubr.f32.gmra.mrb[0].mxu0 %v2198
    %v2266 = vpop.f32.mrb[0].mxu0
    %v2267 = vadd.f32 0.0, %v2266
    %v2268 = vpop.f32.mrb[0].mxu0
    %2269 = vdwg.mxu0
    %v2270 = vadd.f32 %v2118, %v2267
    %s2271 = scalar_lea.vmem %s6, 24
    %v2272 = vld [vmem:[%s2271] sm:$0xff]
    %s2273 = scalar_lea.vmem [#allocation10], 96
    %v2274 = vld [vmem:[%s2273] sm:$0xf]
    %v2275 = vld [vmem:[%s2273 + $0x4] sm:$0xf]
    %v2276 = vld [vmem:[%s2273 + $0x8] sm:$0xf]
    %v2277 = vld [vmem:[%s2273 + $0xc] sm:$0xf]
    %v2278 = vld [vmem:[%s2273 + $0x10] sm:$0xf]
    %v2279 = vld [vmem:[%s2273 + $0x14] sm:$0xf]
    %v2280 = vld [vmem:[%s2273 + $0x18] sm:$0xf]
    %v2281 = vld [vmem:[%s2273 + $0x1c] sm:$0xf]
    %v2290 = vunpack.c.l.b16 %v2274
    %v2291 = vunpack.c.l.b16 %v2275
    %v2292 = vunpack.c.l.b16 %v2276
    %v2293 = vunpack.c.l.b16 %v2277
    %v2294 = vunpack.c.l.b16 %v2278
    %v2295 = vunpack.c.l.b16 %v2279
    %v2296 = vunpack.c.l.b16 %v2280
    %v2297 = vunpack.c.l.b16 %v2281
    %v2298 = vpack.c.b16 %v2291, %v2290
    %v2299 = vpack.c.b16 %v2293, %v2292
    %v2300 = vpack.c.b16 %v2295, %v2294
    %v2301 = vpack.c.b16 %v2297, %v2296
    %2306 = vmatprep.subr.bf16.mxu0 0
    %2307 = vmatpush1.bf16.msra.mxu0 %v2298
    %2308 = vmatprep.subr.bf16.mxu0 0
    %2309 = vmatpush1.bf16.msra.mxu0 %v2299
    %2310 = vmatprep.subr.bf16.mxu0 0
    %2311 = vmatpush1.bf16.msra.mxu0 %v2300
    %2312 = vmatprep.subr.bf16.mxu0 0
    %2313 = vmatpush1.bf16.msra.mxu0 %v2301
    %2314 = vmatprep.subr.bf16.mxu0 0
    %2315 = vmatpush1.bf16.msra.mxu0 0
    %2316 = vmatprep.subr.bf16.mxu0 0
    %2317 = vmatpush1.bf16.msra.mxu0 0
    %2318 = vmatprep.subr.bf16.mxu0 0
    %2319 = vmatpush1.bf16.msra.mxu0 0
    %2320 = vmatprep.subr.bf16.mxu0 0
    %2321 = vmatpush1.bf16.msra.mxu0 0
    %2322 = vmatprep.subr.bf16.mxu0 0
    %2323 = vmatpush1.bf16.msra.mxu0 0
    %2324 = vmatprep.subr.bf16.mxu0 0
    %2325 = vmatpush1.bf16.msra.mxu0 0
    %2326 = vmatprep.subr.bf16.mxu0 0
    %2327 = vmatpush1.bf16.msra.mxu0 0
    %2328 = vmatprep.subr.bf16.mxu0 0
    %2329 = vmatpush1.bf16.msra.mxu0 0
    %2330 = vmatprep.subr.bf16.mxu0 0
    %2331 = vmatpush1.bf16.msra.mxu0 0
    %2332 = vmatprep.subr.bf16.mxu0 0
    %2333 = vmatpush1.bf16.msra.mxu0 0
    %2334 = vmatprep.subr.bf16.mxu0 0
    %2335 = vmatpush1.bf16.msra.mxu0 0
    %2336 = vmatprep.subr.bf16.mxu0 0
    %2337 = vmatpush1.bf16.msra.mxu0 0
    %2338 = vmatprep.mubr.bf16.mxu0 0
    %2339 = vmatmul.mubr.bf16.gmra.mrb[0].mxu0 %v1856
    %v2340 = vpop.f32.mrb[0].mxu0
    %v2341 = vadd.f32 0.0, %v2340
    %v2342 = vpop.f32.mrb[0].mxu0
    %v2343 = vpop.f32.mrb[0].mxu0
    %v2344 = vadd.f32 0.0, %v2343
    %v2345 = vpop.f32.mrb[0].mxu0
    %2346 = vdwg.mxu0
    %v2348 = vsel %vm251, %v2272, 0
    %2350 = vmatprep.subr.mxu0 0.0
    %2351 = vmatpush1.msra.mxu0 %v2341
    %2352 = vmatprep.subr.mxu0 0.0
    %2353 = vmatpush1.msra.mxu0 %v2344
    %2354 = vmatprep.subr.mxu0 0.0
    %2355 = vmatpush1.msra.mxu0 0.0
    %2356 = vmatprep.subr.mxu0 0.0
    %2357 = vmatpush1.msra.mxu0 0.0
    %2358 = vmatprep.subr.mxu0 0.0
    %2359 = vmatpush1.msra.mxu0 0.0
    %2360 = vmatprep.subr.mxu0 0.0
    %2361 = vmatpush1.msra.mxu0 0.0
    %2362 = vmatprep.subr.mxu0 0.0
    %2363 = vmatpush1.msra.mxu0 0.0
    %2364 = vmatprep.subr.mxu0 0.0
    %2365 = vmatpush1.msra.mxu0 0.0
    %2366 = vmatprep.subr.mxu0 0.0
    %2367 = vmatpush1.msra.mxu0 0.0
    %2368 = vmatprep.subr.mxu0 0.0
    %2369 = vmatpush1.msra.mxu0 0.0
    %2370 = vmatprep.subr.mxu0 0.0
    %2371 = vmatpush1.msra.mxu0 0.0
    %2372 = vmatprep.subr.mxu0 0.0
    %2373 = vmatpush1.msra.mxu0 0.0
    %2374 = vmatprep.subr.mxu0 0.0
    %2375 = vmatpush1.msra.mxu0 0.0
    %2376 = vmatprep.subr.mxu0 0.0
    %2377 = vmatpush1.msra.mxu0 0.0
    %2378 = vmatprep.subr.mxu0 0.0
    %2379 = vmatpush1.msra.mxu0 0.0
    %2380 = vmatprep.subr.mxu0 0.0
    %2381 = vmatpush1.msra.mxu0 0.0
    %2382 = vmatprep.subr.mxu0 0.0
    %2383 = vmatpush1.msra.mxu0 0.0
    %2384 = vmatprep.subr.mxu0 0.0
    %2385 = vmatpush1.msra.mxu0 0.0
    %2386 = vmatprep.subr.mxu0 0.0
    %2387 = vmatpush1.msra.mxu0 0.0
    %2388 = vmatprep.subr.mxu0 0.0
    %2389 = vmatpush1.msra.mxu0 0.0
    %2390 = vmatprep.subr.mxu0 0.0
    %2391 = vmatpush1.msra.mxu0 0.0
    %2392 = vmatprep.subr.mxu0 0.0
    %2393 = vmatpush1.msra.mxu0 0.0
    %2394 = vmatprep.subr.mxu0 0.0
    %2395 = vmatpush1.msra.mxu0 0.0
    %2396 = vmatprep.subr.mxu0 0.0
    %2397 = vmatpush1.msra.mxu0 0.0
    %2398 = vmatprep.subr.mxu0 0.0
    %2399 = vmatpush1.msra.mxu0 0.0
    %2400 = vmatprep.subr.mxu0 0.0
    %2401 = vmatpush1.msra.mxu0 0.0
    %2402 = vmatprep.subr.mxu0 0.0
    %2403 = vmatpush1.msra.mxu0 0.0
    %2404 = vmatprep.subr.mxu0 0.0
    %2405 = vmatpush1.msra.mxu0 0.0
    %2406 = vmatprep.subr.mxu0 0.0
    %2407 = vmatpush1.msra.mxu0 0.0
    %2408 = vmatprep.subr.mxu0 0.0
    %2409 = vmatpush1.msra.mxu0 0.0
    %2410 = vmatprep.subr.mxu0 0.0
    %2411 = vmatpush1.msra.mxu0 0.0
    %2412 = vmatprep.subr.mxu0 0.0
    %2413 = vmatpush1.msra.mxu0 0.0
    %2414 = vmatprep.mubr.f32.mxu0 0.0
    %2415 = vmatmul.mubr.f32.gmra.mrb[0].mxu0 %v2348
    %v2416 = vpop.f32.mrb[0].mxu0
    %v2417 = vadd.f32 0.0, %v2416
    %v2418 = vpop.f32.mrb[0].mxu0
    %2419 = vdwg.mxu0
    %v2420 = vadd.f32 %v2270, %v2417
    %v2421 = vld [vmem:[#allocation15] sm:$0xff]
    %vm2422 = vcmask 64512
    %v2424 = vsel %vm2422, %v2421, 0
    %2426 = vmatprep.subr.mxu0 0.0
    %2427 = vmatpush1.msra.mxu0 %v2420
    %2428 = vmatprep.subr.mxu0 0.0
    %2429 = vmatpush1.msra.mxu0 0.0
    %2430 = vmatprep.subr.mxu0 0.0
    %2431 = vmatpush1.msra.mxu0 0.0
    %2432 = vmatprep.subr.mxu0 0.0
    %2433 = vmatpush1.msra.mxu0 0.0
    %2434 = vmatprep.subr.mxu0 0.0
    %2435 = vmatpush1.msra.mxu0 0.0
    %2436 = vmatprep.subr.mxu0 0.0
    %2437 = vmatpush1.msra.mxu0 0.0
    %2438 = vmatprep.subr.mxu0 0.0
    %2439 = vmatpush1.msra.mxu0 0.0
    %2440 = vmatprep.subr.mxu0 0.0
    %2441 = vmatpush1.msra.mxu0 0.0
    %2442 = vmatprep.subr.mxu0 0.0
    %2443 = vmatpush1.msra.mxu0 0.0
    %2444 = vmatprep.subr.mxu0 0.0
    %2445 = vmatpush1.msra.mxu0 0.0
    %2446 = vmatprep.subr.mxu0 0.0
    %2447 = vmatpush1.msra.mxu0 0.0
    %2448 = vmatprep.subr.mxu0 0.0
    %2449 = vmatpush1.msra.mxu0 0.0
    %2450 = vmatprep.subr.mxu0 0.0
    %2451 = vmatpush1.msra.mxu0 0.0
    %2452 = vmatprep.subr.mxu0 0.0
    %2453 = vmatpush1.msra.mxu0 0.0
    %2454 = vmatprep.subr.mxu0 0.0
    %2455 = vmatpush1.msra.mxu0 0.0
    %2456 = vmatprep.subr.mxu0 0.0
    %2457 = vmatpush1.msra.mxu0 0.0
    %2458 = vmatprep.subr.mxu0 0.0
    %2459 = vmatpush1.msra.mxu0 0.0
    %2460 = vmatprep.subr.mxu0 0.0
    %2461 = vmatpush1.msra.mxu0 0.0
    %2462 = vmatprep.subr.mxu0 0.0
    %2463 = vmatpush1.msra.mxu0 0.0
    %2464 = vmatprep.subr.mxu0 0.0
    %2465 = vmatpush1.msra.mxu0 0.0
    %2466 = vmatprep.subr.mxu0 0.0
    %2467 = vmatpush1.msra.mxu0 0.0
    %2468 = vmatprep.subr.mxu0 0.0
    %2469 = vmatpush1.msra.mxu0 0.0
    %2470 = vmatprep.subr.mxu0 0.0
    %2471 = vmatpush1.msra.mxu0 0.0
    %2472 = vmatprep.subr.mxu0 0.0
    %2473 = vmatpush1.msra.mxu0 0.0
    %2474 = vmatprep.subr.mxu0 0.0
    %2475 = vmatpush1.msra.mxu0 0.0
    %2476 = vmatprep.subr.mxu0 0.0
    %2477 = vmatpush1.msra.mxu0 0.0
    %2478 = vmatprep.subr.mxu0 0.0
    %2479 = vmatpush1.msra.mxu0 0.0
    %2480 = vmatprep.subr.mxu0 0.0
    %2481 = vmatpush1.msra.mxu0 0.0
    %2482 = vmatprep.subr.mxu0 0.0
    %2483 = vmatpush1.msra.mxu0 0.0
    %2484 = vmatprep.subr.mxu0 0.0
    %2485 = vmatpush1.msra.mxu0 0.0
    %2486 = vmatprep.subr.mxu0 0.0
    %2487 = vmatpush1.msra.mxu0 0.0
    %2488 = vmatprep.subr.mxu0 0.0
    %2489 = vmatpush1.msra.mxu0 0.0
    %2490 = vmatprep.mubr.f32.mxu0 0.0
    %2491 = vmatmul.mubr.f32.gmra.mrb[0].mxu0 %v2424
    %v2492 = vpop.f32.mrb[0].mxu0
    %v2493 = vadd.f32 0.0, %v2492
    %v2494 = vpop.f32.mrb[0].mxu0
    %2495 = vdwg.mxu0
    %v2496 = vld [vmem:[#allocation16] sm:$0xff]
    %v2497 = vld [vmem:[#allocation16 + $0x8] sm:$0xff]
    %v2498 = vld [vmem:[#allocation16 + $0x10] sm:$0xff]
    %v2499 = vld [vmem:[#allocation16 + $0x18] sm:$0xff]
    %v2500 = vld [vmem:[#allocation16 + $0x20] sm:$0xff]
    %v2501 = vld [vmem:[#allocation16 + $0x28] sm:$0xff]
    %v2502 = vld [vmem:[#allocation16 + $0x30] sm:$0xff]
    %v2503 = vld [vmem:[#allocation16 + $0x38] sm:$0xff]
    %v2505 = vsel %vm1175, %v2493, 0
    %2507 = vmatprep.subr.mxu0 0.0
    %2508 = vmatpush1.msra.mxu0 %v2496
    %2509 = vmatprep.subr.mxu0 0.0
    %2510 = vmatpush1.msra.mxu0 %v2497
    %2511 = vmatprep.subr.mxu0 0.0
    %2512 = vmatpush1.msra.mxu0 %v2498
    %2513 = vmatprep.subr.mxu0 0.0
    %2514 = vmatpush1.msra.mxu0 %v2499
    %2515 = vmatprep.subr.mxu0 0.0
    %2516 = vmatpush1.msra.mxu0 %v2500
    %2517 = vmatprep.subr.mxu0 0.0
    %2518 = vmatpush1.msra.mxu0 %v2501
    %2519 = vmatprep.subr.mxu0 0.0
    %2520 = vmatpush1.msra.mxu0 %v2502
    %2521 = vmatprep.subr.mxu0 0.0
    %2522 = vmatpush1.msra.mxu0 %v2503
    %2523 = vmatprep.subr.mxu0 0.0
    %2524 = vmatpush1.msra.mxu0 0.0
    %2525 = vmatprep.subr.mxu0 0.0
    %2526 = vmatpush1.msra.mxu0 0.0
    %2527 = vmatprep.subr.mxu0 0.0
    %2528 = vmatpush1.msra.mxu0 0.0
    %2529 = vmatprep.subr.mxu0 0.0
    %2530 = vmatpush1.msra.mxu0 0.0
    %2531 = vmatprep.subr.mxu0 0.0
    %2532 = vmatpush1.msra.mxu0 0.0
    %2533 = vmatprep.subr.mxu0 0.0
    %2534 = vmatpush1.msra.mxu0 0.0
    %2535 = vmatprep.subr.mxu0 0.0
    %2536 = vmatpush1.msra.mxu0 0.0
    %2537 = vmatprep.subr.mxu0 0.0
    %2538 = vmatpush1.msra.mxu0 0.0
    %2539 = vmatprep.subr.mxu0 0.0
    %2540 = vmatpush1.msra.mxu0 0.0
    %2541 = vmatprep.subr.mxu0 0.0
    %2542 = vmatpush1.msra.mxu0 0.0
    %2543 = vmatprep.subr.mxu0 0.0
    %2544 = vmatpush1.msra.mxu0 0.0
    %2545 = vmatprep.subr.mxu0 0.0
    %2546 = vmatpush1.msra.mxu0 0.0
    %2547 = vmatprep.subr.mxu0 0.0
    %2548 = vmatpush1.msra.mxu0 0.0
    %2549 = vmatprep.subr.mxu0 0.0
    %2550 = vmatpush1.msra.mxu0 0.0
    %2551 = vmatprep.subr.mxu0 0.0
    %2552 = vmatpush1.msra.mxu0 0.0
    %2553 = vmatprep.subr.mxu0 0.0
    %2554 = vmatpush1.msra.mxu0 0.0
    %2555 = vmatprep.subr.mxu0 0.0
    %2556 = vmatpush1.msra.mxu0 0.0
    %2557 = vmatprep.subr.mxu0 0.0
    %2558 = vmatpush1.msra.mxu0 0.0
    %2559 = vmatprep.subr.mxu0 0.0
    %2560 = vmatpush1.msra.mxu0 0.0
    %2561 = vmatprep.subr.mxu0 0.0
    %2562 = vmatpush1.msra.mxu0 0.0
    %2563 = vmatprep.subr.mxu0 0.0
    %2564 = vmatpush1.msra.mxu0 0.0
    %2565 = vmatprep.subr.mxu0 0.0
    %2566 = vmatpush1.msra.mxu0 0.0
    %2567 = vmatprep.subr.mxu0 0.0
    %2568 = vmatpush1.msra.mxu0 0.0
    %2569 = vmatprep.subr.mxu0 0.0
    %2570 = vmatpush1.msra.mxu0 0.0
    %2571 = vmatprep.mubr.f32.mxu0 0.0
    %2572 = vmatmul.mubr.f32.gmra.mrb[0].mxu0 %v2505
    %v2573 = vpop.f32.mrb[0].mxu0
    %v2574 = vadd.f32 0.0, %v2573
    %v2575 = vpop.f32.mrb[0].mxu0
    %2576 = vdwg.mxu0
    %v2577 = vmul.f32 %v2420, %v2420
    %2578 = vmatprep.subr.mxu0 0.0
    %2579 = vmatpush1.msra.mxu0 %v2577
    %2580 = vmatprep.subr.mxu0 0.0
    %2581 = vmatpush1.msra.mxu0 0.0
    %2582 = vmatprep.subr.mxu0 0.0
    %2583 = vmatpush1.msra.mxu0 0.0
    %2584 = vmatprep.subr.mxu0 0.0
    %2585 = vmatpush1.msra.mxu0 0.0
    %2586 = vmatprep.subr.mxu0 0.0
    %2587 = vmatpush1.msra.mxu0 0.0
    %2588 = vmatprep.subr.mxu0 0.0
    %2589 = vmatpush1.msra.mxu0 0.0
    %2590 = vmatprep.subr.mxu0 0.0
    %2591 = vmatpush1.msra.mxu0 0.0
    %2592 = vmatprep.subr.mxu0 0.0
    %2593 = vmatpush1.msra.mxu0 0.0
    %2594 = vmatprep.subr.mxu0 0.0
    %2595 = vmatpush1.msra.mxu0 0.0
    %2596 = vmatprep.subr.mxu0 0.0
    %2597 = vmatpush1.msra.mxu0 0.0
    %2598 = vmatprep.subr.mxu0 0.0
    %2599 = vmatpush1.msra.mxu0 0.0
    %2600 = vmatprep.subr.mxu0 0.0
    %2601 = vmatpush1.msra.mxu0 0.0
    %2602 = vmatprep.subr.mxu0 0.0
    %2603 = vmatpush1.msra.mxu0 0.0
    %2604 = vmatprep.subr.mxu0 0.0
    %2605 = vmatpush1.msra.mxu0 0.0
    %2606 = vmatprep.subr.mxu0 0.0
    %2607 = vmatpush1.msra.mxu0 0.0
    %2608 = vmatprep.subr.mxu0 0.0
    %2609 = vmatpush1.msra.mxu0 0.0
    %2610 = vmatprep.subr.mxu0 0.0
    %2611 = vmatpush1.msra.mxu0 0.0
    %2612 = vmatprep.subr.mxu0 0.0
    %2613 = vmatpush1.msra.mxu0 0.0
    %2614 = vmatprep.subr.mxu0 0.0
    %2615 = vmatpush1.msra.mxu0 0.0
    %2616 = vmatprep.subr.mxu0 0.0
    %2617 = vmatpush1.msra.mxu0 0.0
    %2618 = vmatprep.subr.mxu0 0.0
    %2619 = vmatpush1.msra.mxu0 0.0
    %2620 = vmatprep.subr.mxu0 0.0
    %2621 = vmatpush1.msra.mxu0 0.0
    %2622 = vmatprep.subr.mxu0 0.0
    %2623 = vmatpush1.msra.mxu0 0.0
    %2624 = vmatprep.subr.mxu0 0.0
    %2625 = vmatpush1.msra.mxu0 0.0
    %2626 = vmatprep.subr.mxu0 0.0
    %2627 = vmatpush1.msra.mxu0 0.0
    %2628 = vmatprep.subr.mxu0 0.0
    %2629 = vmatpush1.msra.mxu0 0.0
    %2630 = vmatprep.subr.mxu0 0.0
    %2631 = vmatpush1.msra.mxu0 0.0
    %2632 = vmatprep.subr.mxu0 0.0
    %2633 = vmatpush1.msra.mxu0 0.0
    %2634 = vmatprep.subr.mxu0 0.0
    %2635 = vmatpush1.msra.mxu0 0.0
    %2636 = vmatprep.subr.mxu0 0.0
    %2637 = vmatpush1.msra.mxu0 0.0
    %2638 = vmatprep.subr.mxu0 0.0
    %2639 = vmatpush1.msra.mxu0 0.0
    %2640 = vmatprep.subr.mxu0 0.0
    %2641 = vmatpush1.msra.mxu0 0.0
    %2642 = vmatprep.mubr.f32.mxu0 0.0
    %2643 = vmatmul.mubr.f32.gmra.mrb[0].mxu0 %v2424
    %v2644 = vpop.f32.mrb[0].mxu0
    %v2645 = vadd.f32 0.0, %v2644
    %v2646 = vpop.f32.mrb[0].mxu0
    %2647 = vdwg.mxu0
    %v2649 = vsel %vm1175, %v2645, 0
    %2651 = vmatprep.subr.mxu0 0.0
    %2652 = vmatpush1.msra.mxu0 %v2496
    %2653 = vmatprep.subr.mxu0 0.0
    %2654 = vmatpush1.msra.mxu0 %v2497
    %2655 = vmatprep.subr.mxu0 0.0
    %2656 = vmatpush1.msra.mxu0 %v2498
    %2657 = vmatprep.subr.mxu0 0.0
    %2658 = vmatpush1.msra.mxu0 %v2499
    %2659 = vmatprep.subr.mxu0 0.0
    %2660 = vmatpush1.msra.mxu0 %v2500
    %2661 = vmatprep.subr.mxu0 0.0
    %2662 = vmatpush1.msra.mxu0 %v2501
    %2663 = vmatprep.subr.mxu0 0.0
    %2664 = vmatpush1.msra.mxu0 %v2502
    %2665 = vmatprep.subr.mxu0 0.0
    %2666 = vmatpush1.msra.mxu0 %v2503
    %2667 = vmatprep.subr.mxu0 0.0
    %2668 = vmatpush1.msra.mxu0 0.0
    %2669 = vmatprep.subr.mxu0 0.0
    %2670 = vmatpush1.msra.mxu0 0.0
    %2671 = vmatprep.subr.mxu0 0.0
    %2672 = vmatpush1.msra.mxu0 0.0
    %2673 = vmatprep.subr.mxu0 0.0
    %2674 = vmatpush1.msra.mxu0 0.0
    %2675 = vmatprep.subr.mxu0 0.0
    %2676 = vmatpush1.msra.mxu0 0.0
    %2677 = vmatprep.subr.mxu0 0.0
    %2678 = vmatpush1.msra.mxu0 0.0
    %2679 = vmatprep.subr.mxu0 0.0
    %2680 = vmatpush1.msra.mxu0 0.0
    %2681 = vmatprep.subr.mxu0 0.0
    %2682 = vmatpush1.msra.mxu0 0.0
    %2683 = vmatprep.subr.mxu0 0.0
    %2684 = vmatpush1.msra.mxu0 0.0
    %2685 = vmatprep.subr.mxu0 0.0
    %2686 = vmatpush1.msra.mxu0 0.0
    %2687 = vmatprep.subr.mxu0 0.0
    %2688 = vmatpush1.msra.mxu0 0.0
    %2689 = vmatprep.subr.mxu0 0.0
    %2690 = vmatpush1.msra.mxu0 0.0
    %2691 = vmatprep.subr.mxu0 0.0
    %2692 = vmatpush1.msra.mxu0 0.0
    %2693 = vmatprep.subr.mxu0 0.0
    %2694 = vmatpush1.msra.mxu0 0.0
    %2695 = vmatprep.subr.mxu0 0.0
    %2696 = vmatpush1.msra.mxu0 0.0
    %2697 = vmatprep.subr.mxu0 0.0
    %2698 = vmatpush1.msra.mxu0 0.0
    %2699 = vmatprep.subr.mxu0 0.0
    %2700 = vmatpush1.msra.mxu0 0.0
    %2701 = vmatprep.subr.mxu0 0.0
    %2702 = vmatpush1.msra.mxu0 0.0
    %2703 = vmatprep.subr.mxu0 0.0
    %2704 = vmatpush1.msra.mxu0 0.0
    %2705 = vmatprep.subr.mxu0 0.0
    %2706 = vmatpush1.msra.mxu0 0.0
    %2707 = vmatprep.subr.mxu0 0.0
    %2708 = vmatpush1.msra.mxu0 0.0
    %2709 = vmatprep.subr.mxu0 0.0
    %2710 = vmatpush1.msra.mxu0 0.0
    %2711 = vmatprep.subr.mxu0 0.0
    %2712 = vmatpush1.msra.mxu0 0.0
    %2713 = vmatprep.subr.mxu0 0.0
    %2714 = vmatpush1.msra.mxu0 0.0
    %2715 = vmatprep.mubr.f32.mxu0 0.0
    %2716 = vmatmul.mubr.f32.gmra.mrb[0].mxu0 %v2649
    %v2717 = vpop.f32.mrb[0].mxu0
    %v2718 = vadd.f32 0.0, %v2717
    %v2719 = vpop.f32.mrb[0].mxu0
    %2720 = vdwg.mxu0
    %v2721 = vmul.f32 %v2574, %v2574
    %v2722 = vsub.f32 %v2718, %v2721
    %v2723 = vmax.f32 %v2722, 0.0
    %v2724 = vadd.f32 %v2723, 1e-05
    %v2725 = vrsqrt.pop %v2724
    %v2726 = vsub.f32 %v2420, %v2574
    %v2727 = vmul.f32 %v2726, %v2725
    %v2728 = vld [vmem:[%s12] sm:$0x1]
    %v2730 = vlaneseq
    %v2731 = vshrl.u32 %v2730, 7
    %v2732 = vsub.s32 0, %v2731
    %v2733 = vrot.slane %v2728, %v2732
    %v2735 = vmul.f32 %v2727, %v2733
    %v2736 = vld [vmem:[%s13] sm:$0x1]
    %v2738 = vlaneseq
    %v2739 = vshrl.u32 %v2738, 7
    %v2740 = vsub.s32 0, %v2739
    %v2741 = vrot.slane %v2736, %v2740
    %v2743 = vadd.f32 %v2735, %v2741
    %vm2744 = vcmp.gt.f32.partialorder %v2743, 0.0
    %v2745 = vmul.f32 %v2743, 0.2
    %v2746 = vsel %vm2744, %v2743, %v2745
    %v2747 = vld [vmem:[#allocation12] sm:$0xf]
    %v2748 = vld [vmem:[#allocation13] sm:$0xf]
    %v2749 = vld [vmem:[#allocation13 + $0x4] sm:$0xf]
    %v2750 = vld [vmem:[#allocation13 + $0x8] sm:$0xf]
    %v2751 = vld [vmem:[#allocation13 + $0xc] sm:$0xf]
    %v2752 = vld [vmem:[#allocation13 + $0x10] sm:$0xf]
    %v2753 = vld [vmem:[#allocation13 + $0x14] sm:$0xf]
    %v2754 = vld [vmem:[#allocation13 + $0x18] sm:$0xf]
    %v2755 = vld [vmem:[#allocation13 + $0x1c] sm:$0xf]
    %v2756 = vpack.c.bf16 %v2746, %v2746
    %v2765 = vunpack.c.l.b16 %v2748
    %v2766 = vunpack.c.l.b16 %v2749
    %v2767 = vunpack.c.l.b16 %v2750
    %v2768 = vunpack.c.l.b16 %v2751
    %v2769 = vunpack.c.l.b16 %v2752
    %v2770 = vunpack.c.l.b16 %v2753
    %v2771 = vunpack.c.l.b16 %v2754
    %v2772 = vunpack.c.l.b16 %v2755
    %v2773 = vpack.c.b16 %v2766, %v2765
    %v2774 = vpack.c.b16 %v2768, %v2767
    %v2775 = vpack.c.b16 %v2770, %v2769
    %v2776 = vpack.c.b16 %v2772, %v2771
    %v2782 = vsel %vm1175, %v2756, 0
    %2784 = vmatprep.subr.bf16.mxu0 0
    %2785 = vmatpush1.bf16.msra.mxu0 %v2773
    %2786 = vmatprep.subr.bf16.mxu0 0
    %2787 = vmatpush1.bf16.msra.mxu0 %v2774
    %2788 = vmatprep.subr.bf16.mxu0 0
    %2789 = vmatpush1.bf16.msra.mxu0 %v2775
    %2790 = vmatprep.subr.bf16.mxu0 0
    %2791 = vmatpush1.bf16.msra.mxu0 %v2776
    %2792 = vmatprep.subr.bf16.mxu0 0
    %2793 = vmatpush1.bf16.msra.mxu0 0
    %2794 = vmatprep.subr.bf16.mxu0 0
    %2795 = vmatpush1.bf16.msra.mxu0 0
    %2796 = vmatprep.subr.bf16.mxu0 0
    %2797 = vmatpush1.bf16.msra.mxu0 0
    %2798 = vmatprep.subr.bf16.mxu0 0
    %2799 = vmatpush1.bf16.msra.mxu0 0
    %2800 = vmatprep.subr.bf16.mxu0 0
    %2801 = vmatpush1.bf16.msra.mxu0 0
    %2802 = vmatprep.subr.bf16.mxu0 0
    %2803 = vmatpush1.bf16.msra.mxu0 0
    %2804 = vmatprep.subr.bf16.mxu0 0
    %2805 = vmatpush1.bf16.msra.mxu0 0
    %2806 = vmatprep.subr.bf16.mxu0 0
    %2807 = vmatpush1.bf16.msra.mxu0 0
    %2808 = vmatprep.subr.bf16.mxu0 0
    %2809 = vmatpush1.bf16.msra.mxu0 0
    %2810 = vmatprep.subr.bf16.mxu0 0
    %2811 = vmatpush1.bf16.msra.mxu0 0
    %2812 = vmatprep.subr.bf16.mxu0 0
    %2813 = vmatpush1.bf16.msra.mxu0 0
    %2814 = vmatprep.subr.bf16.mxu0 0
    %2815 = vmatpush1.bf16.msra.mxu0 0
    %2816 = vmatprep.mubr.bf16.mxu0 0
    %2817 = vmatmul.mubr.bf16.gmra.mrb[0].mxu0 %v2782
    %v2818 = vpop.f32.mrb[0].mxu0
    %v2819 = vadd.f32 0.0, %v2818
    %v2820 = vpop.f32.mrb[0].mxu0
    %v2821 = vpop.f32.mrb[0].mxu0
    %v2822 = vpop.f32.mrb[0].mxu0
    %2823 = vdwg.mxu0
    %s2824 = scalar_lea.vmem [#allocation12], 4
    %v2825 = vld [vmem:[%s2824] sm:$0xf]
    %s2826 = scalar_lea.vmem [#allocation13], 32
    %v2827 = vld [vmem:[%s2826] sm:$0xf]
    %v2828 = vld [vmem:[%s2826 + $0x4] sm:$0xf]
    %v2829 = vld [vmem:[%s2826 + $0x8] sm:$0xf]
    %v2830 = vld [vmem:[%s2826 + $0xc] sm:$0xf]
    %v2831 = vld [vmem:[%s2826 + $0x10] sm:$0xf]
    %v2832 = vld [vmem:[%s2826 + $0x14] sm:$0xf]
    %v2833 = vld [vmem:[%s2826 + $0x18] sm:$0xf]
    %v2834 = vld [vmem:[%s2826 + $0x1c] sm:$0xf]
    %v2843 = vunpack.c.l.b16 %v2827
    %v2844 = vunpack.c.l.b16 %v2828
    %v2845 = vunpack.c.l.b16 %v2829
    %v2846 = vunpack.c.l.b16 %v2830
    %v2847 = vunpack.c.l.b16 %v2831
    %v2848 = vunpack.c.l.b16 %v2832
    %v2849 = vunpack.c.l.b16 %v2833
    %v2850 = vunpack.c.l.b16 %v2834
    %v2851 = vpack.c.b16 %v2844, %v2843
    %v2852 = vpack.c.b16 %v2846, %v2845
    %v2853 = vpack.c.b16 %v2848, %v2847
    %v2854 = vpack.c.b16 %v2850, %v2849
    %2859 = vmatprep.subr.bf16.mxu0 0
    %2860 = vmatpush1.bf16.msra.mxu0 %v2851
    %2861 = vmatprep.subr.bf16.mxu0 0
    %2862 = vmatpush1.bf16.msra.mxu0 %v2852
    %2863 = vmatprep.subr.bf16.mxu0 0
    %2864 = vmatpush1.bf16.msra.mxu0 %v2853
    %2865 = vmatprep.subr.bf16.mxu0 0
    %2866 = vmatpush1.bf16.msra.mxu0 %v2854
    %2867 = vmatprep.subr.bf16.mxu0 0
    %2868 = vmatpush1.bf16.msra.mxu0 0
    %2869 = vmatprep.subr.bf16.mxu0 0
    %2870 = vmatpush1.bf16.msra.mxu0 0
    %2871 = vmatprep.subr.bf16.mxu0 0
    %2872 = vmatpush1.bf16.msra.mxu0 0
    %2873 = vmatprep.subr.bf16.mxu0 0
    %2874 = vmatpush1.bf16.msra.mxu0 0
    %2875 = vmatprep.subr.bf16.mxu0 0
    %2876 = vmatpush1.bf16.msra.mxu0 0
    %2877 = vmatprep.subr.bf16.mxu0 0
    %2878 = vmatpush1.bf16.msra.mxu0 0
    %2879 = vmatprep.subr.bf16.mxu0 0
    %2880 = vmatpush1.bf16.msra.mxu0 0
    %2881 = vmatprep.subr.bf16.mxu0 0
    %2882 = vmatpush1.bf16.msra.mxu0 0
    %2883 = vmatprep.subr.bf16.mxu0 0
    %2884 = vmatpush1.bf16.msra.mxu0 0
    %2885 = vmatprep.subr.bf16.mxu0 0
    %2886 = vmatpush1.bf16.msra.mxu0 0
    %2887 = vmatprep.subr.bf16.mxu0 0
    %2888 = vmatpush1.bf16.msra.mxu0 0
    %2889 = vmatprep.subr.bf16.mxu0 0
    %2890 = vmatpush1.bf16.msra.mxu0 0
    %2891 = vmatprep.mubr.bf16.mxu0 0
    %2892 = vmatmul.mubr.bf16.gmra.mrb[0].mxu0 %v2782
    %v2893 = vpop.f32.mrb[0].mxu0
    %v2894 = vadd.f32 0.0, %v2893
    %v2895 = vpop.f32.mrb[0].mxu0
    %v2896 = vpop.f32.mrb[0].mxu0
    %v2897 = vpop.f32.mrb[0].mxu0
    %2898 = vdwg.mxu0
    %v2900 = vsel %vm2422, %v2825, 0
    %2902 = vmatprep.subr.mxu0 0.0
    %2903 = vmatpush1.msra.mxu0 %v2894
    %2904 = vmatprep.subr.mxu0 0.0
    %2905 = vmatpush1.msra.mxu0 0.0
    %2906 = vmatprep.subr.mxu0 0.0
    %2907 = vmatpush1.msra.mxu0 0.0
    %2908 = vmatprep.subr.mxu0 0.0
    %2909 = vmatpush1.msra.mxu0 0.0
    %2910 = vmatprep.subr.mxu0 0.0
    %2911 = vmatpush1.msra.mxu0 0.0
    %2912 = vmatprep.subr.mxu0 0.0
    %2913 = vmatpush1.msra.mxu0 0.0
    %2914 = vmatprep.subr.mxu0 0.0
    %2915 = vmatpush1.msra.mxu0 0.0
    %2916 = vmatprep.subr.mxu0 0.0
    %2917 = vmatpush1.msra.mxu0 0.0
    %2918 = vmatprep.subr.mxu0 0.0
    %2919 = vmatpush1.msra.mxu0 0.0
    %2920 = vmatprep.subr.mxu0 0.0
    %2921 = vmatpush1.msra.mxu0 0.0
    %2922 = vmatprep.subr.mxu0 0.0
    %2923 = vmatpush1.msra.mxu0 0.0
    %2924 = vmatprep.subr.mxu0 0.0
    %2925 = vmatpush1.msra.mxu0 0.0
    %2926 = vmatprep.subr.mxu0 0.0
    %2927 = vmatpush1.msra.mxu0 0.0
    %2928 = vmatprep.subr.mxu0 0.0
    %2929 = vmatpush1.msra.mxu0 0.0
    %2930 = vmatprep.subr.mxu0 0.0
    %2931 = vmatpush1.msra.mxu0 0.0
    %2932 = vmatprep.subr.mxu0 0.0
    %2933 = vmatpush1.msra.mxu0 0.0
    %2934 = vmatprep.subr.mxu0 0.0
    %2935 = vmatpush1.msra.mxu0 0.0
    %2936 = vmatprep.subr.mxu0 0.0
    %2937 = vmatpush1.msra.mxu0 0.0
    %2938 = vmatprep.subr.mxu0 0.0
    %2939 = vmatpush1.msra.mxu0 0.0
    %2940 = vmatprep.subr.mxu0 0.0
    %2941 = vmatpush1.msra.mxu0 0.0
    %2942 = vmatprep.subr.mxu0 0.0
    %2943 = vmatpush1.msra.mxu0 0.0
    %2944 = vmatprep.subr.mxu0 0.0
    %2945 = vmatpush1.msra.mxu0 0.0
    %2946 = vmatprep.subr.mxu0 0.0
    %2947 = vmatpush1.msra.mxu0 0.0
    %2948 = vmatprep.subr.mxu0 0.0
    %2949 = vmatpush1.msra.mxu0 0.0
    %2950 = vmatprep.subr.mxu0 0.0
    %2951 = vmatpush1.msra.mxu0 0.0
    %2952 = vmatprep.subr.mxu0 0.0
    %2953 = vmatpush1.msra.mxu0 0.0
    %2954 = vmatprep.subr.mxu0 0.0
    %2955 = vmatpush1.msra.mxu0 0.0
    %2956 = vmatprep.subr.mxu0 0.0
    %2957 = vmatpush1.msra.mxu0 0.0
    %2958 = vmatprep.subr.mxu0 0.0
    %2959 = vmatpush1.msra.mxu0 0.0
    %2960 = vmatprep.subr.mxu0 0.0
    %2961 = vmatpush1.msra.mxu0 0.0
    %2962 = vmatprep.subr.mxu0 0.0
    %2963 = vmatpush1.msra.mxu0 0.0
    %2964 = vmatprep.subr.mxu0 0.0
    %2965 = vmatpush1.msra.mxu0 0.0
    %2966 = vmatprep.mubr.f32.mxu0 0.0
    %2967 = vmatmul.mubr.f32.gmra.mrb[0].mxu0 %v2900
    %v2968 = vpop.f32.mrb[0].mxu0
    %v2969 = vadd.f32 0.0, %v2968
    %v2970 = vpop.f32.mrb[0].mxu0
    %2971 = vdwg.mxu0
    %v2973 = vsel %vm2422, %v2747, 0
    %2975 = vmatprep.subr.mxu0 0.0
    %2976 = vmatpush1.msra.mxu0 %v2819
    %2977 = vmatprep.subr.mxu0 0.0
    %2978 = vmatpush1.msra.mxu0 0.0
    %2979 = vmatprep.subr.mxu0 0.0
    %2980 = vmatpush1.msra.mxu0 0.0
    %2981 = vmatprep.subr.mxu0 0.0
    %2982 = vmatpush1.msra.mxu0 0.0
    %2983 = vmatprep.subr.mxu0 0.0
    %2984 = vmatpush1.msra.mxu0 0.0
    %2985 = vmatprep.subr.mxu0 0.0
    %2986 = vmatpush1.msra.mxu0 0.0
    %2987 = vmatprep.subr.mxu0 0.0
    %2988 = vmatpush1.msra.mxu0 0.0
    %2989 = vmatprep.subr.mxu0 0.0
    %2990 = vmatpush1.msra.mxu0 0.0
    %2991 = vmatprep.subr.mxu0 0.0
    %2992 = vmatpush1.msra.mxu0 0.0
    %2993 = vmatprep.subr.mxu0 0.0
    %2994 = vmatpush1.msra.mxu0 0.0
    %2995 = vmatprep.subr.mxu0 0.0
    %2996 = vmatpush1.msra.mxu0 0.0
    %2997 = vmatprep.subr.mxu0 0.0
    %2998 = vmatpush1.msra.mxu0 0.0
    %2999 = vmatprep.subr.mxu0 0.0
    %3000 = vmatpush1.msra.mxu0 0.0
    %3001 = vmatprep.subr.mxu0 0.0
    %3002 = vmatpush1.msra.mxu0 0.0
    %3003 = vmatprep.subr.mxu0 0.0
    %3004 = vmatpush1.msra.mxu0 0.0
    %3005 = vmatprep.subr.mxu0 0.0
    %3006 = vmatpush1.msra.mxu0 0.0
    %3007 = vmatprep.subr.mxu0 0.0
    %3008 = vmatpush1.msra.mxu0 0.0
    %3009 = vmatprep.subr.mxu0 0.0
    %3010 = vmatpush1.msra.mxu0 0.0
    %3011 = vmatprep.subr.mxu0 0.0
    %3012 = vmatpush1.msra.mxu0 0.0
    %3013 = vmatprep.subr.mxu0 0.0
    %3014 = vmatpush1.msra.mxu0 0.0
    %3015 = vmatprep.subr.mxu0 0.0
    %3016 = vmatpush1.msra.mxu0 0.0
    %3017 = vmatprep.subr.mxu0 0.0
    %3018 = vmatpush1.msra.mxu0 0.0
    %3019 = vmatprep.subr.mxu0 0.0
    %3020 = vmatpush1.msra.mxu0 0.0
    %3021 = vmatprep.subr.mxu0 0.0
    %3022 = vmatpush1.msra.mxu0 0.0
    %3023 = vmatprep.subr.mxu0 0.0
    %3024 = vmatpush1.msra.mxu0 0.0
    %3025 = vmatprep.subr.mxu0 0.0
    %3026 = vmatpush1.msra.mxu0 0.0
    %3027 = vmatprep.subr.mxu0 0.0
    %3028 = vmatpush1.msra.mxu0 0.0
    %3029 = vmatprep.subr.mxu0 0.0
    %3030 = vmatpush1.msra.mxu0 0.0
    %3031 = vmatprep.subr.mxu0 0.0
    %3032 = vmatpush1.msra.mxu0 0.0
    %3033 = vmatprep.subr.mxu0 0.0
    %3034 = vmatpush1.msra.mxu0 0.0
    %3035 = vmatprep.subr.mxu0 0.0
    %3036 = vmatpush1.msra.mxu0 0.0
    %3037 = vmatprep.subr.mxu0 0.0
    %3038 = vmatpush1.msra.mxu0 0.0
    %3039 = vmatprep.mubr.f32.mxu0 0.0
    %3040 = vmatmul.mubr.f32.gmra.mrb[0].mxu0 %v2973
    %v3041 = vpop.f32.mrb[0].mxu0
    %v3042 = vadd.f32 %v2969, %v3041
    %v3043 = vpop.f32.mrb[0].mxu0
    %3044 = vdwg.mxu0
    %s3045 = scalar_lea.vmem [#allocation12], 8
    %v3046 = vld [vmem:[%s3045] sm:$0xf]
    %s3047 = scalar_lea.vmem [#allocation13], 64
    %v3048 = vld [vmem:[%s3047] sm:$0xf]
    %v3049 = vld [vmem:[%s3047 + $0x4] sm:$0xf]
    %v3050 = vld [vmem:[%s3047 + $0x8] sm:$0xf]
    %v3051 = vld [vmem:[%s3047 + $0xc] sm:$0xf]
    %v3052 = vld [vmem:[%s3047 + $0x10] sm:$0xf]
    %v3053 = vld [vmem:[%s3047 + $0x14] sm:$0xf]
    %v3054 = vld [vmem:[%s3047 + $0x18] sm:$0xf]
    %v3055 = vld [vmem:[%s3047 + $0x1c] sm:$0xf]
    %v3064 = vunpack.c.l.b16 %v3048
    %v3065 = vunpack.c.l.b16 %v3049
    %v3066 = vunpack.c.l.b16 %v3050
    %v3067 = vunpack.c.l.b16 %v3051
    %v3068 = vunpack.c.l.b16 %v3052
    %v3069 = vunpack.c.l.b16 %v3053
    %v3070 = vunpack.c.l.b16 %v3054
    %v3071 = vunpack.c.l.b16 %v3055
    %v3072 = vpack.c.b16 %v3065, %v3064
    %v3073 = vpack.c.b16 %v3067, %v3066
    %v3074 = vpack.c.b16 %v3069, %v3068
    %v3075 = vpack.c.b16 %v3071, %v3070
    %3080 = vmatprep.subr.bf16.mxu0 0
    %3081 = vmatpush1.bf16.msra.mxu0 %v3072
    %3082 = vmatprep.subr.bf16.mxu0 0
    %3083 = vmatpush1.bf16.msra.mxu0 %v3073
    %3084 = vmatprep.subr.bf16.mxu0 0
    %3085 = vmatpush1.bf16.msra.mxu0 %v3074
    %3086 = vmatprep.subr.bf16.mxu0 0
    %3087 = vmatpush1.bf16.msra.mxu0 %v3075
    %3088 = vmatprep.subr.bf16.mxu0 0
    %3089 = vmatpush1.bf16.msra.mxu0 0
    %3090 = vmatprep.subr.bf16.mxu0 0
    %3091 = vmatpush1.bf16.msra.mxu0 0
    %3092 = vmatprep.subr.bf16.mxu0 0
    %3093 = vmatpush1.bf16.msra.mxu0 0
    %3094 = vmatprep.subr.bf16.mxu0 0
    %3095 = vmatpush1.bf16.msra.mxu0 0
    %3096 = vmatprep.subr.bf16.mxu0 0
    %3097 = vmatpush1.bf16.msra.mxu0 0
    %3098 = vmatprep.subr.bf16.mxu0 0
    %3099 = vmatpush1.bf16.msra.mxu0 0
    %3100 = vmatprep.subr.bf16.mxu0 0
    %3101 = vmatpush1.bf16.msra.mxu0 0
    %3102 = vmatprep.subr.bf16.mxu0 0
    %3103 = vmatpush1.bf16.msra.mxu0 0
    %3104 = vmatprep.subr.bf16.mxu0 0
    %3105 = vmatpush1.bf16.msra.mxu0 0
    %3106 = vmatprep.subr.bf16.mxu0 0
    %3107 = vmatpush1.bf16.msra.mxu0 0
    %3108 = vmatprep.subr.bf16.mxu0 0
    %3109 = vmatpush1.bf16.msra.mxu0 0
    %3110 = vmatprep.subr.bf16.mxu0 0
    %3111 = vmatpush1.bf16.msra.mxu0 0
    %3112 = vmatprep.mubr.bf16.mxu0 0
    %3113 = vmatmul.mubr.bf16.gmra.mrb[0].mxu0 %v2782
    %v3114 = vpop.f32.mrb[0].mxu0
    %v3115 = vadd.f32 0.0, %v3114
    %v3116 = vpop.f32.mrb[0].mxu0
    %v3117 = vpop.f32.mrb[0].mxu0
    %v3118 = vpop.f32.mrb[0].mxu0
    %3119 = vdwg.mxu0
    %v3121 = vsel %vm2422, %v3046, 0
    %3123 = vmatprep.subr.mxu0 0.0
    %3124 = vmatpush1.msra.mxu0 %v3115
    %3125 = vmatprep.subr.mxu0 0.0
    %3126 = vmatpush1.msra.mxu0 0.0
    %3127 = vmatprep.subr.mxu0 0.0
    %3128 = vmatpush1.msra.mxu0 0.0
    %3129 = vmatprep.subr.mxu0 0.0
    %3130 = vmatpush1.msra.mxu0 0.0
    %3131 = vmatprep.subr.mxu0 0.0
    %3132 = vmatpush1.msra.mxu0 0.0
    %3133 = vmatprep.subr.mxu0 0.0
    %3134 = vmatpush1.msra.mxu0 0.0
    %3135 = vmatprep.subr.mxu0 0.0
    %3136 = vmatpush1.msra.mxu0 0.0
    %3137 = vmatprep.subr.mxu0 0.0
    %3138 = vmatpush1.msra.mxu0 0.0
    %3139 = vmatprep.subr.mxu0 0.0
    %3140 = vmatpush1.msra.mxu0 0.0
    %3141 = vmatprep.subr.mxu0 0.0
    %3142 = vmatpush1.msra.mxu0 0.0
    %3143 = vmatprep.subr.mxu0 0.0
    %3144 = vmatpush1.msra.mxu0 0.0
    %3145 = vmatprep.subr.mxu0 0.0
    %3146 = vmatpush1.msra.mxu0 0.0
    %3147 = vmatprep.subr.mxu0 0.0
    %3148 = vmatpush1.msra.mxu0 0.0
    %3149 = vmatprep.subr.mxu0 0.0
    %3150 = vmatpush1.msra.mxu0 0.0
    %3151 = vmatprep.subr.mxu0 0.0
    %3152 = vmatpush1.msra.mxu0 0.0
    %3153 = vmatprep.subr.mxu0 0.0
    %3154 = vmatpush1.msra.mxu0 0.0
    %3155 = vmatprep.subr.mxu0 0.0
    %3156 = vmatpush1.msra.mxu0 0.0
    %3157 = vmatprep.subr.mxu0 0.0
    %3158 = vmatpush1.msra.mxu0 0.0
    %3159 = vmatprep.subr.mxu0 0.0
    %3160 = vmatpush1.msra.mxu0 0.0
    %3161 = vmatprep.subr.mxu0 0.0
    %3162 = vmatpush1.msra.mxu0 0.0
    %3163 = vmatprep.subr.mxu0 0.0
    %3164 = vmatpush1.msra.mxu0 0.0
    %3165 = vmatprep.subr.mxu0 0.0
    %3166 = vmatpush1.msra.mxu0 0.0
    %3167 = vmatprep.subr.mxu0 0.0
    %3168 = vmatpush1.msra.mxu0 0.0
    %3169 = vmatprep.subr.mxu0 0.0
    %3170 = vmatpush1.msra.mxu0 0.0
    %3171 = vmatprep.subr.mxu0 0.0
    %3172 = vmatpush1.msra.mxu0 0.0
    %3173 = vmatprep.subr.mxu0 0.0
    %3174 = vmatpush1.msra.mxu0 0.0
    %3175 = vmatprep.subr.mxu0 0.0
    %3176 = vmatpush1.msra.mxu0 0.0
    %3177 = vmatprep.subr.mxu0 0.0
    %3178 = vmatpush1.msra.mxu0 0.0
    %3179 = vmatprep.subr.mxu0 0.0
    %3180 = vmatpush1.msra.mxu0 0.0
    %3181 = vmatprep.subr.mxu0 0.0
    %3182 = vmatpush1.msra.mxu0 0.0
    %3183 = vmatprep.subr.mxu0 0.0
    %3184 = vmatpush1.msra.mxu0 0.0
    %3185 = vmatprep.subr.mxu0 0.0
    %3186 = vmatpush1.msra.mxu0 0.0
    %3187 = vmatprep.mubr.f32.mxu0 0.0
    %3188 = vmatmul.mubr.f32.gmra.mrb[0].mxu0 %v3121
    %v3189 = vpop.f32.mrb[0].mxu0
    %v3190 = vadd.f32 0.0, %v3189
    %v3191 = vpop.f32.mrb[0].mxu0
    %3192 = vdwg.mxu0
    %v3193 = vadd.f32 %v3042, %v3190
    %s3194 = scalar_lea.vmem [#allocation12], 12
    %v3195 = vld [vmem:[%s3194] sm:$0xf]
    %s3196 = scalar_lea.vmem [#allocation13], 96
    %v3197 = vld [vmem:[%s3196] sm:$0xf]
    %v3198 = vld [vmem:[%s3196 + $0x4] sm:$0xf]
    %v3199 = vld [vmem:[%s3196 + $0x8] sm:$0xf]
    %v3200 = vld [vmem:[%s3196 + $0xc] sm:$0xf]
    %v3201 = vld [vmem:[%s3196 + $0x10] sm:$0xf]
    %v3202 = vld [vmem:[%s3196 + $0x14] sm:$0xf]
    %v3203 = vld [vmem:[%s3196 + $0x18] sm:$0xf]
    %v3204 = vld [vmem:[%s3196 + $0x1c] sm:$0xf]
    %v3213 = vunpack.c.l.b16 %v3197
    %v3214 = vunpack.c.l.b16 %v3198
    %v3215 = vunpack.c.l.b16 %v3199
    %v3216 = vunpack.c.l.b16 %v3200
    %v3217 = vunpack.c.l.b16 %v3201
    %v3218 = vunpack.c.l.b16 %v3202
    %v3219 = vunpack.c.l.b16 %v3203
    %v3220 = vunpack.c.l.b16 %v3204
    %v3221 = vpack.c.b16 %v3214, %v3213
    %v3222 = vpack.c.b16 %v3216, %v3215
    %v3223 = vpack.c.b16 %v3218, %v3217
    %v3224 = vpack.c.b16 %v3220, %v3219
    %3229 = vmatprep.subr.bf16.mxu0 0
    %3230 = vmatpush1.bf16.msra.mxu0 %v3221
    %3231 = vmatprep.subr.bf16.mxu0 0
    %3232 = vmatpush1.bf16.msra.mxu0 %v3222
    %3233 = vmatprep.subr.bf16.mxu0 0
    %3234 = vmatpush1.bf16.msra.mxu0 %v3223
    %3235 = vmatprep.subr.bf16.mxu0 0
    %3236 = vmatpush1.bf16.msra.mxu0 %v3224
    %3237 = vmatprep.subr.bf16.mxu0 0
    %3238 = vmatpush1.bf16.msra.mxu0 0
    %3239 = vmatprep.subr.bf16.mxu0 0
    %3240 = vmatpush1.bf16.msra.mxu0 0
    %3241 = vmatprep.subr.bf16.mxu0 0
    %3242 = vmatpush1.bf16.msra.mxu0 0
    %3243 = vmatprep.subr.bf16.mxu0 0
    %3244 = vmatpush1.bf16.msra.mxu0 0
    %3245 = vmatprep.subr.bf16.mxu0 0
    %3246 = vmatpush1.bf16.msra.mxu0 0
    %3247 = vmatprep.subr.bf16.mxu0 0
    %3248 = vmatpush1.bf16.msra.mxu0 0
    %3249 = vmatprep.subr.bf16.mxu0 0
    %3250 = vmatpush1.bf16.msra.mxu0 0
    %3251 = vmatprep.subr.bf16.mxu0 0
    %3252 = vmatpush1.bf16.msra.mxu0 0
    %3253 = vmatprep.subr.bf16.mxu0 0
    %3254 = vmatpush1.bf16.msra.mxu0 0
    %3255 = vmatprep.subr.bf16.mxu0 0
    %3256 = vmatpush1.bf16.msra.mxu0 0
    %3257 = vmatprep.subr.bf16.mxu0 0
    %3258 = vmatpush1.bf16.msra.mxu0 0
    %3259 = vmatprep.subr.bf16.mxu0 0
    %3260 = vmatpush1.bf16.msra.mxu0 0
    %3261 = vmatprep.mubr.bf16.mxu0 0
    %3262 = vmatmul.mubr.bf16.gmra.mrb[0].mxu0 %v2782
    %v3263 = vpop.f32.mrb[0].mxu0
    %v3264 = vadd.f32 0.0, %v3263
    %v3265 = vpop.f32.mrb[0].mxu0
    %v3266 = vpop.f32.mrb[0].mxu0
    %v3267 = vpop.f32.mrb[0].mxu0
    %3268 = vdwg.mxu0
    %v3270 = vsel %vm2422, %v3195, 0
    %3272 = vmatprep.subr.mxu0 0.0
    %3273 = vmatpush1.msra.mxu0 %v3264
    %3274 = vmatprep.subr.mxu0 0.0
    %3275 = vmatpush1.msra.mxu0 0.0
    %3276 = vmatprep.subr.mxu0 0.0
    %3277 = vmatpush1.msra.mxu0 0.0
    %3278 = vmatprep.subr.mxu0 0.0
    %3279 = vmatpush1.msra.mxu0 0.0
    %3280 = vmatprep.subr.mxu0 0.0
    %3281 = vmatpush1.msra.mxu0 0.0
    %3282 = vmatprep.subr.mxu0 0.0
    %3283 = vmatpush1.msra.mxu0 0.0
    %3284 = vmatprep.subr.mxu0 0.0
    %3285 = vmatpush1.msra.mxu0 0.0
    %3286 = vmatprep.subr.mxu0 0.0
    %3287 = vmatpush1.msra.mxu0 0.0
    %3288 = vmatprep.subr.mxu0 0.0
    %3289 = vmatpush1.msra.mxu0 0.0
    %3290 = vmatprep.subr.mxu0 0.0
    %3291 = vmatpush1.msra.mxu0 0.0
    %3292 = vmatprep.subr.mxu0 0.0
    %3293 = vmatpush1.msra.mxu0 0.0
    %3294 = vmatprep.subr.mxu0 0.0
    %3295 = vmatpush1.msra.mxu0 0.0
    %3296 = vmatprep.subr.mxu0 0.0
    %3297 = vmatpush1.msra.mxu0 0.0
    %3298 = vmatprep.subr.mxu0 0.0
    %3299 = vmatpush1.msra.mxu0 0.0
    %3300 = vmatprep.subr.mxu0 0.0
    %3301 = vmatpush1.msra.mxu0 0.0
    %3302 = vmatprep.subr.mxu0 0.0
    %3303 = vmatpush1.msra.mxu0 0.0
    %3304 = vmatprep.subr.mxu0 0.0
    %3305 = vmatpush1.msra.mxu0 0.0
    %3306 = vmatprep.subr.mxu0 0.0
    %3307 = vmatpush1.msra.mxu0 0.0
    %3308 = vmatprep.subr.mxu0 0.0
    %3309 = vmatpush1.msra.mxu0 0.0
    %3310 = vmatprep.subr.mxu0 0.0
    %3311 = vmatpush1.msra.mxu0 0.0
    %3312 = vmatprep.subr.mxu0 0.0
    %3313 = vmatpush1.msra.mxu0 0.0
    %3314 = vmatprep.subr.mxu0 0.0
    %3315 = vmatpush1.msra.mxu0 0.0
    %3316 = vmatprep.subr.mxu0 0.0
    %3317 = vmatpush1.msra.mxu0 0.0
    %3318 = vmatprep.subr.mxu0 0.0
    %3319 = vmatpush1.msra.mxu0 0.0
    %3320 = vmatprep.subr.mxu0 0.0
    %3321 = vmatpush1.msra.mxu0 0.0
    %3322 = vmatprep.subr.mxu0 0.0
    %3323 = vmatpush1.msra.mxu0 0.0
    %3324 = vmatprep.subr.mxu0 0.0
    %3325 = vmatpush1.msra.mxu0 0.0
    %3326 = vmatprep.subr.mxu0 0.0
    %3327 = vmatpush1.msra.mxu0 0.0
    %3328 = vmatprep.subr.mxu0 0.0
    %3329 = vmatpush1.msra.mxu0 0.0
    %3330 = vmatprep.subr.mxu0 0.0
    %3331 = vmatpush1.msra.mxu0 0.0
    %3332 = vmatprep.subr.mxu0 0.0
    %3333 = vmatpush1.msra.mxu0 0.0
    %3334 = vmatprep.subr.mxu0 0.0
    %3335 = vmatpush1.msra.mxu0 0.0
    %3336 = vmatprep.mubr.f32.mxu0 0.0
    %3337 = vmatmul.mubr.f32.gmra.mrb[0].mxu0 %v3270
    %v3338 = vpop.f32.mrb[0].mxu0
    %v3339 = vadd.f32 0.0, %v3338
    %v3340 = vpop.f32.mrb[0].mxu0
    %3341 = vdwg.mxu0
    %v3342 = vadd.f32 %v3193, %v3339
    %v3343 = vld [vmem:[#allocation18] sm:$0xf]
    %vm3344 = vcmask 31744
    %v3346 = vsel %vm3344, %v3343, 0
    %vm3348 = vcmask 1043456
    %v3350 = vsel %vm3348, %v3342, 0
    %3352 = vmatprep.subr.mxu0 0.0
    %3353 = vmatpush1.msra.mxu0 %v3350
    %3354 = vmatprep.subr.mxu0 0.0
    %3355 = vmatpush1.msra.mxu0 0.0
    %3356 = vmatprep.subr.mxu0 0.0
    %3357 = vmatpush1.msra.mxu0 0.0
    %3358 = vmatprep.subr.mxu0 0.0
    %3359 = vmatpush1.msra.mxu0 0.0
    %3360 = vmatprep.subr.mxu0 0.0
    %3361 = vmatpush1.msra.mxu0 0.0
    %3362 = vmatprep.subr.mxu0 0.0
    %3363 = vmatpush1.msra.mxu0 0.0
    %3364 = vmatprep.subr.mxu0 0.0
    %3365 = vmatpush1.msra.mxu0 0.0
    %3366 = vmatprep.subr.mxu0 0.0
    %3367 = vmatpush1.msra.mxu0 0.0
    %3368 = vmatprep.subr.mxu0 0.0
    %3369 = vmatpush1.msra.mxu0 0.0
    %3370 = vmatprep.subr.mxu0 0.0
    %3371 = vmatpush1.msra.mxu0 0.0
    %3372 = vmatprep.subr.mxu0 0.0
    %3373 = vmatpush1.msra.mxu0 0.0
    %3374 = vmatprep.subr.mxu0 0.0
    %3375 = vmatpush1.msra.mxu0 0.0
    %3376 = vmatprep.subr.mxu0 0.0
    %3377 = vmatpush1.msra.mxu0 0.0
    %3378 = vmatprep.subr.mxu0 0.0
    %3379 = vmatpush1.msra.mxu0 0.0
    %3380 = vmatprep.subr.mxu0 0.0
    %3381 = vmatpush1.msra.mxu0 0.0
    %3382 = vmatprep.subr.mxu0 0.0
    %3383 = vmatpush1.msra.mxu0 0.0
    %3384 = vmatprep.subr.mxu0 0.0
    %3385 = vmatpush1.msra.mxu0 0.0
    %3386 = vmatprep.subr.mxu0 0.0
    %3387 = vmatpush1.msra.mxu0 0.0
    %3388 = vmatprep.subr.mxu0 0.0
    %3389 = vmatpush1.msra.mxu0 0.0
    %3390 = vmatprep.subr.mxu0 0.0
    %3391 = vmatpush1.msra.mxu0 0.0
    %3392 = vmatprep.subr.mxu0 0.0
    %3393 = vmatpush1.msra.mxu0 0.0
    %3394 = vmatprep.subr.mxu0 0.0
    %3395 = vmatpush1.msra.mxu0 0.0
    %3396 = vmatprep.subr.mxu0 0.0
    %3397 = vmatpush1.msra.mxu0 0.0
    %3398 = vmatprep.subr.mxu0 0.0
    %3399 = vmatpush1.msra.mxu0 0.0
    %3400 = vmatprep.subr.mxu0 0.0
    %3401 = vmatpush1.msra.mxu0 0.0
    %3402 = vmatprep.subr.mxu0 0.0
    %3403 = vmatpush1.msra.mxu0 0.0
    %3404 = vmatprep.subr.mxu0 0.0
    %3405 = vmatpush1.msra.mxu0 0.0
    %3406 = vmatprep.subr.mxu0 0.0
    %3407 = vmatpush1.msra.mxu0 0.0
    %3408 = vmatprep.subr.mxu0 0.0
    %3409 = vmatpush1.msra.mxu0 0.0
    %3410 = vmatprep.subr.mxu0 0.0
    %3411 = vmatpush1.msra.mxu0 0.0
    %3412 = vmatprep.subr.mxu0 0.0
    %3413 = vmatpush1.msra.mxu0 0.0
    %3414 = vmatprep.subr.mxu0 0.0
    %3415 = vmatpush1.msra.mxu0 0.0
    %3416 = vmatprep.mubr.f32.mxu0 0.0
    %3417 = vmatmul.mubr.f32.gmra.mrb[0].mxu0 %v3346
    %v3418 = vpop.f32.mrb[0].mxu0
    %v3419 = vadd.f32 0.0, %v3418
    %v3420 = vpop.f32.mrb[0].mxu0
    %3421 = vdwg.mxu0
    %v3422 = vld [vmem:[#allocation19] sm:$0xff]
    %v3423 = vld [vmem:[#allocation19 + $0x8] sm:$0xff]
    %v3424 = vld [vmem:[#allocation19 + $0x10] sm:$0xff]
    %v3425 = vld [vmem:[#allocation19 + $0x18] sm:$0xff]
    %v3426 = vld [vmem:[#allocation19 + $0x20] sm:$0xff]
    %v3427 = vld [vmem:[#allocation19 + $0x28] sm:$0xff]
    %v3428 = vld [vmem:[#allocation19 + $0x30] sm:$0xff]
    %v3429 = vld [vmem:[#allocation19 + $0x38] sm:$0xff]
    %v3431 = vsel %vm1175, %v3419, 0
    %3433 = vmatprep.subr.mxu0 0.0
    %3434 = vmatpush1.msra.mxu0 %v3422
    %3435 = vmatprep.subr.mxu0 0.0
    %3436 = vmatpush1.msra.mxu0 %v3423
    %3437 = vmatprep.subr.mxu0 0.0
    %3438 = vmatpush1.msra.mxu0 %v3424
    %3439 = vmatprep.subr.mxu0 0.0
    %3440 = vmatpush1.msra.mxu0 %v3425
    %3441 = vmatprep.subr.mxu0 0.0
    %3442 = vmatpush1.msra.mxu0 %v3426
    %3443 = vmatprep.subr.mxu0 0.0
    %3444 = vmatpush1.msra.mxu0 %v3427
    %3445 = vmatprep.subr.mxu0 0.0
    %3446 = vmatpush1.msra.mxu0 %v3428
    %3447 = vmatprep.subr.mxu0 0.0
    %3448 = vmatpush1.msra.mxu0 %v3429
    %3449 = vmatprep.subr.mxu0 0.0
    %3450 = vmatpush1.msra.mxu0 0.0
    %3451 = vmatprep.subr.mxu0 0.0
    %3452 = vmatpush1.msra.mxu0 0.0
    %3453 = vmatprep.subr.mxu0 0.0
    %3454 = vmatpush1.msra.mxu0 0.0
    %3455 = vmatprep.subr.mxu0 0.0
    %3456 = vmatpush1.msra.mxu0 0.0
    %3457 = vmatprep.subr.mxu0 0.0
    %3458 = vmatpush1.msra.mxu0 0.0
    %3459 = vmatprep.subr.mxu0 0.0
    %3460 = vmatpush1.msra.mxu0 0.0
    %3461 = vmatprep.subr.mxu0 0.0
    %3462 = vmatpush1.msra.mxu0 0.0
    %3463 = vmatprep.subr.mxu0 0.0
    %3464 = vmatpush1.msra.mxu0 0.0
    %3465 = vmatprep.subr.mxu0 0.0
    %3466 = vmatpush1.msra.mxu0 0.0
    %3467 = vmatprep.subr.mxu0 0.0
    %3468 = vmatpush1.msra.mxu0 0.0
    %3469 = vmatprep.subr.mxu0 0.0
    %3470 = vmatpush1.msra.mxu0 0.0
    %3471 = vmatprep.subr.mxu0 0.0
    %3472 = vmatpush1.msra.mxu0 0.0
    %3473 = vmatprep.subr.mxu0 0.0
    %3474 = vmatpush1.msra.mxu0 0.0
    %3475 = vmatprep.subr.mxu0 0.0
    %3476 = vmatpush1.msra.mxu0 0.0
    %3477 = vmatprep.subr.mxu0 0.0
    %3478 = vmatpush1.msra.mxu0 0.0
    %3479 = vmatprep.subr.mxu0 0.0
    %3480 = vmatpush1.msra.mxu0 0.0
    %3481 = vmatprep.subr.mxu0 0.0
    %3482 = vmatpush1.msra.mxu0 0.0
    %3483 = vmatprep.subr.mxu0 0.0
    %3484 = vmatpush1.msra.mxu0 0.0
    %3485 = vmatprep.subr.mxu0 0.0
    %3486 = vmatpush1.msra.mxu0 0.0
    %3487 = vmatprep.subr.mxu0 0.0
    %3488 = vmatpush1.msra.mxu0 0.0
    %3489 = vmatprep.subr.mxu0 0.0
    %3490 = vmatpush1.msra.mxu0 0.0
    %3491 = vmatprep.subr.mxu0 0.0
    %3492 = vmatpush1.msra.mxu0 0.0
    %3493 = vmatprep.subr.mxu0 0.0
    %3494 = vmatpush1.msra.mxu0 0.0
    %3495 = vmatprep.subr.mxu0 0.0
    %3496 = vmatpush1.msra.mxu0 0.0
    %3497 = vmatprep.mubr.f32.mxu0 0.0
    %3498 = vmatmul.mubr.f32.gmra.mrb[0].mxu0 %v3431
    %v3499 = vpop.f32.mrb[0].mxu0
    %v3500 = vadd.f32 0.0, %v3499
    %v3501 = vpop.f32.mrb[0].mxu0
    %3502 = vdwg.mxu0
    %v3503 = vmul.f32 %v3342, %v3342
    %v3505 = vsel %vm3348, %v3503, 0
    %3507 = vmatprep.subr.mxu0 0.0
    %3508 = vmatpush1.msra.mxu0 %v3505
    %3509 = vmatprep.subr.mxu0 0.0
    %3510 = vmatpush1.msra.mxu0 0.0
    %3511 = vmatprep.subr.mxu0 0.0
    %3512 = vmatpush1.msra.mxu0 0.0
    %3513 = vmatprep.subr.mxu0 0.0
    %3514 = vmatpush1.msra.mxu0 0.0
    %3515 = vmatprep.subr.mxu0 0.0
    %3516 = vmatpush1.msra.mxu0 0.0
    %3517 = vmatprep.subr.mxu0 0.0
    %3518 = vmatpush1.msra.mxu0 0.0
    %3519 = vmatprep.subr.mxu0 0.0
    %3520 = vmatpush1.msra.mxu0 0.0
    %3521 = vmatprep.subr.mxu0 0.0
    %3522 = vmatpush1.msra.mxu0 0.0
    %3523 = vmatprep.subr.mxu0 0.0
    %3524 = vmatpush1.msra.mxu0 0.0
    %3525 = vmatprep.subr.mxu0 0.0
    %3526 = vmatpush1.msra.mxu0 0.0
    %3527 = vmatprep.subr.mxu0 0.0
    %3528 = vmatpush1.msra.mxu0 0.0
    %3529 = vmatprep.subr.mxu0 0.0
    %3530 = vmatpush1.msra.mxu0 0.0
    %3531 = vmatprep.subr.mxu0 0.0
    %3532 = vmatpush1.msra.mxu0 0.0
    %3533 = vmatprep.subr.mxu0 0.0
    %3534 = vmatpush1.msra.mxu0 0.0
    %3535 = vmatprep.subr.mxu0 0.0
    %3536 = vmatpush1.msra.mxu0 0.0
    %3537 = vmatprep.subr.mxu0 0.0
    %3538 = vmatpush1.msra.mxu0 0.0
    %3539 = vmatprep.subr.mxu0 0.0
    %3540 = vmatpush1.msra.mxu0 0.0
    %3541 = vmatprep.subr.mxu0 0.0
    %3542 = vmatpush1.msra.mxu0 0.0
    %3543 = vmatprep.subr.mxu0 0.0
    %3544 = vmatpush1.msra.mxu0 0.0
    %3545 = vmatprep.subr.mxu0 0.0
    %3546 = vmatpush1.msra.mxu0 0.0
    %3547 = vmatprep.subr.mxu0 0.0
    %3548 = vmatpush1.msra.mxu0 0.0
    %3549 = vmatprep.subr.mxu0 0.0
    %3550 = vmatpush1.msra.mxu0 0.0
    %3551 = vmatprep.subr.mxu0 0.0
    %3552 = vmatpush1.msra.mxu0 0.0
    %3553 = vmatprep.subr.mxu0 0.0
    %3554 = vmatpush1.msra.mxu0 0.0
    %3555 = vmatprep.subr.mxu0 0.0
    %3556 = vmatpush1.msra.mxu0 0.0
    %3557 = vmatprep.subr.mxu0 0.0
    %3558 = vmatpush1.msra.mxu0 0.0
    %3559 = vmatprep.subr.mxu0 0.0
    %3560 = vmatpush1.msra.mxu0 0.0
    %3561 = vmatprep.subr.mxu0 0.0
    %3562 = vmatpush1.msra.mxu0 0.0
    %3563 = vmatprep.subr.mxu0 0.0
    %3564 = vmatpush1.msra.mxu0 0.0
    %3565 = vmatprep.subr.mxu0 0.0
    %3566 = vmatpush1.msra.mxu0 0.0
    %3567 = vmatprep.subr.mxu0 0.0
    %3568 = vmatpush1.msra.mxu0 0.0
    %3569 = vmatprep.subr.mxu0 0.0
    %3570 = vmatpush1.msra.mxu0 0.0
    %3571 = vmatprep.mubr.f32.mxu0 0.0
    %3572 = vmatmul.mubr.f32.gmra.mrb[0].mxu0 %v3346
    %v3573 = vpop.f32.mrb[0].mxu0
    %v3574 = vadd.f32 0.0, %v3573
    %v3575 = vpop.f32.mrb[0].mxu0
    %3576 = vdwg.mxu0
    %v3578 = vsel %vm1175, %v3574, 0
    %3580 = vmatprep.subr.mxu0 0.0
    %3581 = vmatpush1.msra.mxu0 %v3422
    %3582 = vmatprep.subr.mxu0 0.0
    %3583 = vmatpush1.msra.mxu0 %v3423
    %3584 = vmatprep.subr.mxu0 0.0
    %3585 = vmatpush1.msra.mxu0 %v3424
    %3586 = vmatprep.subr.mxu0 0.0
    %3587 = vmatpush1.msra.mxu0 %v3425
    %3588 = vmatprep.subr.mxu0 0.0
    %3589 = vmatpush1.msra.mxu0 %v3426
    %3590 = vmatprep.subr.mxu0 0.0
    %3591 = vmatpush1.msra.mxu0 %v3427
    %3592 = vmatprep.subr.mxu0 0.0
    %3593 = vmatpush1.msra.mxu0 %v3428
    %3594 = vmatprep.subr.mxu0 0.0
    %3595 = vmatpush1.msra.mxu0 %v3429
    %3596 = vmatprep.subr.mxu0 0.0
    %3597 = vmatpush1.msra.mxu0 0.0
    %3598 = vmatprep.subr.mxu0 0.0
    %3599 = vmatpush1.msra.mxu0 0.0
    %3600 = vmatprep.subr.mxu0 0.0
    %3601 = vmatpush1.msra.mxu0 0.0
    %3602 = vmatprep.subr.mxu0 0.0
    %3603 = vmatpush1.msra.mxu0 0.0
    %3604 = vmatprep.subr.mxu0 0.0
    %3605 = vmatpush1.msra.mxu0 0.0
    %3606 = vmatprep.subr.mxu0 0.0
    %3607 = vmatpush1.msra.mxu0 0.0
    %3608 = vmatprep.subr.mxu0 0.0
    %3609 = vmatpush1.msra.mxu0 0.0
    %3610 = vmatprep.subr.mxu0 0.0
    %3611 = vmatpush1.msra.mxu0 0.0
    %3612 = vmatprep.subr.mxu0 0.0
    %3613 = vmatpush1.msra.mxu0 0.0
    %3614 = vmatprep.subr.mxu0 0.0
    %3615 = vmatpush1.msra.mxu0 0.0
    %3616 = vmatprep.subr.mxu0 0.0
    %3617 = vmatpush1.msra.mxu0 0.0
    %3618 = vmatprep.subr.mxu0 0.0
    %3619 = vmatpush1.msra.mxu0 0.0
    %3620 = vmatprep.subr.mxu0 0.0
    %3621 = vmatpush1.msra.mxu0 0.0
    %3622 = vmatprep.subr.mxu0 0.0
    %3623 = vmatpush1.msra.mxu0 0.0
    %3624 = vmatprep.subr.mxu0 0.0
    %3625 = vmatpush1.msra.mxu0 0.0
    %3626 = vmatprep.subr.mxu0 0.0
    %3627 = vmatpush1.msra.mxu0 0.0
    %3628 = vmatprep.subr.mxu0 0.0
    %3629 = vmatpush1.msra.mxu0 0.0
    %3630 = vmatprep.subr.mxu0 0.0
    %3631 = vmatpush1.msra.mxu0 0.0
    %3632 = vmatprep.subr.mxu0 0.0
    %3633 = vmatpush1.msra.mxu0 0.0
    %3634 = vmatprep.subr.mxu0 0.0
    %3635 = vmatpush1.msra.mxu0 0.0
    %3636 = vmatprep.subr.mxu0 0.0
    %3637 = vmatpush1.msra.mxu0 0.0
    %3638 = vmatprep.subr.mxu0 0.0
    %3639 = vmatpush1.msra.mxu0 0.0
    %3640 = vmatprep.subr.mxu0 0.0
    %3641 = vmatpush1.msra.mxu0 0.0
    %3642 = vmatprep.subr.mxu0 0.0
    %3643 = vmatpush1.msra.mxu0 0.0
    %3644 = vmatprep.mubr.f32.mxu0 0.0
    %3645 = vmatmul.mubr.f32.gmra.mrb[0].mxu0 %v3578
    %v3646 = vpop.f32.mrb[0].mxu0
    %v3647 = vadd.f32 0.0, %v3646
    %v3648 = vpop.f32.mrb[0].mxu0
    %3649 = vdwg.mxu0
    %v3650 = vmul.f32 %v3500, %v3500
    %v3651 = vsub.f32 %v3647, %v3650
    %v3652 = vmax.f32 %v3651, 0.0
    %v3653 = vadd.f32 %v3652, 1e-05
    %v3654 = vrsqrt.pop %v3653
    %v3655 = vsub.f32 %v3342, %v3500
    %v3656 = vmul.f32 %v3655, %v3654
    %v3657 = vld [vmem:[%s16] sm:$0x1]
    %v3659 = vlaneseq
    %v3660 = vshrl.u32 %v3659, 7
    %v3661 = vsub.s32 0, %v3660
    %v3662 = vrot.slane %v3657, %v3661
    %v3664 = vmul.f32 %v3656, %v3662
    %v3665 = vld [vmem:[%s17] sm:$0x1]
    %v3667 = vlaneseq
    %v3668 = vshrl.u32 %v3667, 7
    %v3669 = vsub.s32 0, %v3668
    %v3670 = vrot.slane %v3665, %v3669
    %v3672 = vadd.f32 %v3664, %v3670
    %vm3673 = vcmp.gt.f32.partialorder %v3672, 0.0
    %v3674 = vmul.f32 %v3672, 0.2
    %v3675 = vsel %vm3673, %v3672, %v3674
    %vm3676 = vcmask 519168
    %3677 = vst.msk [vmem:[%s18] sm:$0xf] %vm3676, %v3675
    // Predicated region
    $region122: #{disfront_forward.1} parent=1 // pred_check
      _
    $region123: #{disfront_forward.1} parent=1 // pred_check_branch
      %3679 = sbr.rel (0) target = $region125
    $region124: #{disfront_forward.1} parent=1 // pred_region
      _
    $region125: #{disfront_forward.1} parent=1 // pred_fallthru
      _
    // Predicated region
    $region126: #{disfront_forward.1} parent=1 // pred_check
      _
    $region127: #{disfront_forward.1} parent=1 // pred_check_branch
      %3681 = sbr.rel (0) target = $region129
    $region128: #{disfront_forward.1} parent=1 // pred_region
      _
    $region129: #{disfront_forward.1} parent=1 // pred_fallthru
      _
    %3682 = vsyncpa [#allocation3], 1
    %3683 = vsyncpa [#allocation5], 1
    %3684 = vsyncpa [#allocation8], 1
    %3685 = vsyncpa [#allocation11], 1
    %3686 = vsyncpa [#allocation14], 1
    %3687 = vsyncpa [#allocation17], 1
    %3688 = vsyncpa [#allocation20], 1

</llo_original>
